<compile_context>
chip_gen: v7x
topology: tpu7x:2x2x1
jax: 0.10.0
libtpu: 0.0.40
codegen_flags: <defaults>
</compile_context>

<pallas_src>
import math

import jax
import jax.numpy as jnp
from jax.experimental import pallas as pl
from jax.experimental.pallas import tpu as pltpu

# ----------------------------- model config ---------------------------------
VOCAB = 128
MAX_POS = 16
TYPE_VOCAB = 2
HIDDEN = 32
NUM_HEADS = 2
HEAD_DIM = HIDDEN // NUM_HEADS
FFN = 64
NUM_LAYERS = 2
NUM_LABELS = 3
LN_EPS = 1e-12

LANES = 128
CHUNKS = LANES // HIDDEN   # tokens packed per 128-lane row of the hidden-states output


# ----------------------------- helpers --------------------------------------
def _vmem_specs(n):
    return [pl.BlockSpec(memory_space=pltpu.MemorySpace.VMEM) for _ in range(n)]


def _layer_norm(x, g, b):
    mean = jnp.mean(x, axis=-1, keepdims=True)
    var = jnp.mean((x - mean) ** 2, axis=-1, keepdims=True)
    return (x - mean) * jax.lax.rsqrt(var + LN_EPS) * g + b


def _lane_dense(h):
    """(T, H) -> (T//CHUNKS, CHUNKS*H): pack CHUNKS tokens per 128-lane row.

    Row i, lane-chunk j holds token j*(T//CHUNKS) + i.  Built from static sublane
    slices + a lane-dim concat (both cheap and well-supported); the wrapper undoes
    it with a reshape+transpose.  Keeps hidden-state stores unmasked / lane-dense.
    """
    rows = h.shape[0] // CHUNKS
    return jnp.concatenate([h[j * rows:(j + 1) * rows, :] for j in range(CHUNKS)], axis=1)


# ----------------------------- fused Pallas kernel ---------------------------
def fused_forward_kernel(
    ids_ref, tids_ref, mask_ref,
    word_emb_ref, pos_emb_ref, type_emb_ref, emb_ln_ref,
    wqkv_ref, bqkv_ref, wo_ref, w1_ref, b1_ref, w2_ref, lvecs_ref,
    pooler_wb_ref, cls_wb_ref,
    hs_ref, logits_ref,
):
    BS = ids_ref.shape[0]          # flattened tokens (B*S)
    B, S = mask_ref.shape

    # ---- embeddings ----------------------------------------------------------
    ids = ids_ref[...]             # (BS, 1) int32, token dim on sublanes
    tids = tids_ref[...]           # (BS, 1) int32

    # Word embedding: one-hot @ table (VOCAB == 128 exactly fills MXU K / lane dim).
    word_oh = (ids == jax.lax.broadcasted_iota(jnp.int32, (BS, VOCAB), 1)
               ).astype(jnp.float32)                                            # (BS, V)
    word_e = jnp.dot(word_oh, word_emb_ref[...],
                     preferred_element_type=jnp.float32)                        # (BS, H)

    # Positional embedding: static slice + batch repeat (no one-hot matmul).
    pos_e = jnp.concatenate([pos_emb_ref[0:S, :]] * B, axis=0)                  # (BS, H)

    # Token-type embedding: VPU select between the two table rows (no K=2 matmul).
    type_e = jnp.where(tids == 0, type_emb_ref[0:1, :], type_emb_ref[1:2, :])   # (BS, H)

    emb_ln = emb_ln_ref[...]       # (2, H): gamma, beta
    h = _layer_norm(word_e + pos_e + type_e, emb_ln[0:1, :], emb_ln[1:2, :])    # (BS, H)
    hs_ref[0] = _lane_dense(h).astype(hs_ref.dtype)

    # ---- attention mask bias (HF: 1 = attend, 0 = pad), replicated per head ----
    attn_bias = (mask_ref[...][:, None, :] - 1.0) * 1e9                         # (B, 1, S)
    attn_bias = jnp.concatenate([attn_bias] * NUM_HEADS, axis=0)                # (B*NH, 1, S)
    scale = 1.0 / math.sqrt(HEAD_DIM)

    # ---- encoder layers (statically unrolled; everything stays in VMEM/vregs) ----
    for li in range(NUM_LAYERS):
        wqkv = wqkv_ref[li]        # (H, 3H)
        bqkv = bqkv_ref[li]        # (1, 3H)
        wo = wo_ref[li]            # (H, H)
        w1 = w1_ref[li]            # (H, FFN)
        b1 = b1_ref[li]            # (1, FFN)
        w2 = w2_ref[li]            # (FFN, H)
        vec = lvecs_ref[li]        # (6, H): bo, ln1_g, ln1_b, b2, ln2_g, ln2_b
        bo, ln1g, ln1b = vec[0:1, :], vec[1:2, :], vec[2:3, :]
        b2, ln2g, ln2b = vec[3:4, :], vec[4:5, :], vec[5:6, :]

        # Fused QKV: ONE flattened (BS,H)@(H,3H) matmul; softmax scale folded into q.
        qkv = jnp.dot(h, wqkv, preferred_element_type=jnp.float32) + bqkv       # (BS, 3H)
        q3 = (qkv[:, 0:HIDDEN] * scale).reshape(B, S, HIDDEN)
        k3 = qkv[:, HIDDEN:2 * HIDDEN].reshape(B, S, HIDDEN)
        v3 = qkv[:, 2 * HIDDEN:3 * HIDDEN].reshape(B, S, HIDDEN)

        # Stack heads onto the batch dim -> one batched attention, single softmax pass.
        def split_heads(x):
            return jnp.concatenate(
                [x[:, :, hd * HEAD_DIM:(hd + 1) * HEAD_DIM] for hd in range(NUM_HEADS)],
                axis=0)                                                          # (B*NH, S, HD)

        qh, kh, vh = split_heads(q3), split_heads(k3), split_heads(v3)

        s = jnp.einsum("bqd,bkd->bqk", qh, kh,
                       preferred_element_type=jnp.float32) + attn_bias          # (B*NH, S, S)
        s = s - jnp.max(s, axis=-1, keepdims=True)
        p = jnp.exp(s)
        p = p * pl.reciprocal(jnp.sum(p, axis=-1, keepdims=True), approx=True)
        ctx = jnp.einsum("bqk,bkd->bqd", p, vh,
                         preferred_element_type=jnp.float32)                    # (B*NH, S, HD)

        # Un-stack heads back onto the lane dim, then ONE output projection matmul.
        ctx = jnp.concatenate([ctx[hd * B:(hd + 1) * B] for hd in range(NUM_HEADS)],
                              axis=-1).reshape(BS, HIDDEN)                      # (BS, H)
        attn_out = jnp.dot(ctx, wo, preferred_element_type=jnp.float32) + bo

        h1 = _layer_norm(h + attn_out, ln1g, ln1b)

        ff = jnp.dot(h1, w1, preferred_element_type=jnp.float32) + b1
        ff = jax.nn.gelu(ff, approximate=True)  # TODO(synk): HF BERT uses exact erf-GELU
        ff = jnp.dot(ff, w2, preferred_element_type=jnp.float32) + b2
        h = _layer_norm(h1 + ff, ln2g, ln2b)
        hs_ref[li + 1] = _lane_dense(h).astype(hs_ref.dtype)

    # ---- pooler (tanh(dense(CLS))) + classifier head ----
    cls = jnp.concatenate([h[b * S:b * S + 1, :] for b in range(B)], axis=0)    # (B, H)
    pwb = pooler_wb_ref[...]                                                    # (H+1, H): [W; b]
    cwb = cls_wb_ref[...]                                                       # (H+1, NUM_LABELS)
    pooled = jnp.tanh(
        jnp.dot(cls, pwb[0:HIDDEN, :], preferred_element_type=jnp.float32)
        + pwb[HIDDEN:HIDDEN + 1, :])
    logits = (jnp.dot(pooled, cwb[0:HIDDEN, :], preferred_element_type=jnp.float32)
              + cwb[HIDDEN:HIDDEN + 1, :])
    logits_ref[...] = logits.astype(logits_ref.dtype)                           # (B, NUM_LABELS)


# ----------------------------- parameters ------------------------------------
def init_params(key):
    keys = jax.random.split(key, 3 + 6 * NUM_LAYERS + 2)
    kit = iter(keys)

    def dense(fan_in, fan_out):
        return 0.02 * jax.random.normal(next(kit), (fan_in, fan_out), jnp.float32)

    params = {
        "word_emb": dense(VOCAB, HIDDEN),
        "pos_emb": dense(MAX_POS, HIDDEN),
        "type_emb": dense(TYPE_VOCAB, HIDDEN),
        "emb_ln": jnp.concatenate([jnp.ones((1, HIDDEN), jnp.float32),
                                   jnp.zeros((1, HIDDEN), jnp.float32)], axis=0),
    }

    wqkv, bqkv, wo, w1, b1, w2, lvec = [], [], [], [], [], [], []
    for _ in range(NUM_LAYERS):
        wq, wk, wv = dense(HIDDEN, HIDDEN), dense(HIDDEN, HIDDEN), dense(HIDDEN, HIDDEN)
        wqkv.append(jnp.concatenate([wq, wk, wv], axis=1))          # (H, 3H)
        bqkv.append(jnp.zeros((1, 3 * HIDDEN), jnp.float32))
        wo.append(dense(HIDDEN, HIDDEN))
        w1.append(dense(HIDDEN, FFN))
        b1.append(jnp.zeros((1, FFN), jnp.float32))
        w2.append(dense(FFN, HIDDEN))
        lvec.append(jnp.stack([
            jnp.zeros((HIDDEN,), jnp.float32),   # bo
            jnp.ones((HIDDEN,), jnp.float32),    # ln1_g
            jnp.zeros((HIDDEN,), jnp.float32),   # ln1_b
            jnp.zeros((HIDDEN,), jnp.float32),   # b2
            jnp.ones((HIDDEN,), jnp.float32),    # ln2_g
            jnp.zeros((HIDDEN,), jnp.float32),   # ln2_b
        ], axis=0))                                                  # (6, H)

    params["wqkv"] = jnp.stack(wqkv)      # (L, H, 3H)
    params["bqkv"] = jnp.stack(bqkv)      # (L, 1, 3H)
    params["wo"] = jnp.stack(wo)          # (L, H, H)
    params["w1"] = jnp.stack(w1)          # (L, H, FFN)
    params["b1"] = jnp.stack(b1)          # (L, 1, FFN)
    params["w2"] = jnp.stack(w2)          # (L, FFN, H)
    params["lvecs"] = jnp.stack(lvec)     # (L, 6, H)

    params["pooler_wb"] = jnp.concatenate(
        [dense(HIDDEN, HIDDEN), jnp.zeros((1, HIDDEN), jnp.float32)], axis=0)        # (H+1, H)
    params["cls_wb"] = jnp.concatenate(
        [dense(HIDDEN, NUM_LABELS), jnp.zeros((1, NUM_LABELS), jnp.float32)], axis=0)  # (H+1, NL)
    return params


# ----------------------------- forward ----------------------------------------
def huggingface_model_forward(params, encoded):
    """Mirrors HuggingFaceModel.forward: output = self.model(**encoded)."""
    input_ids = encoded["input_ids"]              # (B, S) int
    attention_mask = encoded["attention_mask"]    # (B, S)
    token_type_ids = encoded["token_type_ids"]    # (B, S)
    B, S = input_ids.shape
    BS = B * S
    assert S <= MAX_POS and 128 % HIDDEN == 0 and BS % CHUNKS == 0 and TYPE_VOCAB == 2

    # Flattened-token int refs keep the token dim on sublanes (one-hot compare then
    # broadcasts along lanes with no in-kernel relayout); mask stays 2-D.
    ids_e = input_ids.astype(jnp.int32).reshape(BS, 1)
    tids_e = token_type_ids.astype(jnp.int32).reshape(BS, 1)
    mask_f = attention_mask.astype(jnp.float32)

    rows = BS // CHUNKS
    out_shapes = (
        jax.ShapeDtypeStruct((NUM_LAYERS + 1, rows, CHUNKS * HIDDEN), jnp.float32),  # lane-dense hs
        jax.ShapeDtypeStruct((B, NUM_LABELS), jnp.float32),
    )

    inputs = (ids_e, tids_e, mask_f,
              params["word_emb"], params["pos_emb"], params["type_emb"], params["emb_ln"],
              params["wqkv"], params["bqkv"], params["wo"], params["w1"], params["b1"],
              params["w2"], params["lvecs"], params["pooler_wb"], params["cls_wb"])

    # Advisory cost estimate so XLA can schedule around this latency-bound custom call.
    flops = (2 * BS * VOCAB * HIDDEN
             + NUM_LAYERS * (2 * BS * HIDDEN * 3 * HIDDEN
                             + 4 * B * NUM_HEADS * S * S * HEAD_DIM
                             + 2 * BS * HIDDEN * HIDDEN
                             + 4 * BS * HIDDEN * FFN)
             + 2 * B * HIDDEN * (HIDDEN + NUM_LABELS))
    transcendentals = NUM_LAYERS * (BS * FFN + B * NUM_HEADS * S * S) + B * HIDDEN
    bytes_accessed = (sum(int(x.size) * x.dtype.itemsize for x in inputs)
                      + sum(4 * int(math.prod(s.shape)) for s in out_shapes))

    hs_flat, logits = pl.pallas_call(
        fused_forward_kernel,
        out_shape=out_shapes,
        in_specs=_vmem_specs(len(inputs)),
        out_specs=(pl.BlockSpec(memory_space=pltpu.MemorySpace.VMEM),
                   pl.BlockSpec(memory_space=pltpu.MemorySpace.VMEM)),
        compiler_params=pltpu.CompilerParams(vmem_limit_bytes=64 * 1024 * 1024),
        cost_estimate=pl.CostEstimate(flops=int(flops),
                                      transcendentals=int(transcendentals),
                                      bytes_accessed=int(bytes_accessed)),
    )(*inputs)

    # Undo the lane-dense packing: (L+1, rows, CHUNKS*H) -> (L+1, B, S, H).
    hs = hs_flat.reshape(NUM_LAYERS + 1, rows, CHUNKS, HIDDEN)
    hs = hs.transpose(0, 2, 1, 3).reshape(NUM_LAYERS + 1, B, S, HIDDEN)
    hidden_states = tuple(hs[i] for i in range(NUM_LAYERS + 1))

    # Matches HF SequenceClassifierOutput(logits=..., hidden_states=...) as a dict.
    return {"logits": logits, "hidden_states": hidden_states}


# ----------------------------- main -------------------------------------------
if __name__ == "__main__":
    key = jax.random.PRNGKey(0)
    pkey, dkey = jax.random.split(key)
    params = init_params(pkey)

    B, S = 2, 8
    input_ids = jax.random.randint(dkey, (B, S), 0, VOCAB, dtype=jnp.int32)
    attention_mask = jnp.ones((B, S), jnp.int32).at[1, 6:].set(0)  # pad tail of seq 1
    token_type_ids = jnp.zeros((B, S), jnp.int32)
    encoded = {
        "input_ids": input_ids,
        "attention_mask": attention_mask,
        "token_type_ids": token_type_ids,
    }

    out = huggingface_model_forward(params, encoded)
    jax.block_until_ready(out["logits"])
    jax.block_until_ready(out["hidden_states"])

    assert out["logits"].shape == (B, NUM_LABELS)
    assert len(out["hidden_states"]) == NUM_LAYERS + 1
    assert all(h.shape == (B, S, HIDDEN) for h in out["hidden_states"])
    assert bool(jnp.all(jnp.isfinite(out["logits"])))
    assert all(bool(jnp.all(jnp.isfinite(h))) for h in out["hidden_states"])
    print("KERNEL_OK")
</pallas_src>

<mosaic_0001>
module attributes {stable_mosaic.version = 11 : i64} {
  func.func @fused_forward_kernel(%arg0: memref<16x1xi32, #tpu.memory_space<vmem>>, %arg1: memref<16x1xi32, #tpu.memory_space<vmem>>, %arg2: memref<2x8xf32, #tpu.memory_space<vmem>>, %arg3: memref<128x32xf32, #tpu.memory_space<vmem>>, %arg4: memref<16x32xf32, #tpu.memory_space<vmem>>, %arg5: memref<2x32xf32, #tpu.memory_space<vmem>>, %arg6: memref<2x32xf32, #tpu.memory_space<vmem>>, %arg7: memref<2x32x96xf32, #tpu.memory_space<vmem>>, %arg8: memref<2x1x96xf32, #tpu.memory_space<vmem>>, %arg9: memref<2x32x32xf32, #tpu.memory_space<vmem>>, %arg10: memref<2x32x64xf32, #tpu.memory_space<vmem>>, %arg11: memref<2x1x64xf32, #tpu.memory_space<vmem>>, %arg12: memref<2x64x32xf32, #tpu.memory_space<vmem>>, %arg13: memref<2x6x32xf32, #tpu.memory_space<vmem>>, %arg14: memref<33x32xf32, #tpu.memory_space<vmem>>, %arg15: memref<33x3xf32, #tpu.memory_space<vmem>>, %arg16: memref<3x4x128xf32, #tpu.memory_space<vmem>>, %arg17: memref<2x3xf32, #tpu.memory_space<vmem>>) attributes {dimension_semantics = [], scalar_prefetch = 0 : i64, scratch_operands = 0 : i64, tpu.core_type = #tpu.core_type<tc>} {
    %c0 = arith.constant 0 : index
    %c0_0 = arith.constant 0 : index
    %0 = vector.load %arg0[%c0, %c0_0] : memref<16x1xi32, #tpu.memory_space<vmem>>, vector<16x1xi32>
    %c0_1 = arith.constant 0 : index
    %c0_2 = arith.constant 0 : index
    %1 = vector.load %arg1[%c0_1, %c0_2] : memref<16x1xi32, #tpu.memory_space<vmem>>, vector<16x1xi32>
    %2 = tpu.iota {dimensions = array<i32: 1>} : vector<16x128xi32>
    %3 = vector.broadcast %0 : vector<16x1xi32> to vector<16x128xi32>
    %4 = arith.cmpi eq, %3, %2 : vector<16x128xi32>
    %5 = arith.extui %4 : vector<16x128xi1> to vector<16x128xi32>
    %6 = arith.sitofp %5 : vector<16x128xi32> to vector<16x128xf32>
    %c0_3 = arith.constant 0 : index
    %c0_4 = arith.constant 0 : index
    %7 = vector.load %arg3[%c0_3, %c0_4] : memref<128x32xf32, #tpu.memory_space<vmem>>, vector<128x32xf32>
    %cst = arith.constant dense<0.000000e+00> : vector<16x32xf32>
    %8 = tpu.matmul %6, %7, %cst {dimension_numbers = #tpu.dot_dimension_numbers<[1], [0], [0], [1], [0, 0, 1, 1], [], []>} : vector<16x128xf32>, vector<128x32xf32>, vector<16x32xf32> -> vector<16x32xf32>
    %c0_5 = arith.constant 0 : index
    %c0_6 = arith.constant 0 : index
    %9 = vector.load %arg4[%c0_5, %c0_6] : memref<16x32xf32, #tpu.memory_space<vmem>>, vector<8x32xf32>
    %10 = tpu.concatenate %9, %9 in 0 : vector<8x32xf32>, vector<8x32xf32> -> vector<16x32xf32>
    %c0_i32 = arith.constant 0 : i32
    %11 = vector.broadcast %c0_i32 : i32 to vector<16x1xi32>
    %12 = arith.cmpi eq, %1, %11 : vector<16x1xi32>
    %c0_7 = arith.constant 0 : index
    %c0_8 = arith.constant 0 : index
    %13 = vector.load %arg5[%c0_7, %c0_8] : memref<2x32xf32, #tpu.memory_space<vmem>>, vector<1x32xf32>
    %c1 = arith.constant 1 : index
    %c0_9 = arith.constant 0 : index
    %14 = vector.load %arg5[%c1, %c0_9] : memref<2x32xf32, #tpu.memory_space<vmem>>, vector<1x32xf32>
    %15 = vector.shape_cast %12 : vector<16x1xi1> to vector<16x1xi1>
    %16 = vector.broadcast %15 : vector<16x1xi1> to vector<16x32xi1>
    %17 = vector.shape_cast %13 : vector<1x32xf32> to vector<1x32xf32>
    %18 = vector.broadcast %17 : vector<1x32xf32> to vector<16x32xf32>
    %19 = vector.shape_cast %14 : vector<1x32xf32> to vector<1x32xf32>
    %20 = vector.broadcast %19 : vector<1x32xf32> to vector<16x32xf32>
    %21 = arith.select %16, %18, %20 : vector<16x32xi1>, vector<16x32xf32>
    %c0_10 = arith.constant 0 : index
    %c0_11 = arith.constant 0 : index
    %22 = vector.load %arg6[%c0_10, %c0_11] : memref<2x32xf32, #tpu.memory_space<vmem>>, vector<2x32xf32>
    %23 = arith.addf %8, %10 : vector<16x32xf32>
    %24 = arith.addf %23, %21 : vector<16x32xf32>
    %25 = vector.extract_strided_slice %22 {offsets = [0, 0], sizes = [1, 32], strides = [1, 1]} : vector<2x32xf32> to vector<1x32xf32>
    %26 = vector.extract_strided_slice %22 {offsets = [1, 0], sizes = [1, 32], strides = [1, 1]} : vector<2x32xf32> to vector<1x32xf32>
    %cst_12 = arith.constant dense<0.000000e+00> : vector<16xf32>
    %27 = vector.multi_reduction <add>, %24, %cst_12 [1] : vector<16x32xf32> to vector<16xf32>
    %28 = vector.shape_cast %27 : vector<16xf32> to vector<16x1xf32>
    %cst_13 = arith.constant 3.200000e+01 : f32
    %29 = vector.broadcast %cst_13 : f32 to vector<16x1xf32>
    %30 = arith.divf %28, %29 : vector<16x1xf32>
    %31 = vector.broadcast %30 : vector<16x1xf32> to vector<16x32xf32>
    %32 = arith.subf %24, %31 : vector<16x32xf32>
    %33 = arith.mulf %32, %32 : vector<16x32xf32>
    %cst_14 = arith.constant dense<0.000000e+00> : vector<16xf32>
    %34 = vector.multi_reduction <add>, %33, %cst_14 [1] : vector<16x32xf32> to vector<16xf32>
    %35 = vector.shape_cast %34 : vector<16xf32> to vector<16x1xf32>
    %cst_15 = arith.constant 3.200000e+01 : f32
    %36 = vector.broadcast %cst_15 : f32 to vector<16x1xf32>
    %37 = arith.divf %35, %36 : vector<16x1xf32>
    %38 = vector.broadcast %30 : vector<16x1xf32> to vector<16x32xf32>
    %39 = arith.subf %24, %38 : vector<16x32xf32>
    %cst_16 = arith.constant 9.99999996E-13 : f32
    %40 = vector.broadcast %cst_16 : f32 to vector<16x1xf32>
    %41 = arith.addf %37, %40 : vector<16x1xf32>
    %42 = math.rsqrt %41 : vector<16x1xf32>
    %43 = vector.broadcast %42 : vector<16x1xf32> to vector<16x32xf32>
    %44 = arith.mulf %39, %43 : vector<16x32xf32>
    %45 = vector.broadcast %25 : vector<1x32xf32> to vector<16x32xf32>
    %46 = arith.mulf %44, %45 : vector<16x32xf32>
    %47 = vector.broadcast %26 : vector<1x32xf32> to vector<16x32xf32>
    %48 = arith.addf %46, %47 : vector<16x32xf32>
    %49 = vector.extract_strided_slice %48 {offsets = [0, 0], sizes = [4, 32], strides = [1, 1]} : vector<16x32xf32> to vector<4x32xf32>
    %50 = vector.extract_strided_slice %48 {offsets = [4, 0], sizes = [4, 32], strides = [1, 1]} : vector<16x32xf32> to vector<4x32xf32>
    %51 = vector.extract_strided_slice %48 {offsets = [8, 0], sizes = [4, 32], strides = [1, 1]} : vector<16x32xf32> to vector<4x32xf32>
    %52 = vector.extract_strided_slice %48 {offsets = [12, 0], sizes = [4, 32], strides = [1, 1]} : vector<16x32xf32> to vector<4x32xf32>
    %53 = tpu.concatenate %49, %50, %51, %52 in 1 : vector<4x32xf32>, vector<4x32xf32>, vector<4x32xf32>, vector<4x32xf32> -> vector<4x128xf32>
    %c0_17 = arith.constant 0 : index
    %c0_18 = arith.constant 0 : index
    %c0_19 = arith.constant 0 : index
    %54 = vector.load %arg16[%c0_17, %c0_18, %c0_19] : memref<3x4x128xf32, #tpu.memory_space<vmem>>, vector<1x4x128xf32>
    %55 = vector.shape_cast %54 : vector<1x4x128xf32> to vector<4x128xf32>
    %56 = vector.shape_cast %53 : vector<4x128xf32> to vector<1x4x128xf32>
    tpu.vector_store %arg16[%c0_17, %c0_18, %c0_19], %56 {strides = array<i32>} : memref<3x4x128xf32, #tpu.memory_space<vmem>>, vector<1x4x128xf32>,
    %c0_20 = arith.constant 0 : index
    %c0_21 = arith.constant 0 : index
    %57 = vector.load %arg2[%c0_20, %c0_21] : memref<2x8xf32, #tpu.memory_space<vmem>>, vector<2x8xf32>
    %58 = vector.shape_cast %57 : vector<2x8xf32> to vector<2x1x8xf32>
    %cst_22 = arith.constant 1.000000e+00 : f32
    %59 = vector.broadcast %cst_22 : f32 to vector<2x1x8xf32>
    %60 = arith.subf %58, %59 : vector<2x1x8xf32>
    %cst_23 = arith.constant 1.000000e+09 : f32
    %61 = vector.broadcast %cst_23 : f32 to vector<2x1x8xf32>
    %62 = arith.mulf %60, %61 : vector<2x1x8xf32>
    %63 = tpu.concatenate %62, %62 in 0 : vector<2x1x8xf32>, vector<2x1x8xf32> -> vector<4x1x8xf32>
    %c0_24 = arith.constant 0 : index
    %c0_25 = arith.constant 0 : index
    %c0_26 = arith.constant 0 : index
    %64 = vector.load %arg7[%c0_24, %c0_25, %c0_26] : memref<2x32x96xf32, #tpu.memory_space<vmem>>, vector<1x32x96xf32>
    %65 = vector.shape_cast %64 : vector<1x32x96xf32> to vector<32x96xf32>
    %c0_27 = arith.constant 0 : index
    %c0_28 = arith.constant 0 : index
    %c0_29 = arith.constant 0 : index
    %66 = vector.load %arg8[%c0_27, %c0_28, %c0_29] : memref<2x1x96xf32, #tpu.memory_space<vmem>>, vector<1x1x96xf32>
    %67 = vector.shape_cast %66 : vector<1x1x96xf32> to vector<1x96xf32>
    %c0_30 = arith.constant 0 : index
    %c0_31 = arith.constant 0 : index
    %c0_32 = arith.constant 0 : index
    %68 = vector.load %arg9[%c0_30, %c0_31, %c0_32] : memref<2x32x32xf32, #tpu.memory_space<vmem>>, vector<1x32x32xf32>
    %69 = vector.shape_cast %68 : vector<1x32x32xf32> to vector<32x32xf32>
    %c0_33 = arith.constant 0 : index
    %c0_34 = arith.constant 0 : index
    %c0_35 = arith.constant 0 : index
    %70 = vector.load %arg10[%c0_33, %c0_34, %c0_35] : memref<2x32x64xf32, #tpu.memory_space<vmem>>, vector<1x32x64xf32>
    %71 = vector.shape_cast %70 : vector<1x32x64xf32> to vector<32x64xf32>
    %c0_36 = arith.constant 0 : index
    %c0_37 = arith.constant 0 : index
    %c0_38 = arith.constant 0 : index
    %72 = vector.load %arg11[%c0_36, %c0_37, %c0_38] : memref<2x1x64xf32, #tpu.memory_space<vmem>>, vector<1x1x64xf32>
    %73 = vector.shape_cast %72 : vector<1x1x64xf32> to vector<1x64xf32>
    %c0_39 = arith.constant 0 : index
    %c0_40 = arith.constant 0 : index
    %c0_41 = arith.constant 0 : index
    %74 = vector.load %arg12[%c0_39, %c0_40, %c0_41] : memref<2x64x32xf32, #tpu.memory_space<vmem>>, vector<1x64x32xf32>
    %75 = vector.shape_cast %74 : vector<1x64x32xf32> to vector<64x32xf32>
    %c0_42 = arith.constant 0 : index
    %c0_43 = arith.constant 0 : index
    %c0_44 = arith.constant 0 : index
    %76 = vector.load %arg13[%c0_42, %c0_43, %c0_44] : memref<2x6x32xf32, #tpu.memory_space<vmem>>, vector<1x6x32xf32>
    %77 = vector.shape_cast %76 : vector<1x6x32xf32> to vector<6x32xf32>
    %78 = vector.extract_strided_slice %77 {offsets = [0, 0], sizes = [1, 32], strides = [1, 1]} : vector<6x32xf32> to vector<1x32xf32>
    %79 = vector.extract_strided_slice %77 {offsets = [1, 0], sizes = [1, 32], strides = [1, 1]} : vector<6x32xf32> to vector<1x32xf32>
    %80 = vector.extract_strided_slice %77 {offsets = [2, 0], sizes = [1, 32], strides = [1, 1]} : vector<6x32xf32> to vector<1x32xf32>
    %81 = vector.extract_strided_slice %77 {offsets = [3, 0], sizes = [1, 32], strides = [1, 1]} : vector<6x32xf32> to vector<1x32xf32>
    %82 = vector.extract_strided_slice %77 {offsets = [4, 0], sizes = [1, 32], strides = [1, 1]} : vector<6x32xf32> to vector<1x32xf32>
    %83 = vector.extract_strided_slice %77 {offsets = [5, 0], sizes = [1, 32], strides = [1, 1]} : vector<6x32xf32> to vector<1x32xf32>
    %cst_45 = arith.constant dense<0.000000e+00> : vector<16x96xf32>
    %84 = tpu.matmul %48, %65, %cst_45 {dimension_numbers = #tpu.dot_dimension_numbers<[1], [0], [0], [1], [0, 0, 1, 1], [], []>} : vector<16x32xf32>, vector<32x96xf32>, vector<16x96xf32> -> vector<16x96xf32>
    %85 = vector.broadcast %67 : vector<1x96xf32> to vector<16x96xf32>
    %86 = arith.addf %84, %85 : vector<16x96xf32>
    %87 = vector.extract_strided_slice %86 {offsets = [0, 0], sizes = [16, 32], strides = [1, 1]} : vector<16x96xf32> to vector<16x32xf32>
    %cst_46 = arith.constant 2.500000e-01 : f32
    %88 = vector.broadcast %cst_46 : f32 to vector<16x32xf32>
    %89 = arith.mulf %87, %88 : vector<16x32xf32>
    %90 = vector.shape_cast %89 : vector<16x32xf32> to vector<2x8x32xf32>
    %91 = vector.extract_strided_slice %86 {offsets = [0, 32], sizes = [16, 32], strides = [1, 1]} : vector<16x96xf32> to vector<16x32xf32>
    %92 = vector.shape_cast %91 : vector<16x32xf32> to vector<2x8x32xf32>
    %93 = vector.extract_strided_slice %86 {offsets = [0, 64], sizes = [16, 32], strides = [1, 1]} : vector<16x96xf32> to vector<16x32xf32>
    %94 = vector.shape_cast %93 : vector<16x32xf32> to vector<2x8x32xf32>
    %95 = vector.extract_strided_slice %90 {offsets = [0, 0, 0], sizes = [2, 8, 16], strides = [1, 1, 1]} : vector<2x8x32xf32> to vector<2x8x16xf32>
    %96 = vector.extract_strided_slice %90 {offsets = [0, 0, 16], sizes = [2, 8, 16], strides = [1, 1, 1]} : vector<2x8x32xf32> to vector<2x8x16xf32>
    %97 = tpu.concatenate %95, %96 in 0 : vector<2x8x16xf32>, vector<2x8x16xf32> -> vector<4x8x16xf32>
    %98 = vector.extract_strided_slice %92 {offsets = [0, 0, 0], sizes = [2, 8, 16], strides = [1, 1, 1]} : vector<2x8x32xf32> to vector<2x8x16xf32>
    %99 = vector.extract_strided_slice %92 {offsets = [0, 0, 16], sizes = [2, 8, 16], strides = [1, 1, 1]} : vector<2x8x32xf32> to vector<2x8x16xf32>
    %100 = tpu.concatenate %98, %99 in 0 : vector<2x8x16xf32>, vector<2x8x16xf32> -> vector<4x8x16xf32>
    %101 = vector.extract_strided_slice %94 {offsets = [0, 0, 0], sizes = [2, 8, 16], strides = [1, 1, 1]} : vector<2x8x32xf32> to vector<2x8x16xf32>
    %102 = vector.extract_strided_slice %94 {offsets = [0, 0, 16], sizes = [2, 8, 16], strides = [1, 1, 1]} : vector<2x8x32xf32> to vector<2x8x16xf32>
    %103 = tpu.concatenate %101, %102 in 0 : vector<2x8x16xf32>, vector<2x8x16xf32> -> vector<4x8x16xf32>
    "tpu.trace_start"() <{level = 10 : i32, message = "bqd,bkd->bqk"}> : () -> ()
    %cst_47 = arith.constant dense<0.000000e+00> : vector<4x8x8xf32>
    %104 = tpu.matmul %97, %100, %cst_47 {dimension_numbers = #tpu.dot_dimension_numbers<[2], [2], [1], [1], [0, 0, 0, 1, 1, 1], [0], [0]>} : vector<4x8x16xf32>, vector<4x8x16xf32>, vector<4x8x8xf32> -> vector<4x8x8xf32>
    "tpu.trace_stop"() : () -> ()
    %105 = vector.broadcast %63 : vector<4x1x8xf32> to vector<4x8x8xf32>
    %106 = arith.addf %104, %105 : vector<4x8x8xf32>
    %cst_48 = arith.constant dense<0xFF800000> : vector<4x8xf32>
    %107 = vector.multi_reduction <maximumf>, %106, %cst_48 [2] : vector<4x8x8xf32> to vector<4x8xf32>
    %108 = vector.shape_cast %107 : vector<4x8xf32> to vector<4x8x1xf32>
    %109 = vector.broadcast %108 : vector<4x8x1xf32> to vector<4x8x8xf32>
    %110 = arith.subf %106, %109 : vector<4x8x8xf32>
    %111 = math.exp %110 : vector<4x8x8xf32>
    %cst_49 = arith.constant dense<0.000000e+00> : vector<4x8xf32>
    %112 = vector.multi_reduction <add>, %111, %cst_49 [2] : vector<4x8x8xf32> to vector<4x8xf32>
    %113 = vector.shape_cast %112 : vector<4x8xf32> to vector<4x8x1xf32>
    %114 = tpu.reciprocal %113 {approx = true} : vector<4x8x1xf32> -> vector<4x8x1xf32>
    %115 = vector.broadcast %114 : vector<4x8x1xf32> to vector<4x8x8xf32>
    %116 = arith.mulf %111, %115 : vector<4x8x8xf32>
    "tpu.trace_start"() <{level = 10 : i32, message = "bqk,bkd->bqd"}> : () -> ()
    %cst_50 = arith.constant dense<0.000000e+00> : vector<4x8x16xf32>
    %117 = tpu.matmul %116, %103, %cst_50 {dimension_numbers = #tpu.dot_dimension_numbers<[2], [1], [1], [2], [0, 0, 0, 1, 1, 2], [0], [0]>} : vector<4x8x8xf32>, vector<4x8x16xf32>, vector<4x8x16xf32> -> vector<4x8x16xf32>
    "tpu.trace_stop"() : () -> ()
    %118 = vector.extract_strided_slice %117 {offsets = [0, 0, 0], sizes = [2, 8, 16], strides = [1, 1, 1]} : vector<4x8x16xf32> to vector<2x8x16xf32>
    %119 = vector.extract_strided_slice %117 {offsets = [2, 0, 0], sizes = [2, 8, 16], strides = [1, 1, 1]} : vector<4x8x16xf32> to vector<2x8x16xf32>
    %120 = tpu.concatenate %118, %119 in 2 : vector<2x8x16xf32>, vector<2x8x16xf32> -> vector<2x8x32xf32>
    %121 = vector.shape_cast %120 : vector<2x8x32xf32> to vector<16x32xf32>
    %cst_51 = arith.constant dense<0.000000e+00> : vector<16x32xf32>
    %122 = tpu.matmul %121, %69, %cst_51 {dimension_numbers = #tpu.dot_dimension_numbers<[1], [0], [0], [1], [0, 0, 1, 1], [], []>} : vector<16x32xf32>, vector<32x32xf32>, vector<16x32xf32> -> vector<16x32xf32>
    %123 = vector.broadcast %78 : vector<1x32xf32> to vector<16x32xf32>
    %124 = arith.addf %122, %123 : vector<16x32xf32>
    %125 = arith.addf %48, %124 : vector<16x32xf32>
    %cst_52 = arith.constant dense<0.000000e+00> : vector<16xf32>
    %126 = vector.multi_reduction <add>, %125, %cst_52 [1] : vector<16x32xf32> to vector<16xf32>
    %127 = vector.shape_cast %126 : vector<16xf32> to vector<16x1xf32>
    %cst_53 = arith.constant 3.200000e+01 : f32
    %128 = vector.broadcast %cst_53 : f32 to vector<16x1xf32>
    %129 = arith.divf %127, %128 : vector<16x1xf32>
    %130 = vector.broadcast %129 : vector<16x1xf32> to vector<16x32xf32>
    %131 = arith.subf %125, %130 : vector<16x32xf32>
    %132 = arith.mulf %131, %131 : vector<16x32xf32>
    %cst_54 = arith.constant dense<0.000000e+00> : vector<16xf32>
    %133 = vector.multi_reduction <add>, %132, %cst_54 [1] : vector<16x32xf32> to vector<16xf32>
    %134 = vector.shape_cast %133 : vector<16xf32> to vector<16x1xf32>
    %cst_55 = arith.constant 3.200000e+01 : f32
    %135 = vector.broadcast %cst_55 : f32 to vector<16x1xf32>
    %136 = arith.divf %134, %135 : vector<16x1xf32>
    %137 = vector.broadcast %129 : vector<16x1xf32> to vector<16x32xf32>
    %138 = arith.subf %125, %137 : vector<16x32xf32>
    %cst_56 = arith.constant 9.99999996E-13 : f32
    %139 = vector.broadcast %cst_56 : f32 to vector<16x1xf32>
    %140 = arith.addf %136, %139 : vector<16x1xf32>
    %141 = math.rsqrt %140 : vector<16x1xf32>
    %142 = vector.broadcast %141 : vector<16x1xf32> to vector<16x32xf32>
    %143 = arith.mulf %138, %142 : vector<16x32xf32>
    %144 = vector.broadcast %79 : vector<1x32xf32> to vector<16x32xf32>
    %145 = arith.mulf %143, %144 : vector<16x32xf32>
    %146 = vector.broadcast %80 : vector<1x32xf32> to vector<16x32xf32>
    %147 = arith.addf %145, %146 : vector<16x32xf32>
    %cst_57 = arith.constant dense<0.000000e+00> : vector<16x64xf32>
    %148 = tpu.matmul %147, %71, %cst_57 {dimension_numbers = #tpu.dot_dimension_numbers<[1], [0], [0], [1], [0, 0, 1, 1], [], []>} : vector<16x32xf32>, vector<32x64xf32>, vector<16x64xf32> -> vector<16x64xf32>
    %149 = vector.broadcast %73 : vector<1x64xf32> to vector<16x64xf32>
    %150 = arith.addf %148, %149 : vector<16x64xf32>
    %151 = arith.mulf %150, %150 : vector<16x64xf32>
    %152 = arith.mulf %150, %151 : vector<16x64xf32>
    %cst_58 = arith.constant 4.471500e-02 : f32
    %153 = vector.broadcast %cst_58 : f32 to vector<16x64xf32>
    %154 = arith.mulf %153, %152 : vector<16x64xf32>
    %155 = arith.addf %150, %154 : vector<16x64xf32>
    %cst_59 = arith.constant 0.797884583 : f32
    %156 = vector.broadcast %cst_59 : f32 to vector<16x64xf32>
    %157 = arith.mulf %156, %155 : vector<16x64xf32>
    %158 = math.tanh %157 : vector<16x64xf32>
    %cst_60 = arith.constant 1.000000e+00 : f32
    %159 = vector.broadcast %cst_60 : f32 to vector<16x64xf32>
    %160 = arith.addf %159, %158 : vector<16x64xf32>
    %cst_61 = arith.constant 5.000000e-01 : f32
    %161 = vector.broadcast %cst_61 : f32 to vector<16x64xf32>
    %162 = arith.mulf %161, %160 : vector<16x64xf32>
    %163 = arith.mulf %150, %162 : vector<16x64xf32>
    %cst_62 = arith.constant dense<0.000000e+00> : vector<16x32xf32>
    %164 = tpu.matmul %163, %75, %cst_62 {dimension_numbers = #tpu.dot_dimension_numbers<[1], [0], [0], [1], [0, 0, 1, 1], [], []>} : vector<16x64xf32>, vector<64x32xf32>, vector<16x32xf32> -> vector<16x32xf32>
    %165 = vector.broadcast %81 : vector<1x32xf32> to vector<16x32xf32>
    %166 = arith.addf %164, %165 : vector<16x32xf32>
    %167 = arith.addf %147, %166 : vector<16x32xf32>
    %cst_63 = arith.constant dense<0.000000e+00> : vector<16xf32>
    %168 = vector.multi_reduction <add>, %167, %cst_63 [1] : vector<16x32xf32> to vector<16xf32>
    %169 = vector.shape_cast %168 : vector<16xf32> to vector<16x1xf32>
    %cst_64 = arith.constant 3.200000e+01 : f32
    %170 = vector.broadcast %cst_64 : f32 to vector<16x1xf32>
    %171 = arith.divf %169, %170 : vector<16x1xf32>
    %172 = vector.broadcast %171 : vector<16x1xf32> to vector<16x32xf32>
    %173 = arith.subf %167, %172 : vector<16x32xf32>
    %174 = arith.mulf %173, %173 : vector<16x32xf32>
    %cst_65 = arith.constant dense<0.000000e+00> : vector<16xf32>
    %175 = vector.multi_reduction <add>, %174, %cst_65 [1] : vector<16x32xf32> to vector<16xf32>
    %176 = vector.shape_cast %175 : vector<16xf32> to vector<16x1xf32>
    %cst_66 = arith.constant 3.200000e+01 : f32
    %177 = vector.broadcast %cst_66 : f32 to vector<16x1xf32>
    %178 = arith.divf %176, %177 : vector<16x1xf32>
    %179 = vector.broadcast %171 : vector<16x1xf32> to vector<16x32xf32>
    %180 = arith.subf %167, %179 : vector<16x32xf32>
    %cst_67 = arith.constant 9.99999996E-13 : f32
    %181 = vector.broadcast %cst_67 : f32 to vector<16x1xf32>
    %182 = arith.addf %178, %181 : vector<16x1xf32>
    %183 = math.rsqrt %182 : vector<16x1xf32>
    %184 = vector.broadcast %183 : vector<16x1xf32> to vector<16x32xf32>
    %185 = arith.mulf %180, %184 : vector<16x32xf32>
    %186 = vector.broadcast %82 : vector<1x32xf32> to vector<16x32xf32>
    %187 = arith.mulf %185, %186 : vector<16x32xf32>
    %188 = vector.broadcast %83 : vector<1x32xf32> to vector<16x32xf32>
    %189 = arith.addf %187, %188 : vector<16x32xf32>
    %190 = vector.extract_strided_slice %189 {offsets = [0, 0], sizes = [4, 32], strides = [1, 1]} : vector<16x32xf32> to vector<4x32xf32>
    %191 = vector.extract_strided_slice %189 {offsets = [4, 0], sizes = [4, 32], strides = [1, 1]} : vector<16x32xf32> to vector<4x32xf32>
    %192 = vector.extract_strided_slice %189 {offsets = [8, 0], sizes = [4, 32], strides = [1, 1]} : vector<16x32xf32> to vector<4x32xf32>
    %193 = vector.extract_strided_slice %189 {offsets = [12, 0], sizes = [4, 32], strides = [1, 1]} : vector<16x32xf32> to vector<4x32xf32>
    %194 = tpu.concatenate %190, %191, %192, %193 in 1 : vector<4x32xf32>, vector<4x32xf32>, vector<4x32xf32>, vector<4x32xf32> -> vector<4x128xf32>
    %c1_68 = arith.constant 1 : index
    %c0_69 = arith.constant 0 : index
    %c0_70 = arith.constant 0 : index
    %195 = vector.load %arg16[%c1_68, %c0_69, %c0_70] : memref<3x4x128xf32, #tpu.memory_space<vmem>>, vector<1x4x128xf32>
    %196 = vector.shape_cast %195 : vector<1x4x128xf32> to vector<4x128xf32>
    %197 = vector.shape_cast %194 : vector<4x128xf32> to vector<1x4x128xf32>
    tpu.vector_store %arg16[%c1_68, %c0_69, %c0_70], %197 {strides = array<i32>} : memref<3x4x128xf32, #tpu.memory_space<vmem>>, vector<1x4x128xf32>,
    %c1_71 = arith.constant 1 : index
    %c0_72 = arith.constant 0 : index
    %c0_73 = arith.constant 0 : index
    %198 = vector.load %arg7[%c1_71, %c0_72, %c0_73] : memref<2x32x96xf32, #tpu.memory_space<vmem>>, vector<1x32x96xf32>
    %199 = vector.shape_cast %198 : vector<1x32x96xf32> to vector<32x96xf32>
    %c1_74 = arith.constant 1 : index
    %c0_75 = arith.constant 0 : index
    %c0_76 = arith.constant 0 : index
    %200 = vector.load %arg8[%c1_74, %c0_75, %c0_76] : memref<2x1x96xf32, #tpu.memory_space<vmem>>, vector<1x1x96xf32>
    %201 = vector.shape_cast %200 : vector<1x1x96xf32> to vector<1x96xf32>
    %c1_77 = arith.constant 1 : index
    %c0_78 = arith.constant 0 : index
    %c0_79 = arith.constant 0 : index
    %202 = vector.load %arg9[%c1_77, %c0_78, %c0_79] : memref<2x32x32xf32, #tpu.memory_space<vmem>>, vector<1x32x32xf32>
    %203 = vector.shape_cast %202 : vector<1x32x32xf32> to vector<32x32xf32>
    %c1_80 = arith.constant 1 : index
    %c0_81 = arith.constant 0 : index
    %c0_82 = arith.constant 0 : index
    %204 = vector.load %arg10[%c1_80, %c0_81, %c0_82] : memref<2x32x64xf32, #tpu.memory_space<vmem>>, vector<1x32x64xf32>
    %205 = vector.shape_cast %204 : vector<1x32x64xf32> to vector<32x64xf32>
    %c1_83 = arith.constant 1 : index
    %c0_84 = arith.constant 0 : index
    %c0_85 = arith.constant 0 : index
    %206 = vector.load %arg11[%c1_83, %c0_84, %c0_85] : memref<2x1x64xf32, #tpu.memory_space<vmem>>, vector<1x1x64xf32>
    %207 = vector.shape_cast %206 : vector<1x1x64xf32> to vector<1x64xf32>
    %c1_86 = arith.constant 1 : index
    %c0_87 = arith.constant 0 : index
    %c0_88 = arith.constant 0 : index
    %208 = vector.load %arg12[%c1_86, %c0_87, %c0_88] : memref<2x64x32xf32, #tpu.memory_space<vmem>>, vector<1x64x32xf32>
    %209 = vector.shape_cast %208 : vector<1x64x32xf32> to vector<64x32xf32>
    %c1_89 = arith.constant 1 : index
    %c0_90 = arith.constant 0 : index
    %c0_91 = arith.constant 0 : index
    %210 = vector.load %arg13[%c1_89, %c0_90, %c0_91] : memref<2x6x32xf32, #tpu.memory_space<vmem>>, vector<1x6x32xf32>
    %211 = vector.shape_cast %210 : vector<1x6x32xf32> to vector<6x32xf32>
    %212 = vector.extract_strided_slice %211 {offsets = [0, 0], sizes = [1, 32], strides = [1, 1]} : vector<6x32xf32> to vector<1x32xf32>
    %213 = vector.extract_strided_slice %211 {offsets = [1, 0], sizes = [1, 32], strides = [1, 1]} : vector<6x32xf32> to vector<1x32xf32>
    %214 = vector.extract_strided_slice %211 {offsets = [2, 0], sizes = [1, 32], strides = [1, 1]} : vector<6x32xf32> to vector<1x32xf32>
    %215 = vector.extract_strided_slice %211 {offsets = [3, 0], sizes = [1, 32], strides = [1, 1]} : vector<6x32xf32> to vector<1x32xf32>
    %216 = vector.extract_strided_slice %211 {offsets = [4, 0], sizes = [1, 32], strides = [1, 1]} : vector<6x32xf32> to vector<1x32xf32>
    %217 = vector.extract_strided_slice %211 {offsets = [5, 0], sizes = [1, 32], strides = [1, 1]} : vector<6x32xf32> to vector<1x32xf32>
    %cst_92 = arith.constant dense<0.000000e+00> : vector<16x96xf32>
    %218 = tpu.matmul %189, %199, %cst_92 {dimension_numbers = #tpu.dot_dimension_numbers<[1], [0], [0], [1], [0, 0, 1, 1], [], []>} : vector<16x32xf32>, vector<32x96xf32>, vector<16x96xf32> -> vector<16x96xf32>
    %219 = vector.broadcast %201 : vector<1x96xf32> to vector<16x96xf32>
    %220 = arith.addf %218, %219 : vector<16x96xf32>
    %221 = vector.extract_strided_slice %220 {offsets = [0, 0], sizes = [16, 32], strides = [1, 1]} : vector<16x96xf32> to vector<16x32xf32>
    %cst_93 = arith.constant 2.500000e-01 : f32
    %222 = vector.broadcast %cst_93 : f32 to vector<16x32xf32>
    %223 = arith.mulf %221, %222 : vector<16x32xf32>
    %224 = vector.shape_cast %223 : vector<16x32xf32> to vector<2x8x32xf32>
    %225 = vector.extract_strided_slice %220 {offsets = [0, 32], sizes = [16, 32], strides = [1, 1]} : vector<16x96xf32> to vector<16x32xf32>
    %226 = vector.shape_cast %225 : vector<16x32xf32> to vector<2x8x32xf32>
    %227 = vector.extract_strided_slice %220 {offsets = [0, 64], sizes = [16, 32], strides = [1, 1]} : vector<16x96xf32> to vector<16x32xf32>
    %228 = vector.shape_cast %227 : vector<16x32xf32> to vector<2x8x32xf32>
    %229 = vector.extract_strided_slice %224 {offsets = [0, 0, 0], sizes = [2, 8, 16], strides = [1, 1, 1]} : vector<2x8x32xf32> to vector<2x8x16xf32>
    %230 = vector.extract_strided_slice %224 {offsets = [0, 0, 16], sizes = [2, 8, 16], strides = [1, 1, 1]} : vector<2x8x32xf32> to vector<2x8x16xf32>
    %231 = tpu.concatenate %229, %230 in 0 : vector<2x8x16xf32>, vector<2x8x16xf32> -> vector<4x8x16xf32>
    %232 = vector.extract_strided_slice %226 {offsets = [0, 0, 0], sizes = [2, 8, 16], strides = [1, 1, 1]} : vector<2x8x32xf32> to vector<2x8x16xf32>
    %233 = vector.extract_strided_slice %226 {offsets = [0, 0, 16], sizes = [2, 8, 16], strides = [1, 1, 1]} : vector<2x8x32xf32> to vector<2x8x16xf32>
    %234 = tpu.concatenate %232, %233 in 0 : vector<2x8x16xf32>, vector<2x8x16xf32> -> vector<4x8x16xf32>
    %235 = vector.extract_strided_slice %228 {offsets = [0, 0, 0], sizes = [2, 8, 16], strides = [1, 1, 1]} : vector<2x8x32xf32> to vector<2x8x16xf32>
    %236 = vector.extract_strided_slice %228 {offsets = [0, 0, 16], sizes = [2, 8, 16], strides = [1, 1, 1]} : vector<2x8x32xf32> to vector<2x8x16xf32>
    %237 = tpu.concatenate %235, %236 in 0 : vector<2x8x16xf32>, vector<2x8x16xf32> -> vector<4x8x16xf32>
    "tpu.trace_start"() <{level = 10 : i32, message = "bqd,bkd->bqk"}> : () -> ()
    %cst_94 = arith.constant dense<0.000000e+00> : vector<4x8x8xf32>
    %238 = tpu.matmul %231, %234, %cst_94 {dimension_numbers = #tpu.dot_dimension_numbers<[2], [2], [1], [1], [0, 0, 0, 1, 1, 1], [0], [0]>} : vector<4x8x16xf32>, vector<4x8x16xf32>, vector<4x8x8xf32> -> vector<4x8x8xf32>
    "tpu.trace_stop"() : () -> ()
    %239 = vector.broadcast %63 : vector<4x1x8xf32> to vector<4x8x8xf32>
    %240 = arith.addf %238, %239 : vector<4x8x8xf32>
    %cst_95 = arith.constant dense<0xFF800000> : vector<4x8xf32>
    %241 = vector.multi_reduction <maximumf>, %240, %cst_95 [2] : vector<4x8x8xf32> to vector<4x8xf32>
    %242 = vector.shape_cast %241 : vector<4x8xf32> to vector<4x8x1xf32>
    %243 = vector.broadcast %242 : vector<4x8x1xf32> to vector<4x8x8xf32>
    %244 = arith.subf %240, %243 : vector<4x8x8xf32>
    %245 = math.exp %244 : vector<4x8x8xf32>
    %cst_96 = arith.constant dense<0.000000e+00> : vector<4x8xf32>
    %246 = vector.multi_reduction <add>, %245, %cst_96 [2] : vector<4x8x8xf32> to vector<4x8xf32>
    %247 = vector.shape_cast %246 : vector<4x8xf32> to vector<4x8x1xf32>
    %248 = tpu.reciprocal %247 {approx = true} : vector<4x8x1xf32> -> vector<4x8x1xf32>
    %249 = vector.broadcast %248 : vector<4x8x1xf32> to vector<4x8x8xf32>
    %250 = arith.mulf %245, %249 : vector<4x8x8xf32>
    "tpu.trace_start"() <{level = 10 : i32, message = "bqk,bkd->bqd"}> : () -> ()
    %cst_97 = arith.constant dense<0.000000e+00> : vector<4x8x16xf32>
    %251 = tpu.matmul %250, %237, %cst_97 {dimension_numbers = #tpu.dot_dimension_numbers<[2], [1], [1], [2], [0, 0, 0, 1, 1, 2], [0], [0]>} : vector<4x8x8xf32>, vector<4x8x16xf32>, vector<4x8x16xf32> -> vector<4x8x16xf32>
    "tpu.trace_stop"() : () -> ()
    %252 = vector.extract_strided_slice %251 {offsets = [0, 0, 0], sizes = [2, 8, 16], strides = [1, 1, 1]} : vector<4x8x16xf32> to vector<2x8x16xf32>
    %253 = vector.extract_strided_slice %251 {offsets = [2, 0, 0], sizes = [2, 8, 16], strides = [1, 1, 1]} : vector<4x8x16xf32> to vector<2x8x16xf32>
    %254 = tpu.concatenate %252, %253 in 2 : vector<2x8x16xf32>, vector<2x8x16xf32> -> vector<2x8x32xf32>
    %255 = vector.shape_cast %254 : vector<2x8x32xf32> to vector<16x32xf32>
    %cst_98 = arith.constant dense<0.000000e+00> : vector<16x32xf32>
    %256 = tpu.matmul %255, %203, %cst_98 {dimension_numbers = #tpu.dot_dimension_numbers<[1], [0], [0], [1], [0, 0, 1, 1], [], []>} : vector<16x32xf32>, vector<32x32xf32>, vector<16x32xf32> -> vector<16x32xf32>
    %257 = vector.broadcast %212 : vector<1x32xf32> to vector<16x32xf32>
    %258 = arith.addf %256, %257 : vector<16x32xf32>
    %259 = arith.addf %189, %258 : vector<16x32xf32>
    %cst_99 = arith.constant dense<0.000000e+00> : vector<16xf32>
    %260 = vector.multi_reduction <add>, %259, %cst_99 [1] : vector<16x32xf32> to vector<16xf32>
    %261 = vector.shape_cast %260 : vector<16xf32> to vector<16x1xf32>
    %cst_100 = arith.constant 3.200000e+01 : f32
    %262 = vector.broadcast %cst_100 : f32 to vector<16x1xf32>
    %263 = arith.divf %261, %262 : vector<16x1xf32>
    %264 = vector.broadcast %263 : vector<16x1xf32> to vector<16x32xf32>
    %265 = arith.subf %259, %264 : vector<16x32xf32>
    %266 = arith.mulf %265, %265 : vector<16x32xf32>
    %cst_101 = arith.constant dense<0.000000e+00> : vector<16xf32>
    %267 = vector.multi_reduction <add>, %266, %cst_101 [1] : vector<16x32xf32> to vector<16xf32>
    %268 = vector.shape_cast %267 : vector<16xf32> to vector<16x1xf32>
    %cst_102 = arith.constant 3.200000e+01 : f32
    %269 = vector.broadcast %cst_102 : f32 to vector<16x1xf32>
    %270 = arith.divf %268, %269 : vector<16x1xf32>
    %271 = vector.broadcast %263 : vector<16x1xf32> to vector<16x32xf32>
    %272 = arith.subf %259, %271 : vector<16x32xf32>
    %cst_103 = arith.constant 9.99999996E-13 : f32
    %273 = vector.broadcast %cst_103 : f32 to vector<16x1xf32>
    %274 = arith.addf %270, %273 : vector<16x1xf32>
    %275 = math.rsqrt %274 : vector<16x1xf32>
    %276 = vector.broadcast %275 : vector<16x1xf32> to vector<16x32xf32>
    %277 = arith.mulf %272, %276 : vector<16x32xf32>
    %278 = vector.broadcast %213 : vector<1x32xf32> to vector<16x32xf32>
    %279 = arith.mulf %277, %278 : vector<16x32xf32>
    %280 = vector.broadcast %214 : vector<1x32xf32> to vector<16x32xf32>
    %281 = arith.addf %279, %280 : vector<16x32xf32>
    %cst_104 = arith.constant dense<0.000000e+00> : vector<16x64xf32>
    %282 = tpu.matmul %281, %205, %cst_104 {dimension_numbers = #tpu.dot_dimension_numbers<[1], [0], [0], [1], [0, 0, 1, 1], [], []>} : vector<16x32xf32>, vector<32x64xf32>, vector<16x64xf32> -> vector<16x64xf32>
    %283 = vector.broadcast %207 : vector<1x64xf32> to vector<16x64xf32>
    %284 = arith.addf %282, %283 : vector<16x64xf32>
    %285 = arith.mulf %284, %284 : vector<16x64xf32>
    %286 = arith.mulf %284, %285 : vector<16x64xf32>
    %cst_105 = arith.constant 4.471500e-02 : f32
    %287 = vector.broadcast %cst_105 : f32 to vector<16x64xf32>
    %288 = arith.mulf %287, %286 : vector<16x64xf32>
    %289 = arith.addf %284, %288 : vector<16x64xf32>
    %cst_106 = arith.constant 0.797884583 : f32
    %290 = vector.broadcast %cst_106 : f32 to vector<16x64xf32>
    %291 = arith.mulf %290, %289 : vector<16x64xf32>
    %292 = math.tanh %291 : vector<16x64xf32>
    %cst_107 = arith.constant 1.000000e+00 : f32
    %293 = vector.broadcast %cst_107 : f32 to vector<16x64xf32>
    %294 = arith.addf %293, %292 : vector<16x64xf32>
    %cst_108 = arith.constant 5.000000e-01 : f32
    %295 = vector.broadcast %cst_108 : f32 to vector<16x64xf32>
    %296 = arith.mulf %295, %294 : vector<16x64xf32>
    %297 = arith.mulf %284, %296 : vector<16x64xf32>
    %cst_109 = arith.constant dense<0.000000e+00> : vector<16x32xf32>
    %298 = tpu.matmul %297, %209, %cst_109 {dimension_numbers = #tpu.dot_dimension_numbers<[1], [0], [0], [1], [0, 0, 1, 1], [], []>} : vector<16x64xf32>, vector<64x32xf32>, vector<16x32xf32> -> vector<16x32xf32>
    %299 = vector.broadcast %215 : vector<1x32xf32> to vector<16x32xf32>
    %300 = arith.addf %298, %299 : vector<16x32xf32>
    %301 = arith.addf %281, %300 : vector<16x32xf32>
    %cst_110 = arith.constant dense<0.000000e+00> : vector<16xf32>
    %302 = vector.multi_reduction <add>, %301, %cst_110 [1] : vector<16x32xf32> to vector<16xf32>
    %303 = vector.shape_cast %302 : vector<16xf32> to vector<16x1xf32>
    %cst_111 = arith.constant 3.200000e+01 : f32
    %304 = vector.broadcast %cst_111 : f32 to vector<16x1xf32>
    %305 = arith.divf %303, %304 : vector<16x1xf32>
    %306 = vector.broadcast %305 : vector<16x1xf32> to vector<16x32xf32>
    %307 = arith.subf %301, %306 : vector<16x32xf32>
    %308 = arith.mulf %307, %307 : vector<16x32xf32>
    %cst_112 = arith.constant dense<0.000000e+00> : vector<16xf32>
    %309 = vector.multi_reduction <add>, %308, %cst_112 [1] : vector<16x32xf32> to vector<16xf32>
    %310 = vector.shape_cast %309 : vector<16xf32> to vector<16x1xf32>
    %cst_113 = arith.constant 3.200000e+01 : f32
    %311 = vector.broadcast %cst_113 : f32 to vector<16x1xf32>
    %312 = arith.divf %310, %311 : vector<16x1xf32>
    %313 = vector.broadcast %305 : vector<16x1xf32> to vector<16x32xf32>
    %314 = arith.subf %301, %313 : vector<16x32xf32>
    %cst_114 = arith.constant 9.99999996E-13 : f32
    %315 = vector.broadcast %cst_114 : f32 to vector<16x1xf32>
    %316 = arith.addf %312, %315 : vector<16x1xf32>
    %317 = math.rsqrt %316 : vector<16x1xf32>
    %318 = vector.broadcast %317 : vector<16x1xf32> to vector<16x32xf32>
    %319 = arith.mulf %314, %318 : vector<16x32xf32>
    %320 = vector.broadcast %216 : vector<1x32xf32> to vector<16x32xf32>
    %321 = arith.mulf %319, %320 : vector<16x32xf32>
    %322 = vector.broadcast %217 : vector<1x32xf32> to vector<16x32xf32>
    %323 = arith.addf %321, %322 : vector<16x32xf32>
    %324 = vector.extract_strided_slice %323 {offsets = [0, 0], sizes = [4, 32], strides = [1, 1]} : vector<16x32xf32> to vector<4x32xf32>
    %325 = vector.extract_strided_slice %323 {offsets = [4, 0], sizes = [4, 32], strides = [1, 1]} : vector<16x32xf32> to vector<4x32xf32>
    %326 = vector.extract_strided_slice %323 {offsets = [8, 0], sizes = [4, 32], strides = [1, 1]} : vector<16x32xf32> to vector<4x32xf32>
    %327 = vector.extract_strided_slice %323 {offsets = [12, 0], sizes = [4, 32], strides = [1, 1]} : vector<16x32xf32> to vector<4x32xf32>
    %328 = tpu.concatenate %324, %325, %326, %327 in 1 : vector<4x32xf32>, vector<4x32xf32>, vector<4x32xf32>, vector<4x32xf32> -> vector<4x128xf32>
    %c2 = arith.constant 2 : index
    %c0_115 = arith.constant 0 : index
    %c0_116 = arith.constant 0 : index
    %329 = vector.load %arg16[%c2, %c0_115, %c0_116] : memref<3x4x128xf32, #tpu.memory_space<vmem>>, vector<1x4x128xf32>
    %330 = vector.shape_cast %329 : vector<1x4x128xf32> to vector<4x128xf32>
    %331 = vector.shape_cast %328 : vector<4x128xf32> to vector<1x4x128xf32>
    tpu.vector_store %arg16[%c2, %c0_115, %c0_116], %331 {strides = array<i32>} : memref<3x4x128xf32, #tpu.memory_space<vmem>>, vector<1x4x128xf32>,
    %332 = vector.extract_strided_slice %323 {offsets = [0, 0], sizes = [1, 32], strides = [1, 1]} : vector<16x32xf32> to vector<1x32xf32>
    %333 = vector.extract_strided_slice %323 {offsets = [8, 0], sizes = [1, 32], strides = [1, 1]} : vector<16x32xf32> to vector<1x32xf32>
    %334 = tpu.concatenate %332, %333 in 0 : vector<1x32xf32>, vector<1x32xf32> -> vector<2x32xf32>
    %c0_117 = arith.constant 0 : index
    %c0_118 = arith.constant 0 : index
    %335 = vector.load %arg14[%c0_117, %c0_118] : memref<33x32xf32, #tpu.memory_space<vmem>>, vector<33x32xf32>
    %c0_119 = arith.constant 0 : index
    %c0_120 = arith.constant 0 : index
    %336 = vector.load %arg15[%c0_119, %c0_120] : memref<33x3xf32, #tpu.memory_space<vmem>>, vector<33x3xf32>
    %337 = vector.extract_strided_slice %335 {offsets = [0, 0], sizes = [32, 32], strides = [1, 1]} : vector<33x32xf32> to vector<32x32xf32>
    %cst_121 = arith.constant dense<0.000000e+00> : vector<2x32xf32>
    %338 = tpu.matmul %334, %337, %cst_121 {dimension_numbers = #tpu.dot_dimension_numbers<[1], [0], [0], [1], [0, 0, 1, 1], [], []>} : vector<2x32xf32>, vector<32x32xf32>, vector<2x32xf32> -> vector<2x32xf32>
    %339 = vector.extract_strided_slice %335 {offsets = [32, 0], sizes = [1, 32], strides = [1, 1]} : vector<33x32xf32> to vector<1x32xf32>
    %340 = vector.broadcast %339 : vector<1x32xf32> to vector<2x32xf32>
    %341 = arith.addf %338, %340 : vector<2x32xf32>
    %342 = math.tanh %341 : vector<2x32xf32>
    %343 = vector.extract_strided_slice %336 {offsets = [0, 0], sizes = [32, 3], strides = [1, 1]} : vector<33x3xf32> to vector<32x3xf32>
    %cst_122 = arith.constant dense<0.000000e+00> : vector<2x3xf32>
    %344 = tpu.matmul %342, %343, %cst_122 {dimension_numbers = #tpu.dot_dimension_numbers<[1], [0], [0], [1], [0, 0, 1, 1], [], []>} : vector<2x32xf32>, vector<32x3xf32>, vector<2x3xf32> -> vector<2x3xf32>
    %345 = vector.extract_strided_slice %336 {offsets = [32, 0], sizes = [1, 3], strides = [1, 1]} : vector<33x3xf32> to vector<1x3xf32>
    %346 = vector.broadcast %345 : vector<1x3xf32> to vector<2x3xf32>
    %347 = arith.addf %344, %346 : vector<2x3xf32>
    %c0_123 = arith.constant 0 : index
    %c0_124 = arith.constant 0 : index
    %348 = vector.load %arg17[%c0_123, %c0_124] : memref<2x3xf32, #tpu.memory_space<vmem>>, vector<2x3xf32>
    tpu.vector_store %arg17[%c0_123, %c0_124], %347 {strides = array<i32>} : memref<2x3xf32, #tpu.memory_space<vmem>>, vector<2x3xf32>,
    return
  }
}

</mosaic_0001>

<llo_original>
// kernel: tpu_custom_call.1
$region0: #{tpu_custom_call.1}
  #allocation0 [shape = 'u32[]', space=smem, size = 0x4, offset = 0x4, fixed_abs, tag = 'smem constant byte address 0x4 - core index']
  #allocation1 [shape = 'u32[144,128]{1,0:T(1,128)}', space=vmem, size = 0x12000, scoped, tag = 'internal scratch']
  %s0 = inlined_call_operand.hbm [shape: s32[16,1], index: 0, kind: input, shape index: {}]
  %s1 = inlined_call_operand.hbm [shape: s32[16,1], index: 1, kind: input, shape index: {}]
  %s2 = inlined_call_operand.hbm [shape: f32[2,8], index: 2, kind: input, shape index: {}]
  %s3 = inlined_call_operand.hbm [shape: f32[128,32], index: 3, kind: input, shape index: {}]
  %s4 = inlined_call_operand.hbm [shape: f32[16,32], index: 4, kind: input, shape index: {}]
  %s5 = inlined_call_operand.hbm [shape: f32[2,32], index: 5, kind: input, shape index: {}]
  %s6 = inlined_call_operand.hbm [shape: f32[2,32], index: 6, kind: input, shape index: {}]
  %s7 = inlined_call_operand.hbm [shape: f32[2,32,96], index: 7, kind: input, shape index: {}]
  %s8 = inlined_call_operand.hbm [shape: f32[2,1,96], index: 8, kind: input, shape index: {}]
  %s9 = inlined_call_operand.hbm [shape: f32[2,32,32], index: 9, kind: input, shape index: {}]
  %s10 = inlined_call_operand.hbm [shape: f32[2,32,64], index: 10, kind: input, shape index: {}]
  %s11 = inlined_call_operand.hbm [shape: f32[2,1,64], index: 11, kind: input, shape index: {}]
  %s12 = inlined_call_operand.hbm [shape: f32[2,64,32], index: 12, kind: input, shape index: {}]
  %s13 = inlined_call_operand.hbm [shape: f32[2,6,32], index: 13, kind: input, shape index: {}]
  %s14 = inlined_call_operand.hbm [shape: f32[33,32], index: 14, kind: input, shape index: {}]
  %s15 = inlined_call_operand.hbm [shape: f32[33,3], index: 15, kind: input, shape index: {}]
  %s16 = inlined_call_operand.hbm [shape: f32[3,4,128], index: 16, kind: output, shape index: {0}]
  %s17 = inlined_call_operand.hbm [shape: f32[2,3], index: 17, kind: output, shape index: {1}]
  %18 = xla_tuple %s16, %s17
  %s19 = sld [smem:[#allocation0]]
  $region146: #{tpu_custom_call.1} parent=0
    _
  %s21 = ssub.s32 1, %s19
  %s22 = scalar_select 0, %s21, %s19
  $region1: #{tpu_custom_call.1} parent=0
    #allocation2 [shape = 'u8[8192]{0}', space=vmem, size = 0x2000, scoped, tag = 'input window, operand 0, single buffered']
    #allocation3 [shape = 's32[1]{0}', space=sflag, size = 0x4, scoped, tag = 'scoped memory for tpu_custom_call.1']
    #allocation4 [shape = 's32[1]{0}', space=sflag, size = 0x4, scoped, tag = 'scoped memory for tpu_custom_call.1']
    #allocation5 [shape = 'u8[8192]{0}', space=vmem, size = 0x2000, scoped, tag = 'input window, operand 1, single buffered']
    #allocation6 [shape = 's32[1]{0}', space=sflag, size = 0x4, scoped, tag = 'scoped memory for tpu_custom_call.1']
    #allocation7 [shape = 'u8[1024]{0}', space=vmem, size = 0x400, scoped, tag = 'input window, operand 2, single buffered']
    #allocation8 [shape = 'u8[65536]{0}', space=vmem, size = 0x10000, scoped, tag = 'input window, operand 3, single buffered']
    #allocation9 [shape = 's32[1]{0}', space=sflag, size = 0x4, scoped, tag = 'scoped memory for tpu_custom_call.1']
    #allocation10 [shape = 'u8[8192]{0}', space=vmem, size = 0x2000, scoped, tag = 'input window, operand 4, single buffered']
    #allocation11 [shape = 'u8[1024]{0}', space=vmem, size = 0x400, scoped, tag = 'input window, operand 5, single buffered']
    #allocation12 [shape = 's32[1]{0}', space=sflag, size = 0x4, scoped, tag = 'scoped memory for tpu_custom_call.1']
    #allocation13 [shape = 'u8[1024]{0}', space=vmem, size = 0x400, scoped, tag = 'input window, operand 6, single buffered']
    #allocation14 [shape = 'u8[32768]{0}', space=vmem, size = 0x8000, scoped, tag = 'input window, operand 7, single buffered']
    #allocation15 [shape = 's32[1]{0}', space=sflag, size = 0x4, scoped, tag = 'scoped memory for tpu_custom_call.1']
    #allocation16 [shape = 'u8[1024]{0}', space=vmem, size = 0x400, scoped, tag = 'input window, operand 8, single buffered']
    #allocation17 [shape = 'u8[32768]{0}', space=vmem, size = 0x8000, scoped, tag = 'input window, operand 9, single buffered']
    #allocation18 [shape = 's32[1]{0}', space=sflag, size = 0x4, scoped, tag = 'scoped memory for tpu_custom_call.1']
    #allocation19 [shape = 'u8[32768]{0}', space=vmem, size = 0x8000, scoped, tag = 'input window, operand 10, single buffered']
    #allocation20 [shape = 'u8[1024]{0}', space=vmem, size = 0x400, scoped, tag = 'input window, operand 11, single buffered']
    #allocation21 [shape = 's32[1]{0}', space=sflag, size = 0x4, scoped, tag = 'scoped memory for tpu_custom_call.1']
    #allocation22 [shape = 'u8[65536]{0}', space=vmem, size = 0x10000, scoped, tag = 'input window, operand 12, single buffered']
    #allocation23 [shape = 'u8[8192]{0}', space=vmem, size = 0x2000, scoped, tag = 'input window, operand 13, single buffered']
    #allocation24 [shape = 's32[1]{0}', space=sflag, size = 0x4, scoped, tag = 'scoped memory for tpu_custom_call.1']
    #allocation25 [shape = 'u8[20480]{0}', space=vmem, size = 0x5000, scoped, tag = 'input window, operand 14, single buffered']
    #allocation26 [shape = 'u8[20480]{0}', space=vmem, size = 0x5000, scoped, tag = 'input window, operand 15, single buffered']
    #allocation27 [shape = 's32[1]{0}', space=sflag, size = 0x4, scoped, tag = 'scoped memory for tpu_custom_call.1']
    #allocation28 [shape = 'u8[6144]{0}', space=vmem, size = 0x1800, scoped, tag = 'output window, operand 0, single buffered']
    #allocation29 [shape = 'u8[1024]{0}', space=vmem, size = 0x400, scoped, tag = 'output window, operand 1, single buffered']
    #allocation30 [shape = 's32[1]{0}', space=sflag, size = 0x4, scoped, tag = 'scoped memory for tpu_custom_call.1']
    %23 = vsyncpa [#allocation3], 0
    %24 = vsyncpa [#allocation6], 0
    %25 = vsyncpa [#allocation9], 0
    %26 = vsyncpa [#allocation12], 0
    %27 = vsyncpa [#allocation15], 0
    %28 = vsyncpa [#allocation18], 0
    %29 = vsyncpa [#allocation21], 0
    %30 = vsyncpa [#allocation24], 0
    %31 = vsyncpa [#allocation27], 0
    %32 = vsyncpa [#allocation4], 0
    %33 = vsyncpa [#allocation30], 0
    // Predicated region
    $region2: #{tpu_custom_call.1} parent=1 // pred_check
      _
    $region3: #{tpu_custom_call.1} parent=1 // pred_check_branch
      %35 = sbr.rel (0) target = $region5
    $region4: #{tpu_custom_call.1} parent=1 // pred_region
      %s37 = ssub.s32 256, 256
      %38 = vsyncadd [#allocation3], %s37
      %s39 = sshll.u32 [#allocation2], 4
      %s40 = int_to_ptr.vmem [resolvable:$true] %s39
      %45 = dma.hbm_to_vmem [thread:$0]  %s0, 256, %s40, [#allocation3], 128, 128, 8
    $region5: #{tpu_custom_call.1} parent=1 // pred_fallthru
      _
    // Predicated region
    $region6: #{tpu_custom_call.1} parent=1 // pred_check
      _
    $region7: #{tpu_custom_call.1} parent=1 // pred_check_branch
      %47 = sbr.rel (0) target = $region9
    $region8: #{tpu_custom_call.1} parent=1 // pred_region
      %s49 = ssub.s32 256, 256
      %50 = vsyncadd [#allocation6], %s49
      %s51 = sshll.u32 [#allocation5], 4
      %s52 = int_to_ptr.vmem [resolvable:$true] %s51
      %57 = dma.hbm_to_vmem [thread:$0]  %s1, 256, %s52, [#allocation6], 128, 128, 8
    $region9: #{tpu_custom_call.1} parent=1 // pred_fallthru
      _
    // Predicated region
    $region10: #{tpu_custom_call.1} parent=1 // pred_check
      _
    $region11: #{tpu_custom_call.1} parent=1 // pred_check_branch
      %59 = sbr.rel (0) target = $region13
    $region12: #{tpu_custom_call.1} parent=1 // pred_region
      %s61 = ssub.s32 32, 32
      %62 = vsyncadd [#allocation6], %s61
      %s64 = sshll.u32 [#allocation7], 4
      %s65 = int_to_ptr.vmem [resolvable:$true] %s64
      %67 = dma.hbm_to_vmem [thread:$0]  %s2, 32, %s65, [#allocation6]
    $region13: #{tpu_custom_call.1} parent=1 // pred_fallthru
      _
    // Predicated region
    $region14: #{tpu_custom_call.1} parent=1 // pred_check
      _
    $region15: #{tpu_custom_call.1} parent=1 // pred_check_branch
      %69 = sbr.rel (0) target = $region17
    $region16: #{tpu_custom_call.1} parent=1 // pred_region
      %s71 = ssub.s32 2048, 2048
      %72 = vsyncadd [#allocation9], %s71
      %s73 = sshll.u32 [#allocation8], 4
      %s74 = int_to_ptr.vmem [resolvable:$true] %s73
      %79 = dma.hbm_to_vmem [thread:$0]  %s3, 2048, %s74, [#allocation9], 128, 128, 8
    $region17: #{tpu_custom_call.1} parent=1 // pred_fallthru
      _
    // Predicated region
    $region18: #{tpu_custom_call.1} parent=1 // pred_check
      _
    $region19: #{tpu_custom_call.1} parent=1 // pred_check_branch
      %81 = sbr.rel (0) target = $region21
    $region20: #{tpu_custom_call.1} parent=1 // pred_region
      %s83 = ssub.s32 256, 256
      %84 = vsyncadd [#allocation9], %s83
      %s85 = sshll.u32 [#allocation10], 4
      %s86 = int_to_ptr.vmem [resolvable:$true] %s85
      %91 = dma.hbm_to_vmem [thread:$0]  %s4, 256, %s86, [#allocation9], 128, 128, 8
    $region21: #{tpu_custom_call.1} parent=1 // pred_fallthru
      _
    // Predicated region
    $region22: #{tpu_custom_call.1} parent=1 // pred_check
      _
    $region23: #{tpu_custom_call.1} parent=1 // pred_check_branch
      %93 = sbr.rel (0) target = $region25
    $region24: #{tpu_custom_call.1} parent=1 // pred_region
      %s95 = ssub.s32 32, 32
      %96 = vsyncadd [#allocation12], %s95
      %s98 = sshll.u32 [#allocation11], 4
      %s99 = int_to_ptr.vmem [resolvable:$true] %s98
      %101 = dma.hbm_to_vmem [thread:$0]  %s5, 32, %s99, [#allocation12]
    $region25: #{tpu_custom_call.1} parent=1 // pred_fallthru
      _
    // Predicated region
    $region26: #{tpu_custom_call.1} parent=1 // pred_check
      _
    $region27: #{tpu_custom_call.1} parent=1 // pred_check_branch
      %103 = sbr.rel (0) target = $region29
    $region28: #{tpu_custom_call.1} parent=1 // pred_region
      %s105 = ssub.s32 32, 32
      %106 = vsyncadd [#allocation12], %s105
      %s108 = sshll.u32 [#allocation13], 4
      %s109 = int_to_ptr.vmem [resolvable:$true] %s108
      %111 = dma.hbm_to_vmem [thread:$0]  %s6, 32, %s109, [#allocation12]
    $region29: #{tpu_custom_call.1} parent=1 // pred_fallthru
      _
    // Predicated region
    $region30: #{tpu_custom_call.1} parent=1 // pred_check
      _
    $region31: #{tpu_custom_call.1} parent=1 // pred_check_branch
      %113 = sbr.rel (0) target = $region33
    $region32: #{tpu_custom_call.1} parent=1 // pred_region
      %s115 = ssub.s32 1024, 1024
      %116 = vsyncadd [#allocation15], %s115
      %s117 = sshll.u32 [#allocation14], 4
      %s118 = int_to_ptr.vmem [resolvable:$true] %s117
      %123 = dma.hbm_to_vmem [thread:$0]  %s7, 1024, %s118, [#allocation15], 128, 128, 8
    $region33: #{tpu_custom_call.1} parent=1 // pred_fallthru
      _
    // Predicated region
    $region34: #{tpu_custom_call.1} parent=1 // pred_check
      _
    $region35: #{tpu_custom_call.1} parent=1 // pred_check_branch
      %125 = sbr.rel (0) target = $region37
    $region36: #{tpu_custom_call.1} parent=1 // pred_region
      %s127 = ssub.s32 32, 32
      %128 = vsyncadd [#allocation15], %s127
      %s129 = sshll.u32 [#allocation16], 4
      %s130 = int_to_ptr.vmem [resolvable:$true] %s129
      %135 = dma.hbm_to_vmem [thread:$0]  %s8, 32, %s130, [#allocation15], 16, 16, 1
    $region37: #{tpu_custom_call.1} parent=1 // pred_fallthru
      _
    // Predicated region
    $region38: #{tpu_custom_call.1} parent=1 // pred_check
      _
    $region39: #{tpu_custom_call.1} parent=1 // pred_check_branch
      %137 = sbr.rel (0) target = $region41
    $region40: #{tpu_custom_call.1} parent=1 // pred_region
      %s139 = ssub.s32 1024, 1024
      %140 = vsyncadd [#allocation18], %s139
      %s141 = sshll.u32 [#allocation17], 4
      %s142 = int_to_ptr.vmem [resolvable:$true] %s141
      %147 = dma.hbm_to_vmem [thread:$0]  %s9, 1024, %s142, [#allocation18], 128, 128, 8
    $region41: #{tpu_custom_call.1} parent=1 // pred_fallthru
      _
    // Predicated region
    $region42: #{tpu_custom_call.1} parent=1 // pred_check
      _
    $region43: #{tpu_custom_call.1} parent=1 // pred_check_branch
      %149 = sbr.rel (0) target = $region45
    $region44: #{tpu_custom_call.1} parent=1 // pred_region
      %s151 = ssub.s32 1024, 1024
      %152 = vsyncadd [#allocation18], %s151
      %s153 = sshll.u32 [#allocation19], 4
      %s154 = int_to_ptr.vmem [resolvable:$true] %s153
      %159 = dma.hbm_to_vmem [thread:$0]  %s10, 1024, %s154, [#allocation18], 128, 128, 8
    $region45: #{tpu_custom_call.1} parent=1 // pred_fallthru
      _
    // Predicated region
    $region46: #{tpu_custom_call.1} parent=1 // pred_check
      _
    $region47: #{tpu_custom_call.1} parent=1 // pred_check_branch
      %161 = sbr.rel (0) target = $region49
    $region48: #{tpu_custom_call.1} parent=1 // pred_region
      %s163 = ssub.s32 32, 32
      %164 = vsyncadd [#allocation21], %s163
      %s165 = sshll.u32 [#allocation20], 4
      %s166 = int_to_ptr.vmem [resolvable:$true] %s165
      %171 = dma.hbm_to_vmem [thread:$0]  %s11, 32, %s166, [#allocation21], 16, 16, 1
    $region49: #{tpu_custom_call.1} parent=1 // pred_fallthru
      _
    // Predicated region
    $region50: #{tpu_custom_call.1} parent=1 // pred_check
      _
    $region51: #{tpu_custom_call.1} parent=1 // pred_check_branch
      %173 = sbr.rel (0) target = $region53
    $region52: #{tpu_custom_call.1} parent=1 // pred_region
      %s175 = ssub.s32 2048, 2048
      %176 = vsyncadd [#allocation21], %s175
      %s177 = sshll.u32 [#allocation22], 4
      %s178 = int_to_ptr.vmem [resolvable:$true] %s177
      %183 = dma.hbm_to_vmem [thread:$0]  %s12, 2048, %s178, [#allocation21], 128, 128, 8
    $region53: #{tpu_custom_call.1} parent=1 // pred_fallthru
      _
    // Predicated region
    $region54: #{tpu_custom_call.1} parent=1 // pred_check
      _
    $region55: #{tpu_custom_call.1} parent=1 // pred_check_branch
      %185 = sbr.rel (0) target = $region57
    $region56: #{tpu_custom_call.1} parent=1 // pred_region
      %s187 = ssub.s32 256, 256
      %188 = vsyncadd [#allocation24], %s187
      %s189 = sshll.u32 [#allocation23], 4
      %s190 = int_to_ptr.vmem [resolvable:$true] %s189
      %195 = dma.hbm_to_vmem [thread:$0]  %s13, 256, %s190, [#allocation24], 128, 128, 8
    $region57: #{tpu_custom_call.1} parent=1 // pred_fallthru
      _
    // Predicated region
    $region58: #{tpu_custom_call.1} parent=1 // pred_check
      _
    $region59: #{tpu_custom_call.1} parent=1 // pred_check_branch
      %197 = sbr.rel (0) target = $region61
    $region60: #{tpu_custom_call.1} parent=1 // pred_region
      %s199 = ssub.s32 640, 640
      %200 = vsyncadd [#allocation24], %s199
      %s201 = sshll.u32 [#allocation25], 4
      %s202 = int_to_ptr.vmem [resolvable:$true] %s201
      %207 = dma.hbm_to_vmem [thread:$0]  %s14, 640, %s202, [#allocation24], 128, 128, 8
    $region61: #{tpu_custom_call.1} parent=1 // pred_fallthru
      _
    // Predicated region
    $region62: #{tpu_custom_call.1} parent=1 // pred_check
      _
    $region63: #{tpu_custom_call.1} parent=1 // pred_check_branch
      %209 = sbr.rel (0) target = $region65
    $region64: #{tpu_custom_call.1} parent=1 // pred_region
      %s211 = ssub.s32 640, 640
      %212 = vsyncadd [#allocation27], %s211
      %s213 = sshll.u32 [#allocation26], 4
      %s214 = int_to_ptr.vmem [resolvable:$true] %s213
      %219 = dma.hbm_to_vmem [thread:$0]  %s15, 640, %s214, [#allocation27], 128, 128, 8
    $region65: #{tpu_custom_call.1} parent=1 // pred_fallthru
      _
    // Predicated region
    $region66: #{tpu_custom_call.1} parent=1 // pred_check
      _
    $region67: #{tpu_custom_call.1} parent=1 // pred_check_branch
      %221 = sbr.rel (0) target = $region69
    $region68: #{tpu_custom_call.1} parent=1 // pred_region
      %222 = dma.done [#allocation3], 256
    $region69: #{tpu_custom_call.1} parent=1 // pred_fallthru
      _
    // Predicated region
    $region70: #{tpu_custom_call.1} parent=1 // pred_check
      _
    $region71: #{tpu_custom_call.1} parent=1 // pred_check_branch
      %224 = sbr.rel (0) target = $region73
    $region72: #{tpu_custom_call.1} parent=1 // pred_region
      %225 = dma.done [#allocation6], 256
    $region73: #{tpu_custom_call.1} parent=1 // pred_fallthru
      _
    // Predicated region
    $region74: #{tpu_custom_call.1} parent=1 // pred_check
      _
    $region75: #{tpu_custom_call.1} parent=1 // pred_check_branch
      %227 = sbr.rel (0) target = $region77
    $region76: #{tpu_custom_call.1} parent=1 // pred_region
      %228 = dma.done [#allocation6], 32
    $region77: #{tpu_custom_call.1} parent=1 // pred_fallthru
      _
    // Predicated region
    $region78: #{tpu_custom_call.1} parent=1 // pred_check
      _
    $region79: #{tpu_custom_call.1} parent=1 // pred_check_branch
      %230 = sbr.rel (0) target = $region81
    $region80: #{tpu_custom_call.1} parent=1 // pred_region
      %231 = dma.done [#allocation9], 2048
    $region81: #{tpu_custom_call.1} parent=1 // pred_fallthru
      _
    // Predicated region
    $region82: #{tpu_custom_call.1} parent=1 // pred_check
      _
    $region83: #{tpu_custom_call.1} parent=1 // pred_check_branch
      %233 = sbr.rel (0) target = $region85
    $region84: #{tpu_custom_call.1} parent=1 // pred_region
      %234 = dma.done [#allocation9], 256
    $region85: #{tpu_custom_call.1} parent=1 // pred_fallthru
      _
    // Predicated region
    $region86: #{tpu_custom_call.1} parent=1 // pred_check
      _
    $region87: #{tpu_custom_call.1} parent=1 // pred_check_branch
      %236 = sbr.rel (0) target = $region89
    $region88: #{tpu_custom_call.1} parent=1 // pred_region
      %237 = dma.done [#allocation12], 32
    $region89: #{tpu_custom_call.1} parent=1 // pred_fallthru
      _
    // Predicated region
    $region90: #{tpu_custom_call.1} parent=1 // pred_check
      _
    $region91: #{tpu_custom_call.1} parent=1 // pred_check_branch
      %239 = sbr.rel (0) target = $region93
    $region92: #{tpu_custom_call.1} parent=1 // pred_region
      %240 = dma.done [#allocation12], 32
    $region93: #{tpu_custom_call.1} parent=1 // pred_fallthru
      _
    // Predicated region
    $region94: #{tpu_custom_call.1} parent=1 // pred_check
      _
    $region95: #{tpu_custom_call.1} parent=1 // pred_check_branch
      %242 = sbr.rel (0) target = $region97
    $region96: #{tpu_custom_call.1} parent=1 // pred_region
      %243 = dma.done [#allocation15], 1024
    $region97: #{tpu_custom_call.1} parent=1 // pred_fallthru
      _
    // Predicated region
    $region98: #{tpu_custom_call.1} parent=1 // pred_check
      _
    $region99: #{tpu_custom_call.1} parent=1 // pred_check_branch
      %245 = sbr.rel (0) target = $region101
    $region100: #{tpu_custom_call.1} parent=1 // pred_region
      %246 = dma.done [#allocation15], 32
    $region101: #{tpu_custom_call.1} parent=1 // pred_fallthru
      _
    // Predicated region
    $region102: #{tpu_custom_call.1} parent=1 // pred_check
      _
    $region103: #{tpu_custom_call.1} parent=1 // pred_check_branch
      %248 = sbr.rel (0) target = $region105
    $region104: #{tpu_custom_call.1} parent=1 // pred_region
      %249 = dma.done [#allocation18], 1024
    $region105: #{tpu_custom_call.1} parent=1 // pred_fallthru
      _
    // Predicated region
    $region106: #{tpu_custom_call.1} parent=1 // pred_check
      _
    $region107: #{tpu_custom_call.1} parent=1 // pred_check_branch
      %251 = sbr.rel (0) target = $region109
    $region108: #{tpu_custom_call.1} parent=1 // pred_region
      %252 = dma.done [#allocation18], 1024
    $region109: #{tpu_custom_call.1} parent=1 // pred_fallthru
      _
    // Predicated region
    $region110: #{tpu_custom_call.1} parent=1 // pred_check
      _
    $region111: #{tpu_custom_call.1} parent=1 // pred_check_branch
      %254 = sbr.rel (0) target = $region113
    $region112: #{tpu_custom_call.1} parent=1 // pred_region
      %255 = dma.done [#allocation21], 32
    $region113: #{tpu_custom_call.1} parent=1 // pred_fallthru
      _
    // Predicated region
    $region114: #{tpu_custom_call.1} parent=1 // pred_check
      _
    $region115: #{tpu_custom_call.1} parent=1 // pred_check_branch
      %257 = sbr.rel (0) target = $region117
    $region116: #{tpu_custom_call.1} parent=1 // pred_region
      %258 = dma.done [#allocation21], 2048
    $region117: #{tpu_custom_call.1} parent=1 // pred_fallthru
      _
    // Predicated region
    $region118: #{tpu_custom_call.1} parent=1 // pred_check
      _
    $region119: #{tpu_custom_call.1} parent=1 // pred_check_branch
      %260 = sbr.rel (0) target = $region121
    $region120: #{tpu_custom_call.1} parent=1 // pred_region
      %261 = dma.done [#allocation24], 256
    $region121: #{tpu_custom_call.1} parent=1 // pred_fallthru
      _
    // Predicated region
    $region122: #{tpu_custom_call.1} parent=1 // pred_check
      _
    $region123: #{tpu_custom_call.1} parent=1 // pred_check_branch
      %263 = sbr.rel (0) target = $region125
    $region124: #{tpu_custom_call.1} parent=1 // pred_region
      %264 = dma.done [#allocation24], 640
    $region125: #{tpu_custom_call.1} parent=1 // pred_fallthru
      _
    // Predicated region
    $region126: #{tpu_custom_call.1} parent=1 // pred_check
      _
    $region127: #{tpu_custom_call.1} parent=1 // pred_check_branch
      %266 = sbr.rel (0) target = $region129
    $region128: #{tpu_custom_call.1} parent=1 // pred_region
      %267 = dma.done [#allocation27], 640
    $region129: #{tpu_custom_call.1} parent=1 // pred_fallthru
      _
    %v268 = vld [vmem:[#allocation2] sm:$0xff]
    %v269 = vld [vmem:[#allocation2 + $0x8] sm:$0xff]
    %v270 = vld [vmem:[#allocation5] sm:$0xff]
    %v271 = vld [vmem:[#allocation5 + $0x8] sm:$0xff]
    %v272 = vlaneseq
    %v273 = vand.u32 %v272, 127
    %274 = vset.pattern.permute.xlu0 0
    %275 = vperm.xlu0 %274, %v268
    %v276 = vpop.permute.xlu0 %275
    %277 = vset.pattern.permute.xlu0 0
    %278 = vperm.xlu0 %277, %v269
    %v279 = vpop.permute.xlu0 %278
    %vm280 = vcmp.eq.s32.totalorder %v276, %v273
    %vm281 = vcmp.eq.s32.totalorder %v279, %v273
    %v282 = vsel %vm280, 1, 0
    %v283 = vsel %vm281, 1, 0
    %v284 = vcvt.s32.f32 %v282
    %v285 = vcvt.s32.f32 %v283
    %v286 = vld [vmem:[#allocation8] sm:$0xff]
    %v287 = vld [vmem:[#allocation8 + $0x8] sm:$0xff]
    %v288 = vld [vmem:[#allocation8 + $0x10] sm:$0xff]
    %v289 = vld [vmem:[#allocation8 + $0x18] sm:$0xff]
    %v290 = vld [vmem:[#allocation8 + $0x20] sm:$0xff]
    %v291 = vld [vmem:[#allocation8 + $0x28] sm:$0xff]
    %v292 = vld [vmem:[#allocation8 + $0x30] sm:$0xff]
    %v293 = vld [vmem:[#allocation8 + $0x38] sm:$0xff]
    %v294 = vld [vmem:[#allocation8 + $0x40] sm:$0xff]
    %v295 = vld [vmem:[#allocation8 + $0x48] sm:$0xff]
    %v296 = vld [vmem:[#allocation8 + $0x50] sm:$0xff]
    %v297 = vld [vmem:[#allocation8 + $0x58] sm:$0xff]
    %v298 = vld [vmem:[#allocation8 + $0x60] sm:$0xff]
    %v299 = vld [vmem:[#allocation8 + $0x68] sm:$0xff]
    %v300 = vld [vmem:[#allocation8 + $0x70] sm:$0xff]
    %v301 = vld [vmem:[#allocation8 + $0x78] sm:$0xff]
    %v302 = vld [vmem:[#allocation10] sm:$0xff]
    %vm303 = vcmp.eq.s32.totalorder %v270, 0
    %vm304 = vcmp.eq.s32.totalorder %v271, 0
    %v305 = vld [vmem:[#allocation11] sm:$0x1]
    %v306 = vld [vmem:[#allocation11 + $0x1] sm:$0x1]
    %v307 = vsel %vm303, 1, 0
    %v308 = vsel %vm304, 1, 0
    %309 = vset.pattern.permute.xlu0 0
    %310 = vperm.xlu0 %309, %v307
    %v311 = vpop.permute.xlu0 %310
    %312 = vset.pattern.permute.xlu0 0
    %313 = vperm.xlu0 %312, %v308
    %v314 = vpop.permute.xlu0 %313
    %vm315 = vcmp.eq.s32.totalorder %v311, 1
    %vm316 = vcmp.eq.s32.totalorder %v314, 1
    %v317 = vlaneseq
    %v318 = vshrl.u32 %v317, 7
    %v319 = vsub.s32 0, %v318
    %v320 = vrot.slane %v305, %v319
    %v321 = vlaneseq
    %v322 = vshrl.u32 %v321, 7
    %v323 = vsub.s32 0, %v322
    %v324 = vrot.slane %v306, %v323
    %v325 = vsel %vm315, %v320, %v324
    %v326 = vsel %vm316, %v320, %v324
    %v327 = vld [vmem:[#allocation13] sm:$0x3]
    %328 = vmatprep.subr.mxu0 0.0
    %329 = vmatpush1.msra.mxu0 %v286
    %330 = vmatprep.subr.mxu0 0.0
    %331 = vmatpush1.msra.mxu0 %v287
    %332 = vmatprep.subr.mxu0 0.0
    %333 = vmatpush1.msra.mxu0 %v288
    %334 = vmatprep.subr.mxu0 0.0
    %335 = vmatpush1.msra.mxu0 %v289
    %336 = vmatprep.subr.mxu0 0.0
    %337 = vmatpush1.msra.mxu0 %v290
    %338 = vmatprep.subr.mxu0 0.0
    %339 = vmatpush1.msra.mxu0 %v291
    %340 = vmatprep.subr.mxu0 0.0
    %341 = vmatpush1.msra.mxu0 %v292
    %342 = vmatprep.subr.mxu0 0.0
    %343 = vmatpush1.msra.mxu0 %v293
    %344 = vmatprep.subr.mxu0 0.0
    %345 = vmatpush1.msra.mxu0 %v294
    %346 = vmatprep.subr.mxu0 0.0
    %347 = vmatpush1.msra.mxu0 %v295
    %348 = vmatprep.subr.mxu0 0.0
    %349 = vmatpush1.msra.mxu0 %v296
    %350 = vmatprep.subr.mxu0 0.0
    %351 = vmatpush1.msra.mxu0 %v297
    %352 = vmatprep.subr.mxu0 0.0
    %353 = vmatpush1.msra.mxu0 %v298
    %354 = vmatprep.subr.mxu0 0.0
    %355 = vmatpush1.msra.mxu0 %v299
    %356 = vmatprep.subr.mxu0 0.0
    %357 = vmatpush1.msra.mxu0 %v300
    %358 = vmatprep.subr.mxu0 0.0
    %359 = vmatpush1.msra.mxu0 %v301
    %360 = vmatprep.subr.mxu0 0.0
    %361 = vmatpush1.msra.mxu0 0.0
    %362 = vmatprep.subr.mxu0 0.0
    %363 = vmatpush1.msra.mxu0 0.0
    %364 = vmatprep.subr.mxu0 0.0
    %365 = vmatpush1.msra.mxu0 0.0
    %366 = vmatprep.subr.mxu0 0.0
    %367 = vmatpush1.msra.mxu0 0.0
    %368 = vmatprep.subr.mxu0 0.0
    %369 = vmatpush1.msra.mxu0 0.0
    %370 = vmatprep.subr.mxu0 0.0
    %371 = vmatpush1.msra.mxu0 0.0
    %372 = vmatprep.subr.mxu0 0.0
    %373 = vmatpush1.msra.mxu0 0.0
    %374 = vmatprep.subr.mxu0 0.0
    %375 = vmatpush1.msra.mxu0 0.0
    %376 = vmatprep.subr.mxu0 0.0
    %377 = vmatpush1.msra.mxu0 0.0
    %378 = vmatprep.subr.mxu0 0.0
    %379 = vmatpush1.msra.mxu0 0.0
    %380 = vmatprep.subr.mxu0 0.0
    %381 = vmatpush1.msra.mxu0 0.0
    %382 = vmatprep.subr.mxu0 0.0
    %383 = vmatpush1.msra.mxu0 0.0
    %384 = vmatprep.subr.mxu0 0.0
    %385 = vmatpush1.msra.mxu0 0.0
    %386 = vmatprep.subr.mxu0 0.0
    %387 = vmatpush1.msra.mxu0 0.0
    %388 = vmatprep.subr.mxu0 0.0
    %389 = vmatpush1.msra.mxu0 0.0
    %390 = vmatprep.subr.mxu0 0.0
    %391 = vmatpush1.msra.mxu0 0.0
    %392 = vmatprep.mubr.f32.mxu0 0.0
    %393 = vmatmul.mubr.f32.gmra.mrb[0].mxu0 %v284
    %v394 = vpop.f32.mrb[0].mxu0
    %v395 = vadd.f32 %v302, %v394
    %v396 = vpop.f32.mrb[0].mxu0
    %397 = vmatprep.mubr.f32.mxu0 0.0
    %398 = vmatmul.mubr.f32.gmra.mrb[0].mxu0 %v285
    %v399 = vpop.f32.mrb[0].mxu0
    %v400 = vadd.f32 %v302, %v399
    %v401 = vpop.f32.mrb[0].mxu0
    %402 = vdwg.mxu0
    %v403 = vadd.f32 %v395, %v325
    %v404 = vadd.f32 %v400, %v326
    %vm405 = vcmask 261120
    %v406 = vsel %vm405, %v403, 0.0
    %407 = vadd.xlane.f32.xlu0 %v406
    %v408 = vpop.xlane.xlu0 %407
    %v409 = vsel %vm405, %v404, 0.0
    %410 = vadd.xlane.f32.xlu0 %v409
    %v411 = vpop.xlane.xlu0 %410
    %v412 = vrcp.pop 32.0
    %v413 = vmul.f32 %v408, %v412
    %v414 = vmul.f32 %v411, %v412
    %v415 = vsub.f32 %v403, %v413
    %v416 = vsub.f32 %v404, %v414
    %v417 = vmul.f32 %v415, %v415
    %v418 = vmul.f32 %v416, %v416
    %v419 = vsel %vm405, %v417, 0.0
    %420 = vadd.xlane.f32.xlu0 %v419
    %v421 = vpop.xlane.xlu0 %420
    %v422 = vsel %vm405, %v418, 0.0
    %423 = vadd.xlane.f32.xlu0 %v422
    %v424 = vpop.xlane.xlu0 %423
    %v425 = vmul.f32 %v421, %v412
    %v426 = vmul.f32 %v424, %v412
    %v427 = vadd.f32 %v425, 1e-12
    %v428 = vadd.f32 %v426, 1e-12
    %v429 = vrsqrt.pop %v427
    %v430 = vrsqrt.pop %v428
    %v431 = vmul.f32 %v415, %v429
    %v432 = vmul.f32 %v416, %v430
    %v433 = vlaneseq
    %v434 = vshrl.u32 %v433, 7
    %v435 = vsub.s32 0, %v434
    %v436 = vrot.slane %v327, %v435
    %v437 = vmul.f32 %v431, %v436
    %v438 = vmul.f32 %v432, %v436
    %v439 = vlaneseq
    %v440 = vshrl.u32 %v439, 7
    %v441 = vsub.s32 1, %v440
    %v442 = vrot.slane %v327, %v441
    %v443 = vadd.f32 %v437, %v442
    %v444 = vadd.f32 %v438, %v442
    %v446 = vrot.slane %v443, 4
    %447 = vrot.lane.b32.xlu0 %v446, 32
    %v448 = vpop.permute.xlu0 %447
    %451 = vrot.lane.b32.xlu0 %v444, 64
    %v452 = vpop.permute.xlu0 %451
    %v454 = vrot.slane %v444, 4
    %455 = vrot.lane.b32.xlu0 %v454, 96
    %v456 = vpop.permute.xlu0 %455
    %v458 = vsel %vm405, %v443, %v448
    %vm459 = vcmask 523264
    %v460 = vsel %vm459, %v458, %v452
    %vm461 = vcmask 785408
    %v462 = vsel %vm461, %v460, %v456
    %463 = vst [vmem:[#allocation28] sm:$0xf] %v462
    %v464 = vld [vmem:[#allocation7] sm:$0x3]
    %v467 = vunpack.c.l.s4 1966171168
    %v468 = vunpack.c.0.s8 %v467
    %v469 = vlaneseq
    %v470 = vshrl.u32 %v469, 7
    %v471 = vsub.s32 %v468, %v470
    %v472 = vrot.slane %v464, %v471
    %v473 = vcombine.high %v472, %v472
    %v475 = vunpack.c.l.s4 1966171168
    %v476 = vunpack.c.0.s8 %v475
    %v477 = vlaneseq
    %v478 = vshrl.u32 %v477, 7
    %v479 = vsub.s32 %v476, %v478
    %v480 = vrot.slane %v472, %v479
    %v482 = vunpack.c.l.s4 1966171168
    %v483 = vunpack.c.0.s8 %v482
    %v484 = vlaneseq
    %v485 = vshrl.u32 %v484, 7
    %v486 = vsub.s32 %v483, %v485
    %v487 = vrot.slane %v473, %v486
    %v490 = vsub.f32 %v480, 1.0
    %v491 = vsub.f32 %v487, 1.0
    %v492 = vmul.f32 %v490, 1e+09
    %v493 = vmul.f32 %v491, 1e+09
    %v494 = vld [vmem:[#allocation14] sm:$0xff]
    %v495 = vld [vmem:[#allocation14 + $0x8] sm:$0xff]
    %v496 = vld [vmem:[#allocation14 + $0x10] sm:$0xff]
    %v497 = vld [vmem:[#allocation14 + $0x18] sm:$0xff]
    %v498 = vld [vmem:[#allocation16] sm:$0x1]
    %v499 = vld [vmem:[#allocation17] sm:$0xff]
    %v500 = vld [vmem:[#allocation17 + $0x8] sm:$0xff]
    %v501 = vld [vmem:[#allocation17 + $0x10] sm:$0xff]
    %v502 = vld [vmem:[#allocation17 + $0x18] sm:$0xff]
    %v503 = vld [vmem:[#allocation19] sm:$0xff]
    %v504 = vld [vmem:[#allocation19 + $0x8] sm:$0xff]
    %v505 = vld [vmem:[#allocation19 + $0x10] sm:$0xff]
    %v506 = vld [vmem:[#allocation19 + $0x18] sm:$0xff]
    %v507 = vld [vmem:[#allocation20] sm:$0x1]
    %v508 = vld [vmem:[#allocation22] sm:$0xff]
    %v509 = vld [vmem:[#allocation22 + $0x8] sm:$0xff]
    %v510 = vld [vmem:[#allocation22 + $0x10] sm:$0xff]
    %v511 = vld [vmem:[#allocation22 + $0x18] sm:$0xff]
    %v512 = vld [vmem:[#allocation22 + $0x20] sm:$0xff]
    %v513 = vld [vmem:[#allocation22 + $0x28] sm:$0xff]
    %v514 = vld [vmem:[#allocation22 + $0x30] sm:$0xff]
    %v515 = vld [vmem:[#allocation22 + $0x38] sm:$0xff]
    %v516 = vld [vmem:[#allocation23] sm:$0x3f]
    %v518 = vlaneseq
    %v519 = vshrl.u32 %v518, 7
    %v520 = vsub.s32 0, %v519
    %v521 = vrot.slane %v498, %v520
    %v523 = vsel %vm405, %v443, 0
    %v525 = vsel %vm405, %v444, 0
    %527 = vmatprep.subr.mxu0 0.0
    %528 = vmatpush1.msra.mxu0 %v494
    %529 = vmatprep.subr.mxu0 0.0
    %530 = vmatpush1.msra.mxu0 %v495
    %531 = vmatprep.subr.mxu0 0.0
    %532 = vmatpush1.msra.mxu0 %v496
    %533 = vmatprep.subr.mxu0 0.0
    %534 = vmatpush1.msra.mxu0 %v497
    %535 = vmatprep.subr.mxu0 0.0
    %536 = vmatpush1.msra.mxu0 0.0
    %537 = vmatprep.subr.mxu0 0.0
    %538 = vmatpush1.msra.mxu0 0.0
    %539 = vmatprep.subr.mxu0 0.0
    %540 = vmatpush1.msra.mxu0 0.0
    %541 = vmatprep.subr.mxu0 0.0
    %542 = vmatpush1.msra.mxu0 0.0
    %543 = vmatprep.subr.mxu0 0.0
    %544 = vmatpush1.msra.mxu0 0.0
    %545 = vmatprep.subr.mxu0 0.0
    %546 = vmatpush1.msra.mxu0 0.0
    %547 = vmatprep.subr.mxu0 0.0
    %548 = vmatpush1.msra.mxu0 0.0
    %549 = vmatprep.subr.mxu0 0.0
    %550 = vmatpush1.msra.mxu0 0.0
    %551 = vmatprep.subr.mxu0 0.0
    %552 = vmatpush1.msra.mxu0 0.0
    %553 = vmatprep.subr.mxu0 0.0
    %554 = vmatpush1.msra.mxu0 0.0
    %555 = vmatprep.subr.mxu0 0.0
    %556 = vmatpush1.msra.mxu0 0.0
    %557 = vmatprep.subr.mxu0 0.0
    %558 = vmatpush1.msra.mxu0 0.0
    %559 = vmatprep.subr.mxu0 0.0
    %560 = vmatpush1.msra.mxu0 0.0
    %561 = vmatprep.subr.mxu0 0.0
    %562 = vmatpush1.msra.mxu0 0.0
    %563 = vmatprep.subr.mxu0 0.0
    %564 = vmatpush1.msra.mxu0 0.0
    %565 = vmatprep.subr.mxu0 0.0
    %566 = vmatpush1.msra.mxu0 0.0
    %567 = vmatprep.subr.mxu0 0.0
    %568 = vmatpush1.msra.mxu0 0.0
    %569 = vmatprep.subr.mxu0 0.0
    %570 = vmatpush1.msra.mxu0 0.0
    %571 = vmatprep.subr.mxu0 0.0
    %572 = vmatpush1.msra.mxu0 0.0
    %573 = vmatprep.subr.mxu0 0.0
    %574 = vmatpush1.msra.mxu0 0.0
    %575 = vmatprep.subr.mxu0 0.0
    %576 = vmatpush1.msra.mxu0 0.0
    %577 = vmatprep.subr.mxu0 0.0
    %578 = vmatpush1.msra.mxu0 0.0
    %579 = vmatprep.subr.mxu0 0.0
    %580 = vmatpush1.msra.mxu0 0.0
    %581 = vmatprep.subr.mxu0 0.0
    %582 = vmatpush1.msra.mxu0 0.0
    %583 = vmatprep.subr.mxu0 0.0
    %584 = vmatpush1.msra.mxu0 0.0
    %585 = vmatprep.subr.mxu0 0.0
    %586 = vmatpush1.msra.mxu0 0.0
    %587 = vmatprep.subr.mxu0 0.0
    %588 = vmatpush1.msra.mxu0 0.0
    %589 = vmatprep.subr.mxu0 0.0
    %590 = vmatpush1.msra.mxu0 0.0
    %591 = vmatprep.mubr.f32.mxu0 0.0
    %592 = vmatmul.mubr.f32.gmra.mrb[0].mxu0 %v523
    %v593 = vpop.f32.mrb[0].mxu0
    %v594 = vadd.f32 %v521, %v593
    %v595 = vpop.f32.mrb[0].mxu0
    %596 = vmatprep.mubr.f32.mxu0 0.0
    %597 = vmatmul.mubr.f32.gmra.mrb[0].mxu0 %v525
    %v598 = vpop.f32.mrb[0].mxu0
    %v599 = vadd.f32 %v521, %v598
    %v600 = vpop.f32.mrb[0].mxu0
    %601 = vdwg.mxu0
    %v602 = vmul.f32 %v594, 0.25
    %v603 = vmul.f32 %v599, 0.25
    %606 = vrot.lane.b32.xlu0 %v602, 112
    %v607 = vpop.permute.xlu0 %606
    %608 = vrot.lane.b32.xlu0 %v603, 112
    %v609 = vpop.permute.xlu0 %608
    %612 = vrot.lane.b32.xlu0 %v594, 112
    %v613 = vpop.permute.xlu0 %612
    %614 = vrot.lane.b32.xlu0 %v599, 112
    %v615 = vpop.permute.xlu0 %614
    %v618 = vlaneseq
    %v619 = vshrl.u32 %v618, 7
    %v620 = vsub.s32 0, %v619
    %v621 = vrot.slane %v492, %v620
    %v622 = vlaneseq
    %v623 = vshrl.u32 %v622, 7
    %v624 = vsub.s32 0, %v623
    %v625 = vrot.slane %v493, %v624
    %628 = vrot.lane.b32.xlu0 %v594, 96
    %v629 = vpop.permute.xlu0 %628
    %vm630 = vcmask 130048
    %v631 = vsel %vm630, %v602, 0
    %v633 = vsel %vm630, %v629, 0
    %635 = vmatprep.subr.mxu0 0.0
    %636 = vmatpush1.xpose.msra.mxu0 %v633
    %637 = vmatprep.subr.mxu0 0.0
    %638 = vmatpush1.xpose.msra.mxu0 0.0
    %639 = vmatprep.subr.mxu0 0.0
    %640 = vmatpush1.xpose.msra.mxu0 0.0
    %641 = vmatprep.subr.mxu0 0.0
    %642 = vmatpush1.xpose.msra.mxu0 0.0
    %643 = vmatprep.subr.mxu0 0.0
    %644 = vmatpush1.xpose.msra.mxu0 0.0
    %645 = vmatprep.subr.mxu0 0.0
    %646 = vmatpush1.xpose.msra.mxu0 0.0
    %647 = vmatprep.subr.mxu0 0.0
    %648 = vmatpush1.xpose.msra.mxu0 0.0
    %649 = vmatprep.subr.mxu0 0.0
    %650 = vmatpush1.xpose.msra.mxu0 0.0
    %651 = vmatprep.subr.mxu0 0.0
    %652 = vmatpush1.xpose.msra.mxu0 0.0
    %653 = vmatprep.subr.mxu0 0.0
    %654 = vmatpush1.xpose.msra.mxu0 0.0
    %655 = vmatprep.subr.mxu0 0.0
    %656 = vmatpush1.xpose.msra.mxu0 0.0
    %657 = vmatprep.subr.mxu0 0.0
    %658 = vmatpush1.xpose.msra.mxu0 0.0
    %659 = vmatprep.subr.mxu0 0.0
    %660 = vmatpush1.xpose.msra.mxu0 0.0
    %661 = vmatprep.subr.mxu0 0.0
    %662 = vmatpush1.xpose.msra.mxu0 0.0
    %663 = vmatprep.subr.mxu0 0.0
    %664 = vmatpush1.xpose.msra.mxu0 0.0
    %665 = vmatprep.subr.mxu0 0.0
    %666 = vmatpush1.xpose.msra.mxu0 0.0
    %667 = vmatprep.subr.mxu0 0.0
    %668 = vmatpush1.xpose.msra.mxu0 0.0
    %669 = vmatprep.subr.mxu0 0.0
    %670 = vmatpush1.xpose.msra.mxu0 0.0
    %671 = vmatprep.subr.mxu0 0.0
    %672 = vmatpush1.xpose.msra.mxu0 0.0
    %673 = vmatprep.subr.mxu0 0.0
    %674 = vmatpush1.xpose.msra.mxu0 0.0
    %675 = vmatprep.subr.mxu0 0.0
    %676 = vmatpush1.xpose.msra.mxu0 0.0
    %677 = vmatprep.subr.mxu0 0.0
    %678 = vmatpush1.xpose.msra.mxu0 0.0
    %679 = vmatprep.subr.mxu0 0.0
    %680 = vmatpush1.xpose.msra.mxu0 0.0
    %681 = vmatprep.subr.mxu0 0.0
    %682 = vmatpush1.xpose.msra.mxu0 0.0
    %683 = vmatprep.subr.mxu0 0.0
    %684 = vmatpush1.xpose.msra.mxu0 0.0
    %685 = vmatprep.subr.mxu0 0.0
    %686 = vmatpush1.xpose.msra.mxu0 0.0
    %687 = vmatprep.subr.mxu0 0.0
    %688 = vmatpush1.xpose.msra.mxu0 0.0
    %689 = vmatprep.subr.mxu0 0.0
    %690 = vmatpush1.xpose.msra.mxu0 0.0
    %691 = vmatprep.subr.mxu0 0.0
    %692 = vmatpush1.xpose.msra.mxu0 0.0
    %693 = vmatprep.subr.mxu0 0.0
    %694 = vmatpush1.xpose.msra.mxu0 0.0
    %695 = vmatprep.subr.mxu0 0.0
    %696 = vmatpush1.xpose.msra.mxu0 0.0
    %697 = vmatprep.subr.mxu0 0.0
    %698 = vmatpush1.xpose.msra.mxu0 0.0
    %699 = vmatprep.mubr.f32.mxu0 0.0
    %700 = vmatmul.mubr.f32.gmra.mrb[0].mxu0 %v631
    %v701 = vpop.f32.mrb[0].mxu0
    %v702 = vadd.f32 %v621, %v701
    %v703 = vpop.f32.mrb[0].mxu0
    %704 = vdwg.mxu0
    %705 = vrot.lane.b32.xlu0 %v599, 96
    %v706 = vpop.permute.xlu0 %705
    %v707 = vsel %vm630, %v603, 0
    %v709 = vsel %vm630, %v706, 0
    %711 = vmatprep.subr.mxu0 0.0
    %712 = vmatpush1.xpose.msra.mxu0 %v709
    %713 = vmatprep.subr.mxu0 0.0
    %714 = vmatpush1.xpose.msra.mxu0 0.0
    %715 = vmatprep.subr.mxu0 0.0
    %716 = vmatpush1.xpose.msra.mxu0 0.0
    %717 = vmatprep.subr.mxu0 0.0
    %718 = vmatpush1.xpose.msra.mxu0 0.0
    %719 = vmatprep.subr.mxu0 0.0
    %720 = vmatpush1.xpose.msra.mxu0 0.0
    %721 = vmatprep.subr.mxu0 0.0
    %722 = vmatpush1.xpose.msra.mxu0 0.0
    %723 = vmatprep.subr.mxu0 0.0
    %724 = vmatpush1.xpose.msra.mxu0 0.0
    %725 = vmatprep.subr.mxu0 0.0
    %726 = vmatpush1.xpose.msra.mxu0 0.0
    %727 = vmatprep.subr.mxu0 0.0
    %728 = vmatpush1.xpose.msra.mxu0 0.0
    %729 = vmatprep.subr.mxu0 0.0
    %730 = vmatpush1.xpose.msra.mxu0 0.0
    %731 = vmatprep.subr.mxu0 0.0
    %732 = vmatpush1.xpose.msra.mxu0 0.0
    %733 = vmatprep.subr.mxu0 0.0
    %734 = vmatpush1.xpose.msra.mxu0 0.0
    %735 = vmatprep.subr.mxu0 0.0
    %736 = vmatpush1.xpose.msra.mxu0 0.0
    %737 = vmatprep.subr.mxu0 0.0
    %738 = vmatpush1.xpose.msra.mxu0 0.0
    %739 = vmatprep.subr.mxu0 0.0
    %740 = vmatpush1.xpose.msra.mxu0 0.0
    %741 = vmatprep.subr.mxu0 0.0
    %742 = vmatpush1.xpose.msra.mxu0 0.0
    %743 = vmatprep.subr.mxu0 0.0
    %744 = vmatpush1.xpose.msra.mxu0 0.0
    %745 = vmatprep.subr.mxu0 0.0
    %746 = vmatpush1.xpose.msra.mxu0 0.0
    %747 = vmatprep.subr.mxu0 0.0
    %748 = vmatpush1.xpose.msra.mxu0 0.0
    %749 = vmatprep.subr.mxu0 0.0
    %750 = vmatpush1.xpose.msra.mxu0 0.0
    %751 = vmatprep.subr.mxu0 0.0
    %752 = vmatpush1.xpose.msra.mxu0 0.0
    %753 = vmatprep.subr.mxu0 0.0
    %754 = vmatpush1.xpose.msra.mxu0 0.0
    %755 = vmatprep.subr.mxu0 0.0
    %756 = vmatpush1.xpose.msra.mxu0 0.0
    %757 = vmatprep.subr.mxu0 0.0
    %758 = vmatpush1.xpose.msra.mxu0 0.0
    %759 = vmatprep.subr.mxu0 0.0
    %760 = vmatpush1.xpose.msra.mxu0 0.0
    %761 = vmatprep.subr.mxu0 0.0
    %762 = vmatpush1.xpose.msra.mxu0 0.0
    %763 = vmatprep.subr.mxu0 0.0
    %764 = vmatpush1.xpose.msra.mxu0 0.0
    %765 = vmatprep.subr.mxu0 0.0
    %766 = vmatpush1.xpose.msra.mxu0 0.0
    %767 = vmatprep.subr.mxu0 0.0
    %768 = vmatpush1.xpose.msra.mxu0 0.0
    %769 = vmatprep.subr.mxu0 0.0
    %770 = vmatpush1.xpose.msra.mxu0 0.0
    %771 = vmatprep.subr.mxu0 0.0
    %772 = vmatpush1.xpose.msra.mxu0 0.0
    %773 = vmatprep.subr.mxu0 0.0
    %774 = vmatpush1.xpose.msra.mxu0 0.0
    %775 = vmatprep.mubr.f32.mxu0 0.0
    %776 = vmatmul.mubr.f32.gmra.mrb[0].mxu0 %v707
    %v777 = vpop.f32.mrb[0].mxu0
    %v778 = vadd.f32 %v625, %v777
    %v779 = vpop.f32.mrb[0].mxu0
    %780 = vdwg.mxu0
    %781 = vrot.lane.b32.xlu0 %v613, 96
    %v782 = vpop.permute.xlu0 %781
    %v783 = vsel %vm630, %v607, 0
    %v785 = vsel %vm630, %v782, 0
    %787 = vmatprep.subr.mxu0 0.0
    %788 = vmatpush1.xpose.msra.mxu0 %v785
    %789 = vmatprep.subr.mxu0 0.0
    %790 = vmatpush1.xpose.msra.mxu0 0.0
    %791 = vmatprep.subr.mxu0 0.0
    %792 = vmatpush1.xpose.msra.mxu0 0.0
    %793 = vmatprep.subr.mxu0 0.0
    %794 = vmatpush1.xpose.msra.mxu0 0.0
    %795 = vmatprep.subr.mxu0 0.0
    %796 = vmatpush1.xpose.msra.mxu0 0.0
    %797 = vmatprep.subr.mxu0 0.0
    %798 = vmatpush1.xpose.msra.mxu0 0.0
    %799 = vmatprep.subr.mxu0 0.0
    %800 = vmatpush1.xpose.msra.mxu0 0.0
    %801 = vmatprep.subr.mxu0 0.0
    %802 = vmatpush1.xpose.msra.mxu0 0.0
    %803 = vmatprep.subr.mxu0 0.0
    %804 = vmatpush1.xpose.msra.mxu0 0.0
    %805 = vmatprep.subr.mxu0 0.0
    %806 = vmatpush1.xpose.msra.mxu0 0.0
    %807 = vmatprep.subr.mxu0 0.0
    %808 = vmatpush1.xpose.msra.mxu0 0.0
    %809 = vmatprep.subr.mxu0 0.0
    %810 = vmatpush1.xpose.msra.mxu0 0.0
    %811 = vmatprep.subr.mxu0 0.0
    %812 = vmatpush1.xpose.msra.mxu0 0.0
    %813 = vmatprep.subr.mxu0 0.0
    %814 = vmatpush1.xpose.msra.mxu0 0.0
    %815 = vmatprep.subr.mxu0 0.0
    %816 = vmatpush1.xpose.msra.mxu0 0.0
    %817 = vmatprep.subr.mxu0 0.0
    %818 = vmatpush1.xpose.msra.mxu0 0.0
    %819 = vmatprep.subr.mxu0 0.0
    %820 = vmatpush1.xpose.msra.mxu0 0.0
    %821 = vmatprep.subr.mxu0 0.0
    %822 = vmatpush1.xpose.msra.mxu0 0.0
    %823 = vmatprep.subr.mxu0 0.0
    %824 = vmatpush1.xpose.msra.mxu0 0.0
    %825 = vmatprep.subr.mxu0 0.0
    %826 = vmatpush1.xpose.msra.mxu0 0.0
    %827 = vmatprep.subr.mxu0 0.0
    %828 = vmatpush1.xpose.msra.mxu0 0.0
    %829 = vmatprep.subr.mxu0 0.0
    %830 = vmatpush1.xpose.msra.mxu0 0.0
    %831 = vmatprep.subr.mxu0 0.0
    %832 = vmatpush1.xpose.msra.mxu0 0.0
    %833 = vmatprep.subr.mxu0 0.0
    %834 = vmatpush1.xpose.msra.mxu0 0.0
    %835 = vmatprep.subr.mxu0 0.0
    %836 = vmatpush1.xpose.msra.mxu0 0.0
    %837 = vmatprep.subr.mxu0 0.0
    %838 = vmatpush1.xpose.msra.mxu0 0.0
    %839 = vmatprep.subr.mxu0 0.0
    %840 = vmatpush1.xpose.msra.mxu0 0.0
    %841 = vmatprep.subr.mxu0 0.0
    %842 = vmatpush1.xpose.msra.mxu0 0.0
    %843 = vmatprep.subr.mxu0 0.0
    %844 = vmatpush1.xpose.msra.mxu0 0.0
    %845 = vmatprep.subr.mxu0 0.0
    %846 = vmatpush1.xpose.msra.mxu0 0.0
    %847 = vmatprep.subr.mxu0 0.0
    %848 = vmatpush1.xpose.msra.mxu0 0.0
    %849 = vmatprep.subr.mxu0 0.0
    %850 = vmatpush1.xpose.msra.mxu0 0.0
    %851 = vmatprep.mubr.f32.mxu0 0.0
    %852 = vmatmul.mubr.f32.gmra.mrb[0].mxu0 %v783
    %v853 = vpop.f32.mrb[0].mxu0
    %v854 = vadd.f32 %v621, %v853
    %v855 = vpop.f32.mrb[0].mxu0
    %856 = vdwg.mxu0
    %857 = vrot.lane.b32.xlu0 %v615, 96
    %v858 = vpop.permute.xlu0 %857
    %v859 = vsel %vm630, %v609, 0
    %v861 = vsel %vm630, %v858, 0
    %863 = vmatprep.subr.mxu0 0.0
    %864 = vmatpush1.xpose.msra.mxu0 %v861
    %865 = vmatprep.subr.mxu0 0.0
    %866 = vmatpush1.xpose.msra.mxu0 0.0
    %867 = vmatprep.subr.mxu0 0.0
    %868 = vmatpush1.xpose.msra.mxu0 0.0
    %869 = vmatprep.subr.mxu0 0.0
    %870 = vmatpush1.xpose.msra.mxu0 0.0
    %871 = vmatprep.subr.mxu0 0.0
    %872 = vmatpush1.xpose.msra.mxu0 0.0
    %873 = vmatprep.subr.mxu0 0.0
    %874 = vmatpush1.xpose.msra.mxu0 0.0
    %875 = vmatprep.subr.mxu0 0.0
    %876 = vmatpush1.xpose.msra.mxu0 0.0
    %877 = vmatprep.subr.mxu0 0.0
    %878 = vmatpush1.xpose.msra.mxu0 0.0
    %879 = vmatprep.subr.mxu0 0.0
    %880 = vmatpush1.xpose.msra.mxu0 0.0
    %881 = vmatprep.subr.mxu0 0.0
    %882 = vmatpush1.xpose.msra.mxu0 0.0
    %883 = vmatprep.subr.mxu0 0.0
    %884 = vmatpush1.xpose.msra.mxu0 0.0
    %885 = vmatprep.subr.mxu0 0.0
    %886 = vmatpush1.xpose.msra.mxu0 0.0
    %887 = vmatprep.subr.mxu0 0.0
    %888 = vmatpush1.xpose.msra.mxu0 0.0
    %889 = vmatprep.subr.mxu0 0.0
    %890 = vmatpush1.xpose.msra.mxu0 0.0
    %891 = vmatprep.subr.mxu0 0.0
    %892 = vmatpush1.xpose.msra.mxu0 0.0
    %893 = vmatprep.subr.mxu0 0.0
    %894 = vmatpush1.xpose.msra.mxu0 0.0
    %895 = vmatprep.subr.mxu0 0.0
    %896 = vmatpush1.xpose.msra.mxu0 0.0
    %897 = vmatprep.subr.mxu0 0.0
    %898 = vmatpush1.xpose.msra.mxu0 0.0
    %899 = vmatprep.subr.mxu0 0.0
    %900 = vmatpush1.xpose.msra.mxu0 0.0
    %901 = vmatprep.subr.mxu0 0.0
    %902 = vmatpush1.xpose.msra.mxu0 0.0
    %903 = vmatprep.subr.mxu0 0.0
    %904 = vmatpush1.xpose.msra.mxu0 0.0
    %905 = vmatprep.subr.mxu0 0.0
    %906 = vmatpush1.xpose.msra.mxu0 0.0
    %907 = vmatprep.subr.mxu0 0.0
    %908 = vmatpush1.xpose.msra.mxu0 0.0
    %909 = vmatprep.subr.mxu0 0.0
    %910 = vmatpush1.xpose.msra.mxu0 0.0
    %911 = vmatprep.subr.mxu0 0.0
    %912 = vmatpush1.xpose.msra.mxu0 0.0
    %913 = vmatprep.subr.mxu0 0.0
    %914 = vmatpush1.xpose.msra.mxu0 0.0
    %915 = vmatprep.subr.mxu0 0.0
    %916 = vmatpush1.xpose.msra.mxu0 0.0
    %917 = vmatprep.subr.mxu0 0.0
    %918 = vmatpush1.xpose.msra.mxu0 0.0
    %919 = vmatprep.subr.mxu0 0.0
    %920 = vmatpush1.xpose.msra.mxu0 0.0
    %921 = vmatprep.subr.mxu0 0.0
    %922 = vmatpush1.xpose.msra.mxu0 0.0
    %923 = vmatprep.subr.mxu0 0.0
    %924 = vmatpush1.xpose.msra.mxu0 0.0
    %925 = vmatprep.subr.mxu0 0.0
    %926 = vmatpush1.xpose.msra.mxu0 0.0
    %927 = vmatprep.mubr.f32.mxu0 0.0
    %928 = vmatmul.mubr.f32.gmra.mrb[0].mxu0 %v859
    %v929 = vpop.f32.mrb[0].mxu0
    %v930 = vadd.f32 %v625, %v929
    %v931 = vpop.f32.mrb[0].mxu0
    %932 = vdwg.mxu0
    %vm933 = vcmask 64512
    %v934 = vsel %vm933, %v702, -inf
    %935 = vmax.xlane.f32.xlu0 %v934
    %v936 = vpop.xlane.xlu0 %935
    %v937 = vsel %vm933, %v778, -inf
    %938 = vmax.xlane.f32.xlu0 %v937
    %v939 = vpop.xlane.xlu0 %938
    %v940 = vsel %vm933, %v854, -inf
    %941 = vmax.xlane.f32.xlu0 %v940
    %v942 = vpop.xlane.xlu0 %941
    %v943 = vsel %vm933, %v930, -inf
    %944 = vmax.xlane.f32.xlu0 %v943
    %v945 = vpop.xlane.xlu0 %944
    %v946 = vsub.f32 %v702, %v936
    %v947 = vsub.f32 %v778, %v939
    %v948 = vsub.f32 %v854, %v942
    %v949 = vsub.f32 %v930, %v945
    %v950 = vmul.f32 %v946, 1.442695
    %v951 = vpow.pop %v950
    %v952 = vmul.f32 %v947, 1.442695
    %v953 = vpow.pop %v952
    %v954 = vmul.f32 %v948, 1.442695
    %v955 = vpow.pop %v954
    %v956 = vmul.f32 %v949, 1.442695
    %v957 = vpow.pop %v956
    %v958 = vsel %vm933, %v951, 0.0
    %959 = vadd.xlane.f32.xlu0 %v958
    %v960 = vpop.xlane.xlu0 %959
    %v961 = vsel %vm933, %v953, 0.0
    %962 = vadd.xlane.f32.xlu0 %v961
    %v963 = vpop.xlane.xlu0 %962
    %v964 = vsel %vm933, %v955, 0.0
    %965 = vadd.xlane.f32.xlu0 %v964
    %v966 = vpop.xlane.xlu0 %965
    %v967 = vsel %vm933, %v957, 0.0
    %968 = vadd.xlane.f32.xlu0 %v967
    %v969 = vpop.xlane.xlu0 %968
    %v970 = vrcp.pop %v960
    %v971 = vrcp.pop %v963
    %v972 = vrcp.pop %v966
    %v973 = vrcp.pop %v969
    %v974 = vmul.f32 %v951, %v970
    %v975 = vmul.f32 %v953, %v971
    %v976 = vmul.f32 %v955, %v972
    %v977 = vmul.f32 %v957, %v973
    %978 = vrot.lane.b32.xlu0 %v594, 64
    %v979 = vpop.permute.xlu0 %978
    %v982 = vsel %vm933, %v974, 0
    %984 = vmatprep.subr.mxu0 0.0
    %985 = vmatpush1.msra.mxu0 %v979
    %986 = vmatprep.subr.mxu0 0.0
    %987 = vmatpush1.msra.mxu0 0.0
    %988 = vmatprep.subr.mxu0 0.0
    %989 = vmatpush1.msra.mxu0 0.0
    %990 = vmatprep.subr.mxu0 0.0
    %991 = vmatpush1.msra.mxu0 0.0
    %992 = vmatprep.subr.mxu0 0.0
    %993 = vmatpush1.msra.mxu0 0.0
    %994 = vmatprep.subr.mxu0 0.0
    %995 = vmatpush1.msra.mxu0 0.0
    %996 = vmatprep.subr.mxu0 0.0
    %997 = vmatpush1.msra.mxu0 0.0
    %998 = vmatprep.subr.mxu0 0.0
    %999 = vmatpush1.msra.mxu0 0.0
    %1000 = vmatprep.subr.mxu0 0.0
    %1001 = vmatpush1.msra.mxu0 0.0
    %1002 = vmatprep.subr.mxu0 0.0
    %1003 = vmatpush1.msra.mxu0 0.0
    %1004 = vmatprep.subr.mxu0 0.0
    %1005 = vmatpush1.msra.mxu0 0.0
    %1006 = vmatprep.subr.mxu0 0.0
    %1007 = vmatpush1.msra.mxu0 0.0
    %1008 = vmatprep.subr.mxu0 0.0
    %1009 = vmatpush1.msra.mxu0 0.0
    %1010 = vmatprep.subr.mxu0 0.0
    %1011 = vmatpush1.msra.mxu0 0.0
    %1012 = vmatprep.subr.mxu0 0.0
    %1013 = vmatpush1.msra.mxu0 0.0
    %1014 = vmatprep.subr.mxu0 0.0
    %1015 = vmatpush1.msra.mxu0 0.0
    %1016 = vmatprep.subr.mxu0 0.0
    %1017 = vmatpush1.msra.mxu0 0.0
    %1018 = vmatprep.subr.mxu0 0.0
    %1019 = vmatpush1.msra.mxu0 0.0
    %1020 = vmatprep.subr.mxu0 0.0
    %1021 = vmatpush1.msra.mxu0 0.0
    %1022 = vmatprep.subr.mxu0 0.0
    %1023 = vmatpush1.msra.mxu0 0.0
    %1024 = vmatprep.subr.mxu0 0.0
    %1025 = vmatpush1.msra.mxu0 0.0
    %1026 = vmatprep.subr.mxu0 0.0
    %1027 = vmatpush1.msra.mxu0 0.0
    %1028 = vmatprep.subr.mxu0 0.0
    %1029 = vmatpush1.msra.mxu0 0.0
    %1030 = vmatprep.subr.mxu0 0.0
    %1031 = vmatpush1.msra.mxu0 0.0
    %1032 = vmatprep.subr.mxu0 0.0
    %1033 = vmatpush1.msra.mxu0 0.0
    %1034 = vmatprep.subr.mxu0 0.0
    %1035 = vmatpush1.msra.mxu0 0.0
    %1036 = vmatprep.subr.mxu0 0.0
    %1037 = vmatpush1.msra.mxu0 0.0
    %1038 = vmatprep.subr.mxu0 0.0
    %1039 = vmatpush1.msra.mxu0 0.0
    %1040 = vmatprep.subr.mxu0 0.0
    %1041 = vmatpush1.msra.mxu0 0.0
    %1042 = vmatprep.subr.mxu0 0.0
    %1043 = vmatpush1.msra.mxu0 0.0
    %1044 = vmatprep.subr.mxu0 0.0
    %1045 = vmatpush1.msra.mxu0 0.0
    %1046 = vmatprep.subr.mxu0 0.0
    %1047 = vmatpush1.msra.mxu0 0.0
    %1048 = vmatprep.mubr.f32.mxu0 0.0
    %1049 = vmatmul.mubr.f32.gmra.mrb[0].mxu0 %v982
    %v1050 = vpop.f32.mrb[0].mxu0
    %v1051 = vadd.f32 0.0, %v1050
    %v1052 = vpop.f32.mrb[0].mxu0
    %1053 = vdwg.mxu0
    %1054 = vrot.lane.b32.xlu0 %v599, 64
    %v1055 = vpop.permute.xlu0 %1054
    %v1058 = vsel %vm933, %v975, 0
    %1060 = vmatprep.subr.mxu0 0.0
    %1061 = vmatpush1.msra.mxu0 %v1055
    %1062 = vmatprep.subr.mxu0 0.0
    %1063 = vmatpush1.msra.mxu0 0.0
    %1064 = vmatprep.subr.mxu0 0.0
    %1065 = vmatpush1.msra.mxu0 0.0
    %1066 = vmatprep.subr.mxu0 0.0
    %1067 = vmatpush1.msra.mxu0 0.0
    %1068 = vmatprep.subr.mxu0 0.0
    %1069 = vmatpush1.msra.mxu0 0.0
    %1070 = vmatprep.subr.mxu0 0.0
    %1071 = vmatpush1.msra.mxu0 0.0
    %1072 = vmatprep.subr.mxu0 0.0
    %1073 = vmatpush1.msra.mxu0 0.0
    %1074 = vmatprep.subr.mxu0 0.0
    %1075 = vmatpush1.msra.mxu0 0.0
    %1076 = vmatprep.subr.mxu0 0.0
    %1077 = vmatpush1.msra.mxu0 0.0
    %1078 = vmatprep.subr.mxu0 0.0
    %1079 = vmatpush1.msra.mxu0 0.0
    %1080 = vmatprep.subr.mxu0 0.0
    %1081 = vmatpush1.msra.mxu0 0.0
    %1082 = vmatprep.subr.mxu0 0.0
    %1083 = vmatpush1.msra.mxu0 0.0
    %1084 = vmatprep.subr.mxu0 0.0
    %1085 = vmatpush1.msra.mxu0 0.0
    %1086 = vmatprep.subr.mxu0 0.0
    %1087 = vmatpush1.msra.mxu0 0.0
    %1088 = vmatprep.subr.mxu0 0.0
    %1089 = vmatpush1.msra.mxu0 0.0
    %1090 = vmatprep.subr.mxu0 0.0
    %1091 = vmatpush1.msra.mxu0 0.0
    %1092 = vmatprep.subr.mxu0 0.0
    %1093 = vmatpush1.msra.mxu0 0.0
    %1094 = vmatprep.subr.mxu0 0.0
    %1095 = vmatpush1.msra.mxu0 0.0
    %1096 = vmatprep.subr.mxu0 0.0
    %1097 = vmatpush1.msra.mxu0 0.0
    %1098 = vmatprep.subr.mxu0 0.0
    %1099 = vmatpush1.msra.mxu0 0.0
    %1100 = vmatprep.subr.mxu0 0.0
    %1101 = vmatpush1.msra.mxu0 0.0
    %1102 = vmatprep.subr.mxu0 0.0
    %1103 = vmatpush1.msra.mxu0 0.0
    %1104 = vmatprep.subr.mxu0 0.0
    %1105 = vmatpush1.msra.mxu0 0.0
    %1106 = vmatprep.subr.mxu0 0.0
    %1107 = vmatpush1.msra.mxu0 0.0
    %1108 = vmatprep.subr.mxu0 0.0
    %1109 = vmatpush1.msra.mxu0 0.0
    %1110 = vmatprep.subr.mxu0 0.0
    %1111 = vmatpush1.msra.mxu0 0.0
    %1112 = vmatprep.subr.mxu0 0.0
    %1113 = vmatpush1.msra.mxu0 0.0
    %1114 = vmatprep.subr.mxu0 0.0
    %1115 = vmatpush1.msra.mxu0 0.0
    %1116 = vmatprep.subr.mxu0 0.0
    %1117 = vmatpush1.msra.mxu0 0.0
    %1118 = vmatprep.subr.mxu0 0.0
    %1119 = vmatpush1.msra.mxu0 0.0
    %1120 = vmatprep.subr.mxu0 0.0
    %1121 = vmatpush1.msra.mxu0 0.0
    %1122 = vmatprep.subr.mxu0 0.0
    %1123 = vmatpush1.msra.mxu0 0.0
    %1124 = vmatprep.mubr.f32.mxu0 0.0
    %1125 = vmatmul.mubr.f32.gmra.mrb[0].mxu0 %v1058
    %v1126 = vpop.f32.mrb[0].mxu0
    %v1127 = vadd.f32 0.0, %v1126
    %v1128 = vpop.f32.mrb[0].mxu0
    %1129 = vdwg.mxu0
    %1130 = vrot.lane.b32.xlu0 %v613, 64
    %v1131 = vpop.permute.xlu0 %1130
    %v1134 = vsel %vm933, %v976, 0
    %1136 = vmatprep.subr.mxu0 0.0
    %1137 = vmatpush1.msra.mxu0 %v1131
    %1138 = vmatprep.subr.mxu0 0.0
    %1139 = vmatpush1.msra.mxu0 0.0
    %1140 = vmatprep.subr.mxu0 0.0
    %1141 = vmatpush1.msra.mxu0 0.0
    %1142 = vmatprep.subr.mxu0 0.0
    %1143 = vmatpush1.msra.mxu0 0.0
    %1144 = vmatprep.subr.mxu0 0.0
    %1145 = vmatpush1.msra.mxu0 0.0
    %1146 = vmatprep.subr.mxu0 0.0
    %1147 = vmatpush1.msra.mxu0 0.0
    %1148 = vmatprep.subr.mxu0 0.0
    %1149 = vmatpush1.msra.mxu0 0.0
    %1150 = vmatprep.subr.mxu0 0.0
    %1151 = vmatpush1.msra.mxu0 0.0
    %1152 = vmatprep.subr.mxu0 0.0
    %1153 = vmatpush1.msra.mxu0 0.0
    %1154 = vmatprep.subr.mxu0 0.0
    %1155 = vmatpush1.msra.mxu0 0.0
    %1156 = vmatprep.subr.mxu0 0.0
    %1157 = vmatpush1.msra.mxu0 0.0
    %1158 = vmatprep.subr.mxu0 0.0
    %1159 = vmatpush1.msra.mxu0 0.0
    %1160 = vmatprep.subr.mxu0 0.0
    %1161 = vmatpush1.msra.mxu0 0.0
    %1162 = vmatprep.subr.mxu0 0.0
    %1163 = vmatpush1.msra.mxu0 0.0
    %1164 = vmatprep.subr.mxu0 0.0
    %1165 = vmatpush1.msra.mxu0 0.0
    %1166 = vmatprep.subr.mxu0 0.0
    %1167 = vmatpush1.msra.mxu0 0.0
    %1168 = vmatprep.subr.mxu0 0.0
    %1169 = vmatpush1.msra.mxu0 0.0
    %1170 = vmatprep.subr.mxu0 0.0
    %1171 = vmatpush1.msra.mxu0 0.0
    %1172 = vmatprep.subr.mxu0 0.0
    %1173 = vmatpush1.msra.mxu0 0.0
    %1174 = vmatprep.subr.mxu0 0.0
    %1175 = vmatpush1.msra.mxu0 0.0
    %1176 = vmatprep.subr.mxu0 0.0
    %1177 = vmatpush1.msra.mxu0 0.0
    %1178 = vmatprep.subr.mxu0 0.0
    %1179 = vmatpush1.msra.mxu0 0.0
    %1180 = vmatprep.subr.mxu0 0.0
    %1181 = vmatpush1.msra.mxu0 0.0
    %1182 = vmatprep.subr.mxu0 0.0
    %1183 = vmatpush1.msra.mxu0 0.0
    %1184 = vmatprep.subr.mxu0 0.0
    %1185 = vmatpush1.msra.mxu0 0.0
    %1186 = vmatprep.subr.mxu0 0.0
    %1187 = vmatpush1.msra.mxu0 0.0
    %1188 = vmatprep.subr.mxu0 0.0
    %1189 = vmatpush1.msra.mxu0 0.0
    %1190 = vmatprep.subr.mxu0 0.0
    %1191 = vmatpush1.msra.mxu0 0.0
    %1192 = vmatprep.subr.mxu0 0.0
    %1193 = vmatpush1.msra.mxu0 0.0
    %1194 = vmatprep.subr.mxu0 0.0
    %1195 = vmatpush1.msra.mxu0 0.0
    %1196 = vmatprep.subr.mxu0 0.0
    %1197 = vmatpush1.msra.mxu0 0.0
    %1198 = vmatprep.subr.mxu0 0.0
    %1199 = vmatpush1.msra.mxu0 0.0
    %1200 = vmatprep.mubr.f32.mxu0 0.0
    %1201 = vmatmul.mubr.f32.gmra.mrb[0].mxu0 %v1134
    %v1202 = vpop.f32.mrb[0].mxu0
    %v1203 = vadd.f32 0.0, %v1202
    %v1204 = vpop.f32.mrb[0].mxu0
    %1205 = vdwg.mxu0
    %1206 = vrot.lane.b32.xlu0 %v615, 64
    %v1207 = vpop.permute.xlu0 %1206
    %v1210 = vsel %vm933, %v977, 0
    %1212 = vmatprep.subr.mxu0 0.0
    %1213 = vmatpush1.msra.mxu0 %v1207
    %1214 = vmatprep.subr.mxu0 0.0
    %1215 = vmatpush1.msra.mxu0 0.0
    %1216 = vmatprep.subr.mxu0 0.0
    %1217 = vmatpush1.msra.mxu0 0.0
    %1218 = vmatprep.subr.mxu0 0.0
    %1219 = vmatpush1.msra.mxu0 0.0
    %1220 = vmatprep.subr.mxu0 0.0
    %1221 = vmatpush1.msra.mxu0 0.0
    %1222 = vmatprep.subr.mxu0 0.0
    %1223 = vmatpush1.msra.mxu0 0.0
    %1224 = vmatprep.subr.mxu0 0.0
    %1225 = vmatpush1.msra.mxu0 0.0
    %1226 = vmatprep.subr.mxu0 0.0
    %1227 = vmatpush1.msra.mxu0 0.0
    %1228 = vmatprep.subr.mxu0 0.0
    %1229 = vmatpush1.msra.mxu0 0.0
    %1230 = vmatprep.subr.mxu0 0.0
    %1231 = vmatpush1.msra.mxu0 0.0
    %1232 = vmatprep.subr.mxu0 0.0
    %1233 = vmatpush1.msra.mxu0 0.0
    %1234 = vmatprep.subr.mxu0 0.0
    %1235 = vmatpush1.msra.mxu0 0.0
    %1236 = vmatprep.subr.mxu0 0.0
    %1237 = vmatpush1.msra.mxu0 0.0
    %1238 = vmatprep.subr.mxu0 0.0
    %1239 = vmatpush1.msra.mxu0 0.0
    %1240 = vmatprep.subr.mxu0 0.0
    %1241 = vmatpush1.msra.mxu0 0.0
    %1242 = vmatprep.subr.mxu0 0.0
    %1243 = vmatpush1.msra.mxu0 0.0
    %1244 = vmatprep.subr.mxu0 0.0
    %1245 = vmatpush1.msra.mxu0 0.0
    %1246 = vmatprep.subr.mxu0 0.0
    %1247 = vmatpush1.msra.mxu0 0.0
    %1248 = vmatprep.subr.mxu0 0.0
    %1249 = vmatpush1.msra.mxu0 0.0
    %1250 = vmatprep.subr.mxu0 0.0
    %1251 = vmatpush1.msra.mxu0 0.0
    %1252 = vmatprep.subr.mxu0 0.0
    %1253 = vmatpush1.msra.mxu0 0.0
    %1254 = vmatprep.subr.mxu0 0.0
    %1255 = vmatpush1.msra.mxu0 0.0
    %1256 = vmatprep.subr.mxu0 0.0
    %1257 = vmatpush1.msra.mxu0 0.0
    %1258 = vmatprep.subr.mxu0 0.0
    %1259 = vmatpush1.msra.mxu0 0.0
    %1260 = vmatprep.subr.mxu0 0.0
    %1261 = vmatpush1.msra.mxu0 0.0
    %1262 = vmatprep.subr.mxu0 0.0
    %1263 = vmatpush1.msra.mxu0 0.0
    %1264 = vmatprep.subr.mxu0 0.0
    %1265 = vmatpush1.msra.mxu0 0.0
    %1266 = vmatprep.subr.mxu0 0.0
    %1267 = vmatpush1.msra.mxu0 0.0
    %1268 = vmatprep.subr.mxu0 0.0
    %1269 = vmatpush1.msra.mxu0 0.0
    %1270 = vmatprep.subr.mxu0 0.0
    %1271 = vmatpush1.msra.mxu0 0.0
    %1272 = vmatprep.subr.mxu0 0.0
    %1273 = vmatpush1.msra.mxu0 0.0
    %1274 = vmatprep.subr.mxu0 0.0
    %1275 = vmatpush1.msra.mxu0 0.0
    %1276 = vmatprep.mubr.f32.mxu0 0.0
    %1277 = vmatmul.mubr.f32.gmra.mrb[0].mxu0 %v1210
    %v1278 = vpop.f32.mrb[0].mxu0
    %v1279 = vadd.f32 0.0, %v1278
    %v1280 = vpop.f32.mrb[0].mxu0
    %1281 = vdwg.mxu0
    %1284 = vrot.lane.b32.xlu0 %v1203, 16
    %v1285 = vpop.permute.xlu0 %1284
    %1286 = vrot.lane.b32.xlu0 %v1279, 16
    %v1287 = vpop.permute.xlu0 %1286
    %v1290 = vsel %vm630, %v1051, %v1285
    %v1291 = vsel %vm630, %v1127, %v1287
    %v1292 = vlaneseq
    %v1293 = vshrl.u32 %v1292, 7
    %v1294 = vsub.s32 0, %v1293
    %v1295 = vrot.slane %v516, %v1294
    %v1297 = vsel %vm405, %v1290, 0
    %v1300 = vsel %vm405, %v1291, 0
    %1302 = vmatprep.subr.mxu0 0.0
    %1303 = vmatpush1.msra.mxu0 %v499
    %1304 = vmatprep.subr.mxu0 0.0
    %1305 = vmatpush1.msra.mxu0 %v500
    %1306 = vmatprep.subr.mxu0 0.0
    %1307 = vmatpush1.msra.mxu0 %v501
    %1308 = vmatprep.subr.mxu0 0.0
    %1309 = vmatpush1.msra.mxu0 %v502
    %1310 = vmatprep.subr.mxu0 0.0
    %1311 = vmatpush1.msra.mxu0 0.0
    %1312 = vmatprep.subr.mxu0 0.0
    %1313 = vmatpush1.msra.mxu0 0.0
    %1314 = vmatprep.subr.mxu0 0.0
    %1315 = vmatpush1.msra.mxu0 0.0
    %1316 = vmatprep.subr.mxu0 0.0
    %1317 = vmatpush1.msra.mxu0 0.0
    %1318 = vmatprep.subr.mxu0 0.0
    %1319 = vmatpush1.msra.mxu0 0.0
    %1320 = vmatprep.subr.mxu0 0.0
    %1321 = vmatpush1.msra.mxu0 0.0
    %1322 = vmatprep.subr.mxu0 0.0
    %1323 = vmatpush1.msra.mxu0 0.0
    %1324 = vmatprep.subr.mxu0 0.0
    %1325 = vmatpush1.msra.mxu0 0.0
    %1326 = vmatprep.subr.mxu0 0.0
    %1327 = vmatpush1.msra.mxu0 0.0
    %1328 = vmatprep.subr.mxu0 0.0
    %1329 = vmatpush1.msra.mxu0 0.0
    %1330 = vmatprep.subr.mxu0 0.0
    %1331 = vmatpush1.msra.mxu0 0.0
    %1332 = vmatprep.subr.mxu0 0.0
    %1333 = vmatpush1.msra.mxu0 0.0
    %1334 = vmatprep.subr.mxu0 0.0
    %1335 = vmatpush1.msra.mxu0 0.0
    %1336 = vmatprep.subr.mxu0 0.0
    %1337 = vmatpush1.msra.mxu0 0.0
    %1338 = vmatprep.subr.mxu0 0.0
    %1339 = vmatpush1.msra.mxu0 0.0
    %1340 = vmatprep.subr.mxu0 0.0
    %1341 = vmatpush1.msra.mxu0 0.0
    %1342 = vmatprep.subr.mxu0 0.0
    %1343 = vmatpush1.msra.mxu0 0.0
    %1344 = vmatprep.subr.mxu0 0.0
    %1345 = vmatpush1.msra.mxu0 0.0
    %1346 = vmatprep.subr.mxu0 0.0
    %1347 = vmatpush1.msra.mxu0 0.0
    %1348 = vmatprep.subr.mxu0 0.0
    %1349 = vmatpush1.msra.mxu0 0.0
    %1350 = vmatprep.subr.mxu0 0.0
    %1351 = vmatpush1.msra.mxu0 0.0
    %1352 = vmatprep.subr.mxu0 0.0
    %1353 = vmatpush1.msra.mxu0 0.0
    %1354 = vmatprep.subr.mxu0 0.0
    %1355 = vmatpush1.msra.mxu0 0.0
    %1356 = vmatprep.subr.mxu0 0.0
    %1357 = vmatpush1.msra.mxu0 0.0
    %1358 = vmatprep.subr.mxu0 0.0
    %1359 = vmatpush1.msra.mxu0 0.0
    %1360 = vmatprep.subr.mxu0 0.0
    %1361 = vmatpush1.msra.mxu0 0.0
    %1362 = vmatprep.subr.mxu0 0.0
    %1363 = vmatpush1.msra.mxu0 0.0
    %1364 = vmatprep.subr.mxu0 0.0
    %1365 = vmatpush1.msra.mxu0 0.0
    %1366 = vmatprep.mubr.f32.mxu0 0.0
    %1367 = vmatmul.mubr.f32.gmra.mrb[0].mxu0 %v1297
    %v1368 = vpop.f32.mrb[0].mxu0
    %v1369 = vadd.f32 %v1295, %v1368
    %v1370 = vpop.f32.mrb[0].mxu0
    %1371 = vmatprep.mubr.f32.mxu0 0.0
    %1372 = vmatmul.mubr.f32.gmra.mrb[0].mxu0 %v1300
    %v1373 = vpop.f32.mrb[0].mxu0
    %v1374 = vadd.f32 %v1295, %v1373
    %v1375 = vpop.f32.mrb[0].mxu0
    %1376 = vdwg.mxu0
    %v1377 = vadd.f32 %v443, %v1369
    %v1378 = vadd.f32 %v444, %v1374
    %v1379 = vsel %vm405, %v1377, 0.0
    %1380 = vadd.xlane.f32.xlu0 %v1379
    %v1381 = vpop.xlane.xlu0 %1380
    %v1382 = vsel %vm405, %v1378, 0.0
    %1383 = vadd.xlane.f32.xlu0 %v1382
    %v1384 = vpop.xlane.xlu0 %1383
    %v1385 = vmul.f32 %v1381, %v412
    %v1386 = vmul.f32 %v1384, %v412
    %v1387 = vsub.f32 %v1377, %v1385
    %v1388 = vsub.f32 %v1378, %v1386
    %v1389 = vmul.f32 %v1387, %v1387
    %v1390 = vmul.f32 %v1388, %v1388
    %v1391 = vsel %vm405, %v1389, 0.0
    %1392 = vadd.xlane.f32.xlu0 %v1391
    %v1393 = vpop.xlane.xlu0 %1392
    %v1394 = vsel %vm405, %v1390, 0.0
    %1395 = vadd.xlane.f32.xlu0 %v1394
    %v1396 = vpop.xlane.xlu0 %1395
    %v1397 = vmul.f32 %v1393, %v412
    %v1398 = vmul.f32 %v1396, %v412
    %v1399 = vadd.f32 %v1397, 1e-12
    %v1400 = vadd.f32 %v1398, 1e-12
    %v1401 = vrsqrt.pop %v1399
    %v1402 = vrsqrt.pop %v1400
    %v1403 = vmul.f32 %v1387, %v1401
    %v1404 = vmul.f32 %v1388, %v1402
    %v1405 = vlaneseq
    %v1406 = vshrl.u32 %v1405, 7
    %v1407 = vsub.s32 1, %v1406
    %v1408 = vrot.slane %v516, %v1407
    %v1409 = vmul.f32 %v1403, %v1408
    %v1410 = vmul.f32 %v1404, %v1408
    %v1411 = vlaneseq
    %v1412 = vshrl.u32 %v1411, 7
    %v1413 = vsub.s32 2, %v1412
    %v1414 = vrot.slane %v516, %v1413
    %v1415 = vadd.f32 %v1409, %v1414
    %v1416 = vadd.f32 %v1410, %v1414
    %v1418 = vlaneseq
    %v1419 = vshrl.u32 %v1418, 7
    %v1420 = vsub.s32 0, %v1419
    %v1421 = vrot.slane %v507, %v1420
    %v1424 = vsel %vm405, %v1415, 0
    %v1427 = vsel %vm405, %v1416, 0
    %1429 = vmatprep.subr.mxu0 0.0
    %1430 = vmatpush1.msra.mxu0 %v503
    %1431 = vmatprep.subr.mxu0 0.0
    %1432 = vmatpush1.msra.mxu0 %v504
    %1433 = vmatprep.subr.mxu0 0.0
    %1434 = vmatpush1.msra.mxu0 %v505
    %1435 = vmatprep.subr.mxu0 0.0
    %1436 = vmatpush1.msra.mxu0 %v506
    %1437 = vmatprep.subr.mxu0 0.0
    %1438 = vmatpush1.msra.mxu0 0.0
    %1439 = vmatprep.subr.mxu0 0.0
    %1440 = vmatpush1.msra.mxu0 0.0
    %1441 = vmatprep.subr.mxu0 0.0
    %1442 = vmatpush1.msra.mxu0 0.0
    %1443 = vmatprep.subr.mxu0 0.0
    %1444 = vmatpush1.msra.mxu0 0.0
    %1445 = vmatprep.subr.mxu0 0.0
    %1446 = vmatpush1.msra.mxu0 0.0
    %1447 = vmatprep.subr.mxu0 0.0
    %1448 = vmatpush1.msra.mxu0 0.0
    %1449 = vmatprep.subr.mxu0 0.0
    %1450 = vmatpush1.msra.mxu0 0.0
    %1451 = vmatprep.subr.mxu0 0.0
    %1452 = vmatpush1.msra.mxu0 0.0
    %1453 = vmatprep.subr.mxu0 0.0
    %1454 = vmatpush1.msra.mxu0 0.0
    %1455 = vmatprep.subr.mxu0 0.0
    %1456 = vmatpush1.msra.mxu0 0.0
    %1457 = vmatprep.subr.mxu0 0.0
    %1458 = vmatpush1.msra.mxu0 0.0
    %1459 = vmatprep.subr.mxu0 0.0
    %1460 = vmatpush1.msra.mxu0 0.0
    %1461 = vmatprep.subr.mxu0 0.0
    %1462 = vmatpush1.msra.mxu0 0.0
    %1463 = vmatprep.subr.mxu0 0.0
    %1464 = vmatpush1.msra.mxu0 0.0
    %1465 = vmatprep.subr.mxu0 0.0
    %1466 = vmatpush1.msra.mxu0 0.0
    %1467 = vmatprep.subr.mxu0 0.0
    %1468 = vmatpush1.msra.mxu0 0.0
    %1469 = vmatprep.subr.mxu0 0.0
    %1470 = vmatpush1.msra.mxu0 0.0
    %1471 = vmatprep.subr.mxu0 0.0
    %1472 = vmatpush1.msra.mxu0 0.0
    %1473 = vmatprep.subr.mxu0 0.0
    %1474 = vmatpush1.msra.mxu0 0.0
    %1475 = vmatprep.subr.mxu0 0.0
    %1476 = vmatpush1.msra.mxu0 0.0
    %1477 = vmatprep.subr.mxu0 0.0
    %1478 = vmatpush1.msra.mxu0 0.0
    %1479 = vmatprep.subr.mxu0 0.0
    %1480 = vmatpush1.msra.mxu0 0.0
    %1481 = vmatprep.subr.mxu0 0.0
    %1482 = vmatpush1.msra.mxu0 0.0
    %1483 = vmatprep.subr.mxu0 0.0
    %1484 = vmatpush1.msra.mxu0 0.0
    %1485 = vmatprep.subr.mxu0 0.0
    %1486 = vmatpush1.msra.mxu0 0.0
    %1487 = vmatprep.subr.mxu0 0.0
    %1488 = vmatpush1.msra.mxu0 0.0
    %1489 = vmatprep.subr.mxu0 0.0
    %1490 = vmatpush1.msra.mxu0 0.0
    %1491 = vmatprep.subr.mxu0 0.0
    %1492 = vmatpush1.msra.mxu0 0.0
    %1493 = vmatprep.mubr.f32.mxu0 0.0
    %1494 = vmatmul.mubr.f32.gmra.mrb[0].mxu0 %v1424
    %v1495 = vpop.f32.mrb[0].mxu0
    %v1496 = vadd.f32 %v1421, %v1495
    %v1497 = vpop.f32.mrb[0].mxu0
    %1498 = vmatprep.mubr.f32.mxu0 0.0
    %1499 = vmatmul.mubr.f32.gmra.mrb[0].mxu0 %v1427
    %v1500 = vpop.f32.mrb[0].mxu0
    %v1501 = vadd.f32 %v1421, %v1500
    %v1502 = vpop.f32.mrb[0].mxu0
    %1503 = vdwg.mxu0
    %v1504 = vmul.f32 %v1496, %v1496
    %v1505 = vmul.f32 %v1501, %v1501
    %v1506 = vmul.f32 %v1496, %v1504
    %v1507 = vmul.f32 %v1501, %v1505
    %v1508 = vmul.f32 %v1506, 0.044715
    %v1509 = vmul.f32 %v1507, 0.044715
    %v1510 = vadd.f32 %v1496, %v1508
    %v1511 = vadd.f32 %v1501, %v1509
    %v1512 = vmul.f32 %v1510, 0.7978846
    %v1513 = vmul.f32 %v1511, 0.7978846
    %v1514 = vtanh.pop %v1512
    %v1515 = vtanh.pop %v1513
    %v1516 = vadd.f32 %v1514, 1.0
    %v1517 = vadd.f32 %v1515, 1.0
    %v1518 = vmul.f32 %v1516, 0.5
    %v1519 = vmul.f32 %v1517, 0.5
    %v1520 = vmul.f32 %v1496, %v1518
    %v1521 = vmul.f32 %v1501, %v1519
    %v1522 = vlaneseq
    %v1523 = vshrl.u32 %v1522, 7
    %v1524 = vsub.s32 3, %v1523
    %v1525 = vrot.slane %v516, %v1524
    %v1527 = vsel %vm459, %v1520, 0
    %v1530 = vsel %vm459, %v1521, 0
    %1532 = vmatprep.subr.mxu0 0.0
    %1533 = vmatpush1.msra.mxu0 %v508
    %1534 = vmatprep.subr.mxu0 0.0
    %1535 = vmatpush1.msra.mxu0 %v509
    %1536 = vmatprep.subr.mxu0 0.0
    %1537 = vmatpush1.msra.mxu0 %v510
    %1538 = vmatprep.subr.mxu0 0.0
    %1539 = vmatpush1.msra.mxu0 %v511
    %1540 = vmatprep.subr.mxu0 0.0
    %1541 = vmatpush1.msra.mxu0 %v512
    %1542 = vmatprep.subr.mxu0 0.0
    %1543 = vmatpush1.msra.mxu0 %v513
    %1544 = vmatprep.subr.mxu0 0.0
    %1545 = vmatpush1.msra.mxu0 %v514
    %1546 = vmatprep.subr.mxu0 0.0
    %1547 = vmatpush1.msra.mxu0 %v515
    %1548 = vmatprep.subr.mxu0 0.0
    %1549 = vmatpush1.msra.mxu0 0.0
    %1550 = vmatprep.subr.mxu0 0.0
    %1551 = vmatpush1.msra.mxu0 0.0
    %1552 = vmatprep.subr.mxu0 0.0
    %1553 = vmatpush1.msra.mxu0 0.0
    %1554 = vmatprep.subr.mxu0 0.0
    %1555 = vmatpush1.msra.mxu0 0.0
    %1556 = vmatprep.subr.mxu0 0.0
    %1557 = vmatpush1.msra.mxu0 0.0
    %1558 = vmatprep.subr.mxu0 0.0
    %1559 = vmatpush1.msra.mxu0 0.0
    %1560 = vmatprep.subr.mxu0 0.0
    %1561 = vmatpush1.msra.mxu0 0.0
    %1562 = vmatprep.subr.mxu0 0.0
    %1563 = vmatpush1.msra.mxu0 0.0
    %1564 = vmatprep.subr.mxu0 0.0
    %1565 = vmatpush1.msra.mxu0 0.0
    %1566 = vmatprep.subr.mxu0 0.0
    %1567 = vmatpush1.msra.mxu0 0.0
    %1568 = vmatprep.subr.mxu0 0.0
    %1569 = vmatpush1.msra.mxu0 0.0
    %1570 = vmatprep.subr.mxu0 0.0
    %1571 = vmatpush1.msra.mxu0 0.0
    %1572 = vmatprep.subr.mxu0 0.0
    %1573 = vmatpush1.msra.mxu0 0.0
    %1574 = vmatprep.subr.mxu0 0.0
    %1575 = vmatpush1.msra.mxu0 0.0
    %1576 = vmatprep.subr.mxu0 0.0
    %1577 = vmatpush1.msra.mxu0 0.0
    %1578 = vmatprep.subr.mxu0 0.0
    %1579 = vmatpush1.msra.mxu0 0.0
    %1580 = vmatprep.subr.mxu0 0.0
    %1581 = vmatpush1.msra.mxu0 0.0
    %1582 = vmatprep.subr.mxu0 0.0
    %1583 = vmatpush1.msra.mxu0 0.0
    %1584 = vmatprep.subr.mxu0 0.0
    %1585 = vmatpush1.msra.mxu0 0.0
    %1586 = vmatprep.subr.mxu0 0.0
    %1587 = vmatpush1.msra.mxu0 0.0
    %1588 = vmatprep.subr.mxu0 0.0
    %1589 = vmatpush1.msra.mxu0 0.0
    %1590 = vmatprep.subr.mxu0 0.0
    %1591 = vmatpush1.msra.mxu0 0.0
    %1592 = vmatprep.subr.mxu0 0.0
    %1593 = vmatpush1.msra.mxu0 0.0
    %1594 = vmatprep.subr.mxu0 0.0
    %1595 = vmatpush1.msra.mxu0 0.0
    %1596 = vmatprep.mubr.f32.mxu0 0.0
    %1597 = vmatmul.mubr.f32.gmra.mrb[0].mxu0 %v1527
    %v1598 = vpop.f32.mrb[0].mxu0
    %v1599 = vadd.f32 %v1525, %v1598
    %v1600 = vpop.f32.mrb[0].mxu0
    %1601 = vmatprep.mubr.f32.mxu0 0.0
    %1602 = vmatmul.mubr.f32.gmra.mrb[0].mxu0 %v1530
    %v1603 = vpop.f32.mrb[0].mxu0
    %v1604 = vadd.f32 %v1525, %v1603
    %v1605 = vpop.f32.mrb[0].mxu0
    %1606 = vdwg.mxu0
    %v1607 = vadd.f32 %v1415, %v1599
    %v1608 = vadd.f32 %v1416, %v1604
    %v1609 = vsel %vm405, %v1607, 0.0
    %1610 = vadd.xlane.f32.xlu0 %v1609
    %v1611 = vpop.xlane.xlu0 %1610
    %v1612 = vsel %vm405, %v1608, 0.0
    %1613 = vadd.xlane.f32.xlu0 %v1612
    %v1614 = vpop.xlane.xlu0 %1613
    %v1615 = vmul.f32 %v1611, %v412
    %v1616 = vmul.f32 %v1614, %v412
    %v1617 = vsub.f32 %v1607, %v1615
    %v1618 = vsub.f32 %v1608, %v1616
    %v1619 = vmul.f32 %v1617, %v1617
    %v1620 = vmul.f32 %v1618, %v1618
    %v1621 = vsel %vm405, %v1619, 0.0
    %1622 = vadd.xlane.f32.xlu0 %v1621
    %v1623 = vpop.xlane.xlu0 %1622
    %v1624 = vsel %vm405, %v1620, 0.0
    %1625 = vadd.xlane.f32.xlu0 %v1624
    %v1626 = vpop.xlane.xlu0 %1625
    %v1627 = vmul.f32 %v1623, %v412
    %v1628 = vmul.f32 %v1626, %v412
    %v1629 = vadd.f32 %v1627, 1e-12
    %v1630 = vadd.f32 %v1628, 1e-12
    %v1631 = vrsqrt.pop %v1629
    %v1632 = vrsqrt.pop %v1630
    %v1633 = vmul.f32 %v1617, %v1631
    %v1634 = vmul.f32 %v1618, %v1632
    %v1635 = vlaneseq
    %v1636 = vshrl.u32 %v1635, 7
    %v1637 = vsub.s32 4, %v1636
    %v1638 = vrot.slane %v516, %v1637
    %v1639 = vmul.f32 %v1633, %v1638
    %v1640 = vmul.f32 %v1634, %v1638
    %v1641 = vlaneseq
    %v1642 = vshrl.u32 %v1641, 7
    %v1643 = vsub.s32 5, %v1642
    %v1644 = vrot.slane %v516, %v1643
    %v1645 = vadd.f32 %v1639, %v1644
    %v1646 = vadd.f32 %v1640, %v1644
    %v1648 = vrot.slane %v1645, 4
    %1649 = vrot.lane.b32.xlu0 %v1648, 32
    %v1650 = vpop.permute.xlu0 %1649
    %1653 = vrot.lane.b32.xlu0 %v1646, 64
    %v1654 = vpop.permute.xlu0 %1653
    %v1656 = vrot.slane %v1646, 4
    %1657 = vrot.lane.b32.xlu0 %v1656, 96
    %v1658 = vpop.permute.xlu0 %1657
    %v1660 = vsel %vm405, %v1645, %v1650
    %v1661 = vsel %vm459, %v1660, %v1654
    %v1662 = vsel %vm461, %v1661, %v1658
    %s1663 = scalar_lea.vmem [#allocation28], 4
    %1664 = vst [vmem:[%s1663] sm:$0xf] %v1662
    %s1665 = scalar_lea.vmem [#allocation14], 32
    %v1666 = vld [vmem:[%s1665] sm:$0xff]
    %v1667 = vld [vmem:[%s1665 + $0x8] sm:$0xff]
    %v1668 = vld [vmem:[%s1665 + $0x10] sm:$0xff]
    %v1669 = vld [vmem:[%s1665 + $0x18] sm:$0xff]
    %s1670 = scalar_lea.vmem [#allocation16], 1
    %v1671 = vld [vmem:[%s1670] sm:$0x1]
    %s1672 = scalar_lea.vmem [#allocation17], 32
    %v1673 = vld [vmem:[%s1672] sm:$0xff]
    %v1674 = vld [vmem:[%s1672 + $0x8] sm:$0xff]
    %v1675 = vld [vmem:[%s1672 + $0x10] sm:$0xff]
    %v1676 = vld [vmem:[%s1672 + $0x18] sm:$0xff]
    %s1677 = scalar_lea.vmem [#allocation19], 32
    %v1678 = vld [vmem:[%s1677] sm:$0xff]
    %v1679 = vld [vmem:[%s1677 + $0x8] sm:$0xff]
    %v1680 = vld [vmem:[%s1677 + $0x10] sm:$0xff]
    %v1681 = vld [vmem:[%s1677 + $0x18] sm:$0xff]
    %s1682 = scalar_lea.vmem [#allocation20], 1
    %v1683 = vld [vmem:[%s1682] sm:$0x1]
    %s1684 = scalar_lea.vmem [#allocation22], 64
    %v1685 = vld [vmem:[%s1684] sm:$0xff]
    %v1686 = vld [vmem:[%s1684 + $0x8] sm:$0xff]
    %v1687 = vld [vmem:[%s1684 + $0x10] sm:$0xff]
    %v1688 = vld [vmem:[%s1684 + $0x18] sm:$0xff]
    %v1689 = vld [vmem:[%s1684 + $0x20] sm:$0xff]
    %v1690 = vld [vmem:[%s1684 + $0x28] sm:$0xff]
    %v1691 = vld [vmem:[%s1684 + $0x30] sm:$0xff]
    %v1692 = vld [vmem:[%s1684 + $0x38] sm:$0xff]
    %s1693 = scalar_lea.vmem [#allocation23], 8
    %v1694 = vld [vmem:[%s1693] sm:$0x3f]
    %v1696 = vlaneseq
    %v1697 = vshrl.u32 %v1696, 7
    %v1698 = vsub.s32 0, %v1697
    %v1699 = vrot.slane %v1671, %v1698
    %v1701 = vsel %vm405, %v1645, 0
    %v1703 = vsel %vm405, %v1646, 0
    %1705 = vmatprep.subr.mxu0 0.0
    %1706 = vmatpush1.msra.mxu0 %v1666
    %1707 = vmatprep.subr.mxu0 0.0
    %1708 = vmatpush1.msra.mxu0 %v1667
    %1709 = vmatprep.subr.mxu0 0.0
    %1710 = vmatpush1.msra.mxu0 %v1668
    %1711 = vmatprep.subr.mxu0 0.0
    %1712 = vmatpush1.msra.mxu0 %v1669
    %1713 = vmatprep.subr.mxu0 0.0
    %1714 = vmatpush1.msra.mxu0 0.0
    %1715 = vmatprep.subr.mxu0 0.0
    %1716 = vmatpush1.msra.mxu0 0.0
    %1717 = vmatprep.subr.mxu0 0.0
    %1718 = vmatpush1.msra.mxu0 0.0
    %1719 = vmatprep.subr.mxu0 0.0
    %1720 = vmatpush1.msra.mxu0 0.0
    %1721 = vmatprep.subr.mxu0 0.0
    %1722 = vmatpush1.msra.mxu0 0.0
    %1723 = vmatprep.subr.mxu0 0.0
    %1724 = vmatpush1.msra.mxu0 0.0
    %1725 = vmatprep.subr.mxu0 0.0
    %1726 = vmatpush1.msra.mxu0 0.0
    %1727 = vmatprep.subr.mxu0 0.0
    %1728 = vmatpush1.msra.mxu0 0.0
    %1729 = vmatprep.subr.mxu0 0.0
    %1730 = vmatpush1.msra.mxu0 0.0
    %1731 = vmatprep.subr.mxu0 0.0
    %1732 = vmatpush1.msra.mxu0 0.0
    %1733 = vmatprep.subr.mxu0 0.0
    %1734 = vmatpush1.msra.mxu0 0.0
    %1735 = vmatprep.subr.mxu0 0.0
    %1736 = vmatpush1.msra.mxu0 0.0
    %1737 = vmatprep.subr.mxu0 0.0
    %1738 = vmatpush1.msra.mxu0 0.0
    %1739 = vmatprep.subr.mxu0 0.0
    %1740 = vmatpush1.msra.mxu0 0.0
    %1741 = vmatprep.subr.mxu0 0.0
    %1742 = vmatpush1.msra.mxu0 0.0
    %1743 = vmatprep.subr.mxu0 0.0
    %1744 = vmatpush1.msra.mxu0 0.0
    %1745 = vmatprep.subr.mxu0 0.0
    %1746 = vmatpush1.msra.mxu0 0.0
    %1747 = vmatprep.subr.mxu0 0.0
    %1748 = vmatpush1.msra.mxu0 0.0
    %1749 = vmatprep.subr.mxu0 0.0
    %1750 = vmatpush1.msra.mxu0 0.0
    %1751 = vmatprep.subr.mxu0 0.0
    %1752 = vmatpush1.msra.mxu0 0.0
    %1753 = vmatprep.subr.mxu0 0.0
    %1754 = vmatpush1.msra.mxu0 0.0
    %1755 = vmatprep.subr.mxu0 0.0
    %1756 = vmatpush1.msra.mxu0 0.0
    %1757 = vmatprep.subr.mxu0 0.0
    %1758 = vmatpush1.msra.mxu0 0.0
    %1759 = vmatprep.subr.mxu0 0.0
    %1760 = vmatpush1.msra.mxu0 0.0
    %1761 = vmatprep.subr.mxu0 0.0
    %1762 = vmatpush1.msra.mxu0 0.0
    %1763 = vmatprep.subr.mxu0 0.0
    %1764 = vmatpush1.msra.mxu0 0.0
    %1765 = vmatprep.subr.mxu0 0.0
    %1766 = vmatpush1.msra.mxu0 0.0
    %1767 = vmatprep.subr.mxu0 0.0
    %1768 = vmatpush1.msra.mxu0 0.0
    %1769 = vmatprep.mubr.f32.mxu0 0.0
    %1770 = vmatmul.mubr.f32.gmra.mrb[0].mxu0 %v1701
    %v1771 = vpop.f32.mrb[0].mxu0
    %v1772 = vadd.f32 %v1699, %v1771
    %v1773 = vpop.f32.mrb[0].mxu0
    %1774 = vmatprep.mubr.f32.mxu0 0.0
    %1775 = vmatmul.mubr.f32.gmra.mrb[0].mxu0 %v1703
    %v1776 = vpop.f32.mrb[0].mxu0
    %v1777 = vadd.f32 %v1699, %v1776
    %v1778 = vpop.f32.mrb[0].mxu0
    %1779 = vdwg.mxu0
    %v1780 = vmul.f32 %v1772, 0.25
    %v1781 = vmul.f32 %v1777, 0.25
    %1784 = vrot.lane.b32.xlu0 %v1780, 112
    %v1785 = vpop.permute.xlu0 %1784
    %1786 = vrot.lane.b32.xlu0 %v1781, 112
    %v1787 = vpop.permute.xlu0 %1786
    %1790 = vrot.lane.b32.xlu0 %v1772, 112
    %v1791 = vpop.permute.xlu0 %1790
    %1792 = vrot.lane.b32.xlu0 %v1777, 112
    %v1793 = vpop.permute.xlu0 %1792
    %1794 = vrot.lane.b32.xlu0 %v1772, 96
    %v1795 = vpop.permute.xlu0 %1794
    %v1796 = vsel %vm630, %v1780, 0
    %v1798 = vsel %vm630, %v1795, 0
    %1800 = vmatprep.subr.mxu0 0.0
    %1801 = vmatpush1.xpose.msra.mxu0 %v1798
    %1802 = vmatprep.subr.mxu0 0.0
    %1803 = vmatpush1.xpose.msra.mxu0 0.0
    %1804 = vmatprep.subr.mxu0 0.0
    %1805 = vmatpush1.xpose.msra.mxu0 0.0
    %1806 = vmatprep.subr.mxu0 0.0
    %1807 = vmatpush1.xpose.msra.mxu0 0.0
    %1808 = vmatprep.subr.mxu0 0.0
    %1809 = vmatpush1.xpose.msra.mxu0 0.0
    %1810 = vmatprep.subr.mxu0 0.0
    %1811 = vmatpush1.xpose.msra.mxu0 0.0
    %1812 = vmatprep.subr.mxu0 0.0
    %1813 = vmatpush1.xpose.msra.mxu0 0.0
    %1814 = vmatprep.subr.mxu0 0.0
    %1815 = vmatpush1.xpose.msra.mxu0 0.0
    %1816 = vmatprep.subr.mxu0 0.0
    %1817 = vmatpush1.xpose.msra.mxu0 0.0
    %1818 = vmatprep.subr.mxu0 0.0
    %1819 = vmatpush1.xpose.msra.mxu0 0.0
    %1820 = vmatprep.subr.mxu0 0.0
    %1821 = vmatpush1.xpose.msra.mxu0 0.0
    %1822 = vmatprep.subr.mxu0 0.0
    %1823 = vmatpush1.xpose.msra.mxu0 0.0
    %1824 = vmatprep.subr.mxu0 0.0
    %1825 = vmatpush1.xpose.msra.mxu0 0.0
    %1826 = vmatprep.subr.mxu0 0.0
    %1827 = vmatpush1.xpose.msra.mxu0 0.0
    %1828 = vmatprep.subr.mxu0 0.0
    %1829 = vmatpush1.xpose.msra.mxu0 0.0
    %1830 = vmatprep.subr.mxu0 0.0
    %1831 = vmatpush1.xpose.msra.mxu0 0.0
    %1832 = vmatprep.subr.mxu0 0.0
    %1833 = vmatpush1.xpose.msra.mxu0 0.0
    %1834 = vmatprep.subr.mxu0 0.0
    %1835 = vmatpush1.xpose.msra.mxu0 0.0
    %1836 = vmatprep.subr.mxu0 0.0
    %1837 = vmatpush1.xpose.msra.mxu0 0.0
    %1838 = vmatprep.subr.mxu0 0.0
    %1839 = vmatpush1.xpose.msra.mxu0 0.0
    %1840 = vmatprep.subr.mxu0 0.0
    %1841 = vmatpush1.xpose.msra.mxu0 0.0
    %1842 = vmatprep.subr.mxu0 0.0
    %1843 = vmatpush1.xpose.msra.mxu0 0.0
    %1844 = vmatprep.subr.mxu0 0.0
    %1845 = vmatpush1.xpose.msra.mxu0 0.0
    %1846 = vmatprep.subr.mxu0 0.0
    %1847 = vmatpush1.xpose.msra.mxu0 0.0
    %1848 = vmatprep.subr.mxu0 0.0
    %1849 = vmatpush1.xpose.msra.mxu0 0.0
    %1850 = vmatprep.subr.mxu0 0.0
    %1851 = vmatpush1.xpose.msra.mxu0 0.0
    %1852 = vmatprep.subr.mxu0 0.0
    %1853 = vmatpush1.xpose.msra.mxu0 0.0
    %1854 = vmatprep.subr.mxu0 0.0
    %1855 = vmatpush1.xpose.msra.mxu0 0.0
    %1856 = vmatprep.subr.mxu0 0.0
    %1857 = vmatpush1.xpose.msra.mxu0 0.0
    %1858 = vmatprep.subr.mxu0 0.0
    %1859 = vmatpush1.xpose.msra.mxu0 0.0
    %1860 = vmatprep.subr.mxu0 0.0
    %1861 = vmatpush1.xpose.msra.mxu0 0.0
    %1862 = vmatprep.subr.mxu0 0.0
    %1863 = vmatpush1.xpose.msra.mxu0 0.0
    %1864 = vmatprep.mubr.f32.mxu0 0.0
    %1865 = vmatmul.mubr.f32.gmra.mrb[0].mxu0 %v1796
    %v1866 = vpop.f32.mrb[0].mxu0
    %v1867 = vadd.f32 %v621, %v1866
    %v1868 = vpop.f32.mrb[0].mxu0
    %1869 = vdwg.mxu0
    %1870 = vrot.lane.b32.xlu0 %v1777, 96
    %v1871 = vpop.permute.xlu0 %1870
    %v1872 = vsel %vm630, %v1781, 0
    %v1874 = vsel %vm630, %v1871, 0
    %1876 = vmatprep.subr.mxu0 0.0
    %1877 = vmatpush1.xpose.msra.mxu0 %v1874
    %1878 = vmatprep.subr.mxu0 0.0
    %1879 = vmatpush1.xpose.msra.mxu0 0.0
    %1880 = vmatprep.subr.mxu0 0.0
    %1881 = vmatpush1.xpose.msra.mxu0 0.0
    %1882 = vmatprep.subr.mxu0 0.0
    %1883 = vmatpush1.xpose.msra.mxu0 0.0
    %1884 = vmatprep.subr.mxu0 0.0
    %1885 = vmatpush1.xpose.msra.mxu0 0.0
    %1886 = vmatprep.subr.mxu0 0.0
    %1887 = vmatpush1.xpose.msra.mxu0 0.0
    %1888 = vmatprep.subr.mxu0 0.0
    %1889 = vmatpush1.xpose.msra.mxu0 0.0
    %1890 = vmatprep.subr.mxu0 0.0
    %1891 = vmatpush1.xpose.msra.mxu0 0.0
    %1892 = vmatprep.subr.mxu0 0.0
    %1893 = vmatpush1.xpose.msra.mxu0 0.0
    %1894 = vmatprep.subr.mxu0 0.0
    %1895 = vmatpush1.xpose.msra.mxu0 0.0
    %1896 = vmatprep.subr.mxu0 0.0
    %1897 = vmatpush1.xpose.msra.mxu0 0.0
    %1898 = vmatprep.subr.mxu0 0.0
    %1899 = vmatpush1.xpose.msra.mxu0 0.0
    %1900 = vmatprep.subr.mxu0 0.0
    %1901 = vmatpush1.xpose.msra.mxu0 0.0
    %1902 = vmatprep.subr.mxu0 0.0
    %1903 = vmatpush1.xpose.msra.mxu0 0.0
    %1904 = vmatprep.subr.mxu0 0.0
    %1905 = vmatpush1.xpose.msra.mxu0 0.0
    %1906 = vmatprep.subr.mxu0 0.0
    %1907 = vmatpush1.xpose.msra.mxu0 0.0
    %1908 = vmatprep.subr.mxu0 0.0
    %1909 = vmatpush1.xpose.msra.mxu0 0.0
    %1910 = vmatprep.subr.mxu0 0.0
    %1911 = vmatpush1.xpose.msra.mxu0 0.0
    %1912 = vmatprep.subr.mxu0 0.0
    %1913 = vmatpush1.xpose.msra.mxu0 0.0
    %1914 = vmatprep.subr.mxu0 0.0
    %1915 = vmatpush1.xpose.msra.mxu0 0.0
    %1916 = vmatprep.subr.mxu0 0.0
    %1917 = vmatpush1.xpose.msra.mxu0 0.0
    %1918 = vmatprep.subr.mxu0 0.0
    %1919 = vmatpush1.xpose.msra.mxu0 0.0
    %1920 = vmatprep.subr.mxu0 0.0
    %1921 = vmatpush1.xpose.msra.mxu0 0.0
    %1922 = vmatprep.subr.mxu0 0.0
    %1923 = vmatpush1.xpose.msra.mxu0 0.0
    %1924 = vmatprep.subr.mxu0 0.0
    %1925 = vmatpush1.xpose.msra.mxu0 0.0
    %1926 = vmatprep.subr.mxu0 0.0
    %1927 = vmatpush1.xpose.msra.mxu0 0.0
    %1928 = vmatprep.subr.mxu0 0.0
    %1929 = vmatpush1.xpose.msra.mxu0 0.0
    %1930 = vmatprep.subr.mxu0 0.0
    %1931 = vmatpush1.xpose.msra.mxu0 0.0
    %1932 = vmatprep.subr.mxu0 0.0
    %1933 = vmatpush1.xpose.msra.mxu0 0.0
    %1934 = vmatprep.subr.mxu0 0.0
    %1935 = vmatpush1.xpose.msra.mxu0 0.0
    %1936 = vmatprep.subr.mxu0 0.0
    %1937 = vmatpush1.xpose.msra.mxu0 0.0
    %1938 = vmatprep.subr.mxu0 0.0
    %1939 = vmatpush1.xpose.msra.mxu0 0.0
    %1940 = vmatprep.mubr.f32.mxu0 0.0
    %1941 = vmatmul.mubr.f32.gmra.mrb[0].mxu0 %v1872
    %v1942 = vpop.f32.mrb[0].mxu0
    %v1943 = vadd.f32 %v625, %v1942
    %v1944 = vpop.f32.mrb[0].mxu0
    %1945 = vdwg.mxu0
    %1946 = vrot.lane.b32.xlu0 %v1791, 96
    %v1947 = vpop.permute.xlu0 %1946
    %v1948 = vsel %vm630, %v1785, 0
    %v1950 = vsel %vm630, %v1947, 0
    %1952 = vmatprep.subr.mxu0 0.0
    %1953 = vmatpush1.xpose.msra.mxu0 %v1950
    %1954 = vmatprep.subr.mxu0 0.0
    %1955 = vmatpush1.xpose.msra.mxu0 0.0
    %1956 = vmatprep.subr.mxu0 0.0
    %1957 = vmatpush1.xpose.msra.mxu0 0.0
    %1958 = vmatprep.subr.mxu0 0.0
    %1959 = vmatpush1.xpose.msra.mxu0 0.0
    %1960 = vmatprep.subr.mxu0 0.0
    %1961 = vmatpush1.xpose.msra.mxu0 0.0
    %1962 = vmatprep.subr.mxu0 0.0
    %1963 = vmatpush1.xpose.msra.mxu0 0.0
    %1964 = vmatprep.subr.mxu0 0.0
    %1965 = vmatpush1.xpose.msra.mxu0 0.0
    %1966 = vmatprep.subr.mxu0 0.0
    %1967 = vmatpush1.xpose.msra.mxu0 0.0
    %1968 = vmatprep.subr.mxu0 0.0
    %1969 = vmatpush1.xpose.msra.mxu0 0.0
    %1970 = vmatprep.subr.mxu0 0.0
    %1971 = vmatpush1.xpose.msra.mxu0 0.0
    %1972 = vmatprep.subr.mxu0 0.0
    %1973 = vmatpush1.xpose.msra.mxu0 0.0
    %1974 = vmatprep.subr.mxu0 0.0
    %1975 = vmatpush1.xpose.msra.mxu0 0.0
    %1976 = vmatprep.subr.mxu0 0.0
    %1977 = vmatpush1.xpose.msra.mxu0 0.0
    %1978 = vmatprep.subr.mxu0 0.0
    %1979 = vmatpush1.xpose.msra.mxu0 0.0
    %1980 = vmatprep.subr.mxu0 0.0
    %1981 = vmatpush1.xpose.msra.mxu0 0.0
    %1982 = vmatprep.subr.mxu0 0.0
    %1983 = vmatpush1.xpose.msra.mxu0 0.0
    %1984 = vmatprep.subr.mxu0 0.0
    %1985 = vmatpush1.xpose.msra.mxu0 0.0
    %1986 = vmatprep.subr.mxu0 0.0
    %1987 = vmatpush1.xpose.msra.mxu0 0.0
    %1988 = vmatprep.subr.mxu0 0.0
    %1989 = vmatpush1.xpose.msra.mxu0 0.0
    %1990 = vmatprep.subr.mxu0 0.0
    %1991 = vmatpush1.xpose.msra.mxu0 0.0
    %1992 = vmatprep.subr.mxu0 0.0
    %1993 = vmatpush1.xpose.msra.mxu0 0.0
    %1994 = vmatprep.subr.mxu0 0.0
    %1995 = vmatpush1.xpose.msra.mxu0 0.0
    %1996 = vmatprep.subr.mxu0 0.0
    %1997 = vmatpush1.xpose.msra.mxu0 0.0
    %1998 = vmatprep.subr.mxu0 0.0
    %1999 = vmatpush1.xpose.msra.mxu0 0.0
    %2000 = vmatprep.subr.mxu0 0.0
    %2001 = vmatpush1.xpose.msra.mxu0 0.0
    %2002 = vmatprep.subr.mxu0 0.0
    %2003 = vmatpush1.xpose.msra.mxu0 0.0
    %2004 = vmatprep.subr.mxu0 0.0
    %2005 = vmatpush1.xpose.msra.mxu0 0.0
    %2006 = vmatprep.subr.mxu0 0.0
    %2007 = vmatpush1.xpose.msra.mxu0 0.0
    %2008 = vmatprep.subr.mxu0 0.0
    %2009 = vmatpush1.xpose.msra.mxu0 0.0
    %2010 = vmatprep.subr.mxu0 0.0
    %2011 = vmatpush1.xpose.msra.mxu0 0.0
    %2012 = vmatprep.subr.mxu0 0.0
    %2013 = vmatpush1.xpose.msra.mxu0 0.0
    %2014 = vmatprep.subr.mxu0 0.0
    %2015 = vmatpush1.xpose.msra.mxu0 0.0
    %2016 = vmatprep.mubr.f32.mxu0 0.0
    %2017 = vmatmul.mubr.f32.gmra.mrb[0].mxu0 %v1948
    %v2018 = vpop.f32.mrb[0].mxu0
    %v2019 = vadd.f32 %v621, %v2018
    %v2020 = vpop.f32.mrb[0].mxu0
    %2021 = vdwg.mxu0
    %2022 = vrot.lane.b32.xlu0 %v1793, 96
    %v2023 = vpop.permute.xlu0 %2022
    %v2024 = vsel %vm630, %v1787, 0
    %v2026 = vsel %vm630, %v2023, 0
    %2028 = vmatprep.subr.mxu0 0.0
    %2029 = vmatpush1.xpose.msra.mxu0 %v2026
    %2030 = vmatprep.subr.mxu0 0.0
    %2031 = vmatpush1.xpose.msra.mxu0 0.0
    %2032 = vmatprep.subr.mxu0 0.0
    %2033 = vmatpush1.xpose.msra.mxu0 0.0
    %2034 = vmatprep.subr.mxu0 0.0
    %2035 = vmatpush1.xpose.msra.mxu0 0.0
    %2036 = vmatprep.subr.mxu0 0.0
    %2037 = vmatpush1.xpose.msra.mxu0 0.0
    %2038 = vmatprep.subr.mxu0 0.0
    %2039 = vmatpush1.xpose.msra.mxu0 0.0
    %2040 = vmatprep.subr.mxu0 0.0
    %2041 = vmatpush1.xpose.msra.mxu0 0.0
    %2042 = vmatprep.subr.mxu0 0.0
    %2043 = vmatpush1.xpose.msra.mxu0 0.0
    %2044 = vmatprep.subr.mxu0 0.0
    %2045 = vmatpush1.xpose.msra.mxu0 0.0
    %2046 = vmatprep.subr.mxu0 0.0
    %2047 = vmatpush1.xpose.msra.mxu0 0.0
    %2048 = vmatprep.subr.mxu0 0.0
    %2049 = vmatpush1.xpose.msra.mxu0 0.0
    %2050 = vmatprep.subr.mxu0 0.0
    %2051 = vmatpush1.xpose.msra.mxu0 0.0
    %2052 = vmatprep.subr.mxu0 0.0
    %2053 = vmatpush1.xpose.msra.mxu0 0.0
    %2054 = vmatprep.subr.mxu0 0.0
    %2055 = vmatpush1.xpose.msra.mxu0 0.0
    %2056 = vmatprep.subr.mxu0 0.0
    %2057 = vmatpush1.xpose.msra.mxu0 0.0
    %2058 = vmatprep.subr.mxu0 0.0
    %2059 = vmatpush1.xpose.msra.mxu0 0.0
    %2060 = vmatprep.subr.mxu0 0.0
    %2061 = vmatpush1.xpose.msra.mxu0 0.0
    %2062 = vmatprep.subr.mxu0 0.0
    %2063 = vmatpush1.xpose.msra.mxu0 0.0
    %2064 = vmatprep.subr.mxu0 0.0
    %2065 = vmatpush1.xpose.msra.mxu0 0.0
    %2066 = vmatprep.subr.mxu0 0.0
    %2067 = vmatpush1.xpose.msra.mxu0 0.0
    %2068 = vmatprep.subr.mxu0 0.0
    %2069 = vmatpush1.xpose.msra.mxu0 0.0
    %2070 = vmatprep.subr.mxu0 0.0
    %2071 = vmatpush1.xpose.msra.mxu0 0.0
    %2072 = vmatprep.subr.mxu0 0.0
    %2073 = vmatpush1.xpose.msra.mxu0 0.0
    %2074 = vmatprep.subr.mxu0 0.0
    %2075 = vmatpush1.xpose.msra.mxu0 0.0
    %2076 = vmatprep.subr.mxu0 0.0
    %2077 = vmatpush1.xpose.msra.mxu0 0.0
    %2078 = vmatprep.subr.mxu0 0.0
    %2079 = vmatpush1.xpose.msra.mxu0 0.0
    %2080 = vmatprep.subr.mxu0 0.0
    %2081 = vmatpush1.xpose.msra.mxu0 0.0
    %2082 = vmatprep.subr.mxu0 0.0
    %2083 = vmatpush1.xpose.msra.mxu0 0.0
    %2084 = vmatprep.subr.mxu0 0.0
    %2085 = vmatpush1.xpose.msra.mxu0 0.0
    %2086 = vmatprep.subr.mxu0 0.0
    %2087 = vmatpush1.xpose.msra.mxu0 0.0
    %2088 = vmatprep.subr.mxu0 0.0
    %2089 = vmatpush1.xpose.msra.mxu0 0.0
    %2090 = vmatprep.subr.mxu0 0.0
    %2091 = vmatpush1.xpose.msra.mxu0 0.0
    %2092 = vmatprep.mubr.f32.mxu0 0.0
    %2093 = vmatmul.mubr.f32.gmra.mrb[0].mxu0 %v2024
    %v2094 = vpop.f32.mrb[0].mxu0
    %v2095 = vadd.f32 %v625, %v2094
    %v2096 = vpop.f32.mrb[0].mxu0
    %2097 = vdwg.mxu0
    %v2098 = vsel %vm933, %v1867, -inf
    %2099 = vmax.xlane.f32.xlu0 %v2098
    %v2100 = vpop.xlane.xlu0 %2099
    %v2101 = vsel %vm933, %v1943, -inf
    %2102 = vmax.xlane.f32.xlu0 %v2101
    %v2103 = vpop.xlane.xlu0 %2102
    %v2104 = vsel %vm933, %v2019, -inf
    %2105 = vmax.xlane.f32.xlu0 %v2104
    %v2106 = vpop.xlane.xlu0 %2105
    %v2107 = vsel %vm933, %v2095, -inf
    %2108 = vmax.xlane.f32.xlu0 %v2107
    %v2109 = vpop.xlane.xlu0 %2108
    %v2110 = vsub.f32 %v1867, %v2100
    %v2111 = vsub.f32 %v1943, %v2103
    %v2112 = vsub.f32 %v2019, %v2106
    %v2113 = vsub.f32 %v2095, %v2109
    %v2114 = vmul.f32 %v2110, 1.442695
    %v2115 = vpow.pop %v2114
    %v2116 = vmul.f32 %v2111, 1.442695
    %v2117 = vpow.pop %v2116
    %v2118 = vmul.f32 %v2112, 1.442695
    %v2119 = vpow.pop %v2118
    %v2120 = vmul.f32 %v2113, 1.442695
    %v2121 = vpow.pop %v2120
    %v2122 = vsel %vm933, %v2115, 0.0
    %2123 = vadd.xlane.f32.xlu0 %v2122
    %v2124 = vpop.xlane.xlu0 %2123
    %v2125 = vsel %vm933, %v2117, 0.0
    %2126 = vadd.xlane.f32.xlu0 %v2125
    %v2127 = vpop.xlane.xlu0 %2126
    %v2128 = vsel %vm933, %v2119, 0.0
    %2129 = vadd.xlane.f32.xlu0 %v2128
    %v2130 = vpop.xlane.xlu0 %2129
    %v2131 = vsel %vm933, %v2121, 0.0
    %2132 = vadd.xlane.f32.xlu0 %v2131
    %v2133 = vpop.xlane.xlu0 %2132
    %v2134 = vrcp.pop %v2124
    %v2135 = vrcp.pop %v2127
    %v2136 = vrcp.pop %v2130
    %v2137 = vrcp.pop %v2133
    %v2138 = vmul.f32 %v2115, %v2134
    %v2139 = vmul.f32 %v2117, %v2135
    %v2140 = vmul.f32 %v2119, %v2136
    %v2141 = vmul.f32 %v2121, %v2137
    %2142 = vrot.lane.b32.xlu0 %v1772, 64
    %v2143 = vpop.permute.xlu0 %2142
    %v2146 = vsel %vm933, %v2138, 0
    %2148 = vmatprep.subr.mxu0 0.0
    %2149 = vmatpush1.msra.mxu0 %v2143
    %2150 = vmatprep.subr.mxu0 0.0
    %2151 = vmatpush1.msra.mxu0 0.0
    %2152 = vmatprep.subr.mxu0 0.0
    %2153 = vmatpush1.msra.mxu0 0.0
    %2154 = vmatprep.subr.mxu0 0.0
    %2155 = vmatpush1.msra.mxu0 0.0
    %2156 = vmatprep.subr.mxu0 0.0
    %2157 = vmatpush1.msra.mxu0 0.0
    %2158 = vmatprep.subr.mxu0 0.0
    %2159 = vmatpush1.msra.mxu0 0.0
    %2160 = vmatprep.subr.mxu0 0.0
    %2161 = vmatpush1.msra.mxu0 0.0
    %2162 = vmatprep.subr.mxu0 0.0
    %2163 = vmatpush1.msra.mxu0 0.0
    %2164 = vmatprep.subr.mxu0 0.0
    %2165 = vmatpush1.msra.mxu0 0.0
    %2166 = vmatprep.subr.mxu0 0.0
    %2167 = vmatpush1.msra.mxu0 0.0
    %2168 = vmatprep.subr.mxu0 0.0
    %2169 = vmatpush1.msra.mxu0 0.0
    %2170 = vmatprep.subr.mxu0 0.0
    %2171 = vmatpush1.msra.mxu0 0.0
    %2172 = vmatprep.subr.mxu0 0.0
    %2173 = vmatpush1.msra.mxu0 0.0
    %2174 = vmatprep.subr.mxu0 0.0
    %2175 = vmatpush1.msra.mxu0 0.0
    %2176 = vmatprep.subr.mxu0 0.0
    %2177 = vmatpush1.msra.mxu0 0.0
    %2178 = vmatprep.subr.mxu0 0.0
    %2179 = vmatpush1.msra.mxu0 0.0
    %2180 = vmatprep.subr.mxu0 0.0
    %2181 = vmatpush1.msra.mxu0 0.0
    %2182 = vmatprep.subr.mxu0 0.0
    %2183 = vmatpush1.msra.mxu0 0.0
    %2184 = vmatprep.subr.mxu0 0.0
    %2185 = vmatpush1.msra.mxu0 0.0
    %2186 = vmatprep.subr.mxu0 0.0
    %2187 = vmatpush1.msra.mxu0 0.0
    %2188 = vmatprep.subr.mxu0 0.0
    %2189 = vmatpush1.msra.mxu0 0.0
    %2190 = vmatprep.subr.mxu0 0.0
    %2191 = vmatpush1.msra.mxu0 0.0
    %2192 = vmatprep.subr.mxu0 0.0
    %2193 = vmatpush1.msra.mxu0 0.0
    %2194 = vmatprep.subr.mxu0 0.0
    %2195 = vmatpush1.msra.mxu0 0.0
    %2196 = vmatprep.subr.mxu0 0.0
    %2197 = vmatpush1.msra.mxu0 0.0
    %2198 = vmatprep.subr.mxu0 0.0
    %2199 = vmatpush1.msra.mxu0 0.0
    %2200 = vmatprep.subr.mxu0 0.0
    %2201 = vmatpush1.msra.mxu0 0.0
    %2202 = vmatprep.subr.mxu0 0.0
    %2203 = vmatpush1.msra.mxu0 0.0
    %2204 = vmatprep.subr.mxu0 0.0
    %2205 = vmatpush1.msra.mxu0 0.0
    %2206 = vmatprep.subr.mxu0 0.0
    %2207 = vmatpush1.msra.mxu0 0.0
    %2208 = vmatprep.subr.mxu0 0.0
    %2209 = vmatpush1.msra.mxu0 0.0
    %2210 = vmatprep.subr.mxu0 0.0
    %2211 = vmatpush1.msra.mxu0 0.0
    %2212 = vmatprep.mubr.f32.mxu0 0.0
    %2213 = vmatmul.mubr.f32.gmra.mrb[0].mxu0 %v2146
    %v2214 = vpop.f32.mrb[0].mxu0
    %v2215 = vadd.f32 0.0, %v2214
    %v2216 = vpop.f32.mrb[0].mxu0
    %2217 = vdwg.mxu0
    %2218 = vrot.lane.b32.xlu0 %v1777, 64
    %v2219 = vpop.permute.xlu0 %2218
    %v2222 = vsel %vm933, %v2139, 0
    %2224 = vmatprep.subr.mxu0 0.0
    %2225 = vmatpush1.msra.mxu0 %v2219
    %2226 = vmatprep.subr.mxu0 0.0
    %2227 = vmatpush1.msra.mxu0 0.0
    %2228 = vmatprep.subr.mxu0 0.0
    %2229 = vmatpush1.msra.mxu0 0.0
    %2230 = vmatprep.subr.mxu0 0.0
    %2231 = vmatpush1.msra.mxu0 0.0
    %2232 = vmatprep.subr.mxu0 0.0
    %2233 = vmatpush1.msra.mxu0 0.0
    %2234 = vmatprep.subr.mxu0 0.0
    %2235 = vmatpush1.msra.mxu0 0.0
    %2236 = vmatprep.subr.mxu0 0.0
    %2237 = vmatpush1.msra.mxu0 0.0
    %2238 = vmatprep.subr.mxu0 0.0
    %2239 = vmatpush1.msra.mxu0 0.0
    %2240 = vmatprep.subr.mxu0 0.0
    %2241 = vmatpush1.msra.mxu0 0.0
    %2242 = vmatprep.subr.mxu0 0.0
    %2243 = vmatpush1.msra.mxu0 0.0
    %2244 = vmatprep.subr.mxu0 0.0
    %2245 = vmatpush1.msra.mxu0 0.0
    %2246 = vmatprep.subr.mxu0 0.0
    %2247 = vmatpush1.msra.mxu0 0.0
    %2248 = vmatprep.subr.mxu0 0.0
    %2249 = vmatpush1.msra.mxu0 0.0
    %2250 = vmatprep.subr.mxu0 0.0
    %2251 = vmatpush1.msra.mxu0 0.0
    %2252 = vmatprep.subr.mxu0 0.0
    %2253 = vmatpush1.msra.mxu0 0.0
    %2254 = vmatprep.subr.mxu0 0.0
    %2255 = vmatpush1.msra.mxu0 0.0
    %2256 = vmatprep.subr.mxu0 0.0
    %2257 = vmatpush1.msra.mxu0 0.0
    %2258 = vmatprep.subr.mxu0 0.0
    %2259 = vmatpush1.msra.mxu0 0.0
    %2260 = vmatprep.subr.mxu0 0.0
    %2261 = vmatpush1.msra.mxu0 0.0
    %2262 = vmatprep.subr.mxu0 0.0
    %2263 = vmatpush1.msra.mxu0 0.0
    %2264 = vmatprep.subr.mxu0 0.0
    %2265 = vmatpush1.msra.mxu0 0.0
    %2266 = vmatprep.subr.mxu0 0.0
    %2267 = vmatpush1.msra.mxu0 0.0
    %2268 = vmatprep.subr.mxu0 0.0
    %2269 = vmatpush1.msra.mxu0 0.0
    %2270 = vmatprep.subr.mxu0 0.0
    %2271 = vmatpush1.msra.mxu0 0.0
    %2272 = vmatprep.subr.mxu0 0.0
    %2273 = vmatpush1.msra.mxu0 0.0
    %2274 = vmatprep.subr.mxu0 0.0
    %2275 = vmatpush1.msra.mxu0 0.0
    %2276 = vmatprep.subr.mxu0 0.0
    %2277 = vmatpush1.msra.mxu0 0.0
    %2278 = vmatprep.subr.mxu0 0.0
    %2279 = vmatpush1.msra.mxu0 0.0
    %2280 = vmatprep.subr.mxu0 0.0
    %2281 = vmatpush1.msra.mxu0 0.0
    %2282 = vmatprep.subr.mxu0 0.0
    %2283 = vmatpush1.msra.mxu0 0.0
    %2284 = vmatprep.subr.mxu0 0.0
    %2285 = vmatpush1.msra.mxu0 0.0
    %2286 = vmatprep.subr.mxu0 0.0
    %2287 = vmatpush1.msra.mxu0 0.0
    %2288 = vmatprep.mubr.f32.mxu0 0.0
    %2289 = vmatmul.mubr.f32.gmra.mrb[0].mxu0 %v2222
    %v2290 = vpop.f32.mrb[0].mxu0
    %v2291 = vadd.f32 0.0, %v2290
    %v2292 = vpop.f32.mrb[0].mxu0
    %2293 = vdwg.mxu0
    %2294 = vrot.lane.b32.xlu0 %v1791, 64
    %v2295 = vpop.permute.xlu0 %2294
    %v2298 = vsel %vm933, %v2140, 0
    %2300 = vmatprep.subr.mxu0 0.0
    %2301 = vmatpush1.msra.mxu0 %v2295
    %2302 = vmatprep.subr.mxu0 0.0
    %2303 = vmatpush1.msra.mxu0 0.0
    %2304 = vmatprep.subr.mxu0 0.0
    %2305 = vmatpush1.msra.mxu0 0.0
    %2306 = vmatprep.subr.mxu0 0.0
    %2307 = vmatpush1.msra.mxu0 0.0
    %2308 = vmatprep.subr.mxu0 0.0
    %2309 = vmatpush1.msra.mxu0 0.0
    %2310 = vmatprep.subr.mxu0 0.0
    %2311 = vmatpush1.msra.mxu0 0.0
    %2312 = vmatprep.subr.mxu0 0.0
    %2313 = vmatpush1.msra.mxu0 0.0
    %2314 = vmatprep.subr.mxu0 0.0
    %2315 = vmatpush1.msra.mxu0 0.0
    %2316 = vmatprep.subr.mxu0 0.0
    %2317 = vmatpush1.msra.mxu0 0.0
    %2318 = vmatprep.subr.mxu0 0.0
    %2319 = vmatpush1.msra.mxu0 0.0
    %2320 = vmatprep.subr.mxu0 0.0
    %2321 = vmatpush1.msra.mxu0 0.0
    %2322 = vmatprep.subr.mxu0 0.0
    %2323 = vmatpush1.msra.mxu0 0.0
    %2324 = vmatprep.subr.mxu0 0.0
    %2325 = vmatpush1.msra.mxu0 0.0
    %2326 = vmatprep.subr.mxu0 0.0
    %2327 = vmatpush1.msra.mxu0 0.0
    %2328 = vmatprep.subr.mxu0 0.0
    %2329 = vmatpush1.msra.mxu0 0.0
    %2330 = vmatprep.subr.mxu0 0.0
    %2331 = vmatpush1.msra.mxu0 0.0
    %2332 = vmatprep.subr.mxu0 0.0
    %2333 = vmatpush1.msra.mxu0 0.0
    %2334 = vmatprep.subr.mxu0 0.0
    %2335 = vmatpush1.msra.mxu0 0.0
    %2336 = vmatprep.subr.mxu0 0.0
    %2337 = vmatpush1.msra.mxu0 0.0
    %2338 = vmatprep.subr.mxu0 0.0
    %2339 = vmatpush1.msra.mxu0 0.0
    %2340 = vmatprep.subr.mxu0 0.0
    %2341 = vmatpush1.msra.mxu0 0.0
    %2342 = vmatprep.subr.mxu0 0.0
    %2343 = vmatpush1.msra.mxu0 0.0
    %2344 = vmatprep.subr.mxu0 0.0
    %2345 = vmatpush1.msra.mxu0 0.0
    %2346 = vmatprep.subr.mxu0 0.0
    %2347 = vmatpush1.msra.mxu0 0.0
    %2348 = vmatprep.subr.mxu0 0.0
    %2349 = vmatpush1.msra.mxu0 0.0
    %2350 = vmatprep.subr.mxu0 0.0
    %2351 = vmatpush1.msra.mxu0 0.0
    %2352 = vmatprep.subr.mxu0 0.0
    %2353 = vmatpush1.msra.mxu0 0.0
    %2354 = vmatprep.subr.mxu0 0.0
    %2355 = vmatpush1.msra.mxu0 0.0
    %2356 = vmatprep.subr.mxu0 0.0
    %2357 = vmatpush1.msra.mxu0 0.0
    %2358 = vmatprep.subr.mxu0 0.0
    %2359 = vmatpush1.msra.mxu0 0.0
    %2360 = vmatprep.subr.mxu0 0.0
    %2361 = vmatpush1.msra.mxu0 0.0
    %2362 = vmatprep.subr.mxu0 0.0
    %2363 = vmatpush1.msra.mxu0 0.0
    %2364 = vmatprep.mubr.f32.mxu0 0.0
    %2365 = vmatmul.mubr.f32.gmra.mrb[0].mxu0 %v2298
    %v2366 = vpop.f32.mrb[0].mxu0
    %v2367 = vadd.f32 0.0, %v2366
    %v2368 = vpop.f32.mrb[0].mxu0
    %2369 = vdwg.mxu0
    %2370 = vrot.lane.b32.xlu0 %v1793, 64
    %v2371 = vpop.permute.xlu0 %2370
    %v2374 = vsel %vm933, %v2141, 0
    %2376 = vmatprep.subr.mxu0 0.0
    %2377 = vmatpush1.msra.mxu0 %v2371
    %2378 = vmatprep.subr.mxu0 0.0
    %2379 = vmatpush1.msra.mxu0 0.0
    %2380 = vmatprep.subr.mxu0 0.0
    %2381 = vmatpush1.msra.mxu0 0.0
    %2382 = vmatprep.subr.mxu0 0.0
    %2383 = vmatpush1.msra.mxu0 0.0
    %2384 = vmatprep.subr.mxu0 0.0
    %2385 = vmatpush1.msra.mxu0 0.0
    %2386 = vmatprep.subr.mxu0 0.0
    %2387 = vmatpush1.msra.mxu0 0.0
    %2388 = vmatprep.subr.mxu0 0.0
    %2389 = vmatpush1.msra.mxu0 0.0
    %2390 = vmatprep.subr.mxu0 0.0
    %2391 = vmatpush1.msra.mxu0 0.0
    %2392 = vmatprep.subr.mxu0 0.0
    %2393 = vmatpush1.msra.mxu0 0.0
    %2394 = vmatprep.subr.mxu0 0.0
    %2395 = vmatpush1.msra.mxu0 0.0
    %2396 = vmatprep.subr.mxu0 0.0
    %2397 = vmatpush1.msra.mxu0 0.0
    %2398 = vmatprep.subr.mxu0 0.0
    %2399 = vmatpush1.msra.mxu0 0.0
    %2400 = vmatprep.subr.mxu0 0.0
    %2401 = vmatpush1.msra.mxu0 0.0
    %2402 = vmatprep.subr.mxu0 0.0
    %2403 = vmatpush1.msra.mxu0 0.0
    %2404 = vmatprep.subr.mxu0 0.0
    %2405 = vmatpush1.msra.mxu0 0.0
    %2406 = vmatprep.subr.mxu0 0.0
    %2407 = vmatpush1.msra.mxu0 0.0
    %2408 = vmatprep.subr.mxu0 0.0
    %2409 = vmatpush1.msra.mxu0 0.0
    %2410 = vmatprep.subr.mxu0 0.0
    %2411 = vmatpush1.msra.mxu0 0.0
    %2412 = vmatprep.subr.mxu0 0.0
    %2413 = vmatpush1.msra.mxu0 0.0
    %2414 = vmatprep.subr.mxu0 0.0
    %2415 = vmatpush1.msra.mxu0 0.0
    %2416 = vmatprep.subr.mxu0 0.0
    %2417 = vmatpush1.msra.mxu0 0.0
    %2418 = vmatprep.subr.mxu0 0.0
    %2419 = vmatpush1.msra.mxu0 0.0
    %2420 = vmatprep.subr.mxu0 0.0
    %2421 = vmatpush1.msra.mxu0 0.0
    %2422 = vmatprep.subr.mxu0 0.0
    %2423 = vmatpush1.msra.mxu0 0.0
    %2424 = vmatprep.subr.mxu0 0.0
    %2425 = vmatpush1.msra.mxu0 0.0
    %2426 = vmatprep.subr.mxu0 0.0
    %2427 = vmatpush1.msra.mxu0 0.0
    %2428 = vmatprep.subr.mxu0 0.0
    %2429 = vmatpush1.msra.mxu0 0.0
    %2430 = vmatprep.subr.mxu0 0.0
    %2431 = vmatpush1.msra.mxu0 0.0
    %2432 = vmatprep.subr.mxu0 0.0
    %2433 = vmatpush1.msra.mxu0 0.0
    %2434 = vmatprep.subr.mxu0 0.0
    %2435 = vmatpush1.msra.mxu0 0.0
    %2436 = vmatprep.subr.mxu0 0.0
    %2437 = vmatpush1.msra.mxu0 0.0
    %2438 = vmatprep.subr.mxu0 0.0
    %2439 = vmatpush1.msra.mxu0 0.0
    %2440 = vmatprep.mubr.f32.mxu0 0.0
    %2441 = vmatmul.mubr.f32.gmra.mrb[0].mxu0 %v2374
    %v2442 = vpop.f32.mrb[0].mxu0
    %v2443 = vadd.f32 0.0, %v2442
    %v2444 = vpop.f32.mrb[0].mxu0
    %2445 = vdwg.mxu0
    %2448 = vrot.lane.b32.xlu0 %v2367, 16
    %v2449 = vpop.permute.xlu0 %2448
    %2450 = vrot.lane.b32.xlu0 %v2443, 16
    %v2451 = vpop.permute.xlu0 %2450
    %v2454 = vsel %vm630, %v2215, %v2449
    %v2455 = vsel %vm630, %v2291, %v2451
    %v2456 = vlaneseq
    %v2457 = vshrl.u32 %v2456, 7
    %v2458 = vsub.s32 0, %v2457
    %v2459 = vrot.slane %v1694, %v2458
    %v2461 = vsel %vm405, %v2454, 0
    %v2464 = vsel %vm405, %v2455, 0
    %2466 = vmatprep.subr.mxu0 0.0
    %2467 = vmatpush1.msra.mxu0 %v1673
    %2468 = vmatprep.subr.mxu0 0.0
    %2469 = vmatpush1.msra.mxu0 %v1674
    %2470 = vmatprep.subr.mxu0 0.0
    %2471 = vmatpush1.msra.mxu0 %v1675
    %2472 = vmatprep.subr.mxu0 0.0
    %2473 = vmatpush1.msra.mxu0 %v1676
    %2474 = vmatprep.subr.mxu0 0.0
    %2475 = vmatpush1.msra.mxu0 0.0
    %2476 = vmatprep.subr.mxu0 0.0
    %2477 = vmatpush1.msra.mxu0 0.0
    %2478 = vmatprep.subr.mxu0 0.0
    %2479 = vmatpush1.msra.mxu0 0.0
    %2480 = vmatprep.subr.mxu0 0.0
    %2481 = vmatpush1.msra.mxu0 0.0
    %2482 = vmatprep.subr.mxu0 0.0
    %2483 = vmatpush1.msra.mxu0 0.0
    %2484 = vmatprep.subr.mxu0 0.0
    %2485 = vmatpush1.msra.mxu0 0.0
    %2486 = vmatprep.subr.mxu0 0.0
    %2487 = vmatpush1.msra.mxu0 0.0
    %2488 = vmatprep.subr.mxu0 0.0
    %2489 = vmatpush1.msra.mxu0 0.0
    %2490 = vmatprep.subr.mxu0 0.0
    %2491 = vmatpush1.msra.mxu0 0.0
    %2492 = vmatprep.subr.mxu0 0.0
    %2493 = vmatpush1.msra.mxu0 0.0
    %2494 = vmatprep.subr.mxu0 0.0
    %2495 = vmatpush1.msra.mxu0 0.0
    %2496 = vmatprep.subr.mxu0 0.0
    %2497 = vmatpush1.msra.mxu0 0.0
    %2498 = vmatprep.subr.mxu0 0.0
    %2499 = vmatpush1.msra.mxu0 0.0
    %2500 = vmatprep.subr.mxu0 0.0
    %2501 = vmatpush1.msra.mxu0 0.0
    %2502 = vmatprep.subr.mxu0 0.0
    %2503 = vmatpush1.msra.mxu0 0.0
    %2504 = vmatprep.subr.mxu0 0.0
    %2505 = vmatpush1.msra.mxu0 0.0
    %2506 = vmatprep.subr.mxu0 0.0
    %2507 = vmatpush1.msra.mxu0 0.0
    %2508 = vmatprep.subr.mxu0 0.0
    %2509 = vmatpush1.msra.mxu0 0.0
    %2510 = vmatprep.subr.mxu0 0.0
    %2511 = vmatpush1.msra.mxu0 0.0
    %2512 = vmatprep.subr.mxu0 0.0
    %2513 = vmatpush1.msra.mxu0 0.0
    %2514 = vmatprep.subr.mxu0 0.0
    %2515 = vmatpush1.msra.mxu0 0.0
    %2516 = vmatprep.subr.mxu0 0.0
    %2517 = vmatpush1.msra.mxu0 0.0
    %2518 = vmatprep.subr.mxu0 0.0
    %2519 = vmatpush1.msra.mxu0 0.0
    %2520 = vmatprep.subr.mxu0 0.0
    %2521 = vmatpush1.msra.mxu0 0.0
    %2522 = vmatprep.subr.mxu0 0.0
    %2523 = vmatpush1.msra.mxu0 0.0
    %2524 = vmatprep.subr.mxu0 0.0
    %2525 = vmatpush1.msra.mxu0 0.0
    %2526 = vmatprep.subr.mxu0 0.0
    %2527 = vmatpush1.msra.mxu0 0.0
    %2528 = vmatprep.subr.mxu0 0.0
    %2529 = vmatpush1.msra.mxu0 0.0
    %2530 = vmatprep.mubr.f32.mxu0 0.0
    %2531 = vmatmul.mubr.f32.gmra.mrb[0].mxu0 %v2461
    %v2532 = vpop.f32.mrb[0].mxu0
    %v2533 = vadd.f32 %v2459, %v2532
    %v2534 = vpop.f32.mrb[0].mxu0
    %2535 = vmatprep.mubr.f32.mxu0 0.0
    %2536 = vmatmul.mubr.f32.gmra.mrb[0].mxu0 %v2464
    %v2537 = vpop.f32.mrb[0].mxu0
    %v2538 = vadd.f32 %v2459, %v2537
    %v2539 = vpop.f32.mrb[0].mxu0
    %2540 = vdwg.mxu0
    %v2541 = vadd.f32 %v1645, %v2533
    %v2542 = vadd.f32 %v1646, %v2538
    %v2543 = vsel %vm405, %v2541, 0.0
    %2544 = vadd.xlane.f32.xlu0 %v2543
    %v2545 = vpop.xlane.xlu0 %2544
    %v2546 = vsel %vm405, %v2542, 0.0
    %2547 = vadd.xlane.f32.xlu0 %v2546
    %v2548 = vpop.xlane.xlu0 %2547
    %v2549 = vmul.f32 %v2545, %v412
    %v2550 = vmul.f32 %v2548, %v412
    %v2551 = vsub.f32 %v2541, %v2549
    %v2552 = vsub.f32 %v2542, %v2550
    %v2553 = vmul.f32 %v2551, %v2551
    %v2554 = vmul.f32 %v2552, %v2552
    %v2555 = vsel %vm405, %v2553, 0.0
    %2556 = vadd.xlane.f32.xlu0 %v2555
    %v2557 = vpop.xlane.xlu0 %2556
    %v2558 = vsel %vm405, %v2554, 0.0
    %2559 = vadd.xlane.f32.xlu0 %v2558
    %v2560 = vpop.xlane.xlu0 %2559
    %v2561 = vmul.f32 %v2557, %v412
    %v2562 = vmul.f32 %v2560, %v412
    %v2563 = vadd.f32 %v2561, 1e-12
    %v2564 = vadd.f32 %v2562, 1e-12
    %v2565 = vrsqrt.pop %v2563
    %v2566 = vrsqrt.pop %v2564
    %v2567 = vmul.f32 %v2551, %v2565
    %v2568 = vmul.f32 %v2552, %v2566
    %v2569 = vlaneseq
    %v2570 = vshrl.u32 %v2569, 7
    %v2571 = vsub.s32 1, %v2570
    %v2572 = vrot.slane %v1694, %v2571
    %v2573 = vmul.f32 %v2567, %v2572
    %v2574 = vmul.f32 %v2568, %v2572
    %v2575 = vlaneseq
    %v2576 = vshrl.u32 %v2575, 7
    %v2577 = vsub.s32 2, %v2576
    %v2578 = vrot.slane %v1694, %v2577
    %v2579 = vadd.f32 %v2573, %v2578
    %v2580 = vadd.f32 %v2574, %v2578
    %v2582 = vlaneseq
    %v2583 = vshrl.u32 %v2582, 7
    %v2584 = vsub.s32 0, %v2583
    %v2585 = vrot.slane %v1683, %v2584
    %v2588 = vsel %vm405, %v2579, 0
    %v2591 = vsel %vm405, %v2580, 0
    %2593 = vmatprep.subr.mxu0 0.0
    %2594 = vmatpush1.msra.mxu0 %v1678
    %2595 = vmatprep.subr.mxu0 0.0
    %2596 = vmatpush1.msra.mxu0 %v1679
    %2597 = vmatprep.subr.mxu0 0.0
    %2598 = vmatpush1.msra.mxu0 %v1680
    %2599 = vmatprep.subr.mxu0 0.0
    %2600 = vmatpush1.msra.mxu0 %v1681
    %2601 = vmatprep.subr.mxu0 0.0
    %2602 = vmatpush1.msra.mxu0 0.0
    %2603 = vmatprep.subr.mxu0 0.0
    %2604 = vmatpush1.msra.mxu0 0.0
    %2605 = vmatprep.subr.mxu0 0.0
    %2606 = vmatpush1.msra.mxu0 0.0
    %2607 = vmatprep.subr.mxu0 0.0
    %2608 = vmatpush1.msra.mxu0 0.0
    %2609 = vmatprep.subr.mxu0 0.0
    %2610 = vmatpush1.msra.mxu0 0.0
    %2611 = vmatprep.subr.mxu0 0.0
    %2612 = vmatpush1.msra.mxu0 0.0
    %2613 = vmatprep.subr.mxu0 0.0
    %2614 = vmatpush1.msra.mxu0 0.0
    %2615 = vmatprep.subr.mxu0 0.0
    %2616 = vmatpush1.msra.mxu0 0.0
    %2617 = vmatprep.subr.mxu0 0.0
    %2618 = vmatpush1.msra.mxu0 0.0
    %2619 = vmatprep.subr.mxu0 0.0
    %2620 = vmatpush1.msra.mxu0 0.0
    %2621 = vmatprep.subr.mxu0 0.0
    %2622 = vmatpush1.msra.mxu0 0.0
    %2623 = vmatprep.subr.mxu0 0.0
    %2624 = vmatpush1.msra.mxu0 0.0
    %2625 = vmatprep.subr.mxu0 0.0
    %2626 = vmatpush1.msra.mxu0 0.0
    %2627 = vmatprep.subr.mxu0 0.0
    %2628 = vmatpush1.msra.mxu0 0.0
    %2629 = vmatprep.subr.mxu0 0.0
    %2630 = vmatpush1.msra.mxu0 0.0
    %2631 = vmatprep.subr.mxu0 0.0
    %2632 = vmatpush1.msra.mxu0 0.0
    %2633 = vmatprep.subr.mxu0 0.0
    %2634 = vmatpush1.msra.mxu0 0.0
    %2635 = vmatprep.subr.mxu0 0.0
    %2636 = vmatpush1.msra.mxu0 0.0
    %2637 = vmatprep.subr.mxu0 0.0
    %2638 = vmatpush1.msra.mxu0 0.0
    %2639 = vmatprep.subr.mxu0 0.0
    %2640 = vmatpush1.msra.mxu0 0.0
    %2641 = vmatprep.subr.mxu0 0.0
    %2642 = vmatpush1.msra.mxu0 0.0
    %2643 = vmatprep.subr.mxu0 0.0
    %2644 = vmatpush1.msra.mxu0 0.0
    %2645 = vmatprep.subr.mxu0 0.0
    %2646 = vmatpush1.msra.mxu0 0.0
    %2647 = vmatprep.subr.mxu0 0.0
    %2648 = vmatpush1.msra.mxu0 0.0
    %2649 = vmatprep.subr.mxu0 0.0
    %2650 = vmatpush1.msra.mxu0 0.0
    %2651 = vmatprep.subr.mxu0 0.0
    %2652 = vmatpush1.msra.mxu0 0.0
    %2653 = vmatprep.subr.mxu0 0.0
    %2654 = vmatpush1.msra.mxu0 0.0
    %2655 = vmatprep.subr.mxu0 0.0
    %2656 = vmatpush1.msra.mxu0 0.0
    %2657 = vmatprep.mubr.f32.mxu0 0.0
    %2658 = vmatmul.mubr.f32.gmra.mrb[0].mxu0 %v2588
    %v2659 = vpop.f32.mrb[0].mxu0
    %v2660 = vadd.f32 %v2585, %v2659
    %v2661 = vpop.f32.mrb[0].mxu0
    %2662 = vmatprep.mubr.f32.mxu0 0.0
    %2663 = vmatmul.mubr.f32.gmra.mrb[0].mxu0 %v2591
    %v2664 = vpop.f32.mrb[0].mxu0
    %v2665 = vadd.f32 %v2585, %v2664
    %v2666 = vpop.f32.mrb[0].mxu0
    %2667 = vdwg.mxu0
    %v2668 = vmul.f32 %v2660, %v2660
    %v2669 = vmul.f32 %v2665, %v2665
    %v2670 = vmul.f32 %v2660, %v2668
    %v2671 = vmul.f32 %v2665, %v2669
    %v2672 = vmul.f32 %v2670, 0.044715
    %v2673 = vmul.f32 %v2671, 0.044715
    %v2674 = vadd.f32 %v2660, %v2672
    %v2675 = vadd.f32 %v2665, %v2673
    %v2676 = vmul.f32 %v2674, 0.7978846
    %v2677 = vmul.f32 %v2675, 0.7978846
    %v2678 = vtanh.pop %v2676
    %v2679 = vtanh.pop %v2677
    %v2680 = vadd.f32 %v2678, 1.0
    %v2681 = vadd.f32 %v2679, 1.0
    %v2682 = vmul.f32 %v2680, 0.5
    %v2683 = vmul.f32 %v2681, 0.5
    %v2684 = vmul.f32 %v2660, %v2682
    %v2685 = vmul.f32 %v2665, %v2683
    %v2686 = vlaneseq
    %v2687 = vshrl.u32 %v2686, 7
    %v2688 = vsub.s32 3, %v2687
    %v2689 = vrot.slane %v1694, %v2688
    %v2691 = vsel %vm459, %v2684, 0
    %v2694 = vsel %vm459, %v2685, 0
    %2696 = vmatprep.subr.mxu0 0.0
    %2697 = vmatpush1.msra.mxu0 %v1685
    %2698 = vmatprep.subr.mxu0 0.0
    %2699 = vmatpush1.msra.mxu0 %v1686
    %2700 = vmatprep.subr.mxu0 0.0
    %2701 = vmatpush1.msra.mxu0 %v1687
    %2702 = vmatprep.subr.mxu0 0.0
    %2703 = vmatpush1.msra.mxu0 %v1688
    %2704 = vmatprep.subr.mxu0 0.0
    %2705 = vmatpush1.msra.mxu0 %v1689
    %2706 = vmatprep.subr.mxu0 0.0
    %2707 = vmatpush1.msra.mxu0 %v1690
    %2708 = vmatprep.subr.mxu0 0.0
    %2709 = vmatpush1.msra.mxu0 %v1691
    %2710 = vmatprep.subr.mxu0 0.0
    %2711 = vmatpush1.msra.mxu0 %v1692
    %2712 = vmatprep.subr.mxu0 0.0
    %2713 = vmatpush1.msra.mxu0 0.0
    %2714 = vmatprep.subr.mxu0 0.0
    %2715 = vmatpush1.msra.mxu0 0.0
    %2716 = vmatprep.subr.mxu0 0.0
    %2717 = vmatpush1.msra.mxu0 0.0
    %2718 = vmatprep.subr.mxu0 0.0
    %2719 = vmatpush1.msra.mxu0 0.0
    %2720 = vmatprep.subr.mxu0 0.0
    %2721 = vmatpush1.msra.mxu0 0.0
    %2722 = vmatprep.subr.mxu0 0.0
    %2723 = vmatpush1.msra.mxu0 0.0
    %2724 = vmatprep.subr.mxu0 0.0
    %2725 = vmatpush1.msra.mxu0 0.0
    %2726 = vmatprep.subr.mxu0 0.0
    %2727 = vmatpush1.msra.mxu0 0.0
    %2728 = vmatprep.subr.mxu0 0.0
    %2729 = vmatpush1.msra.mxu0 0.0
    %2730 = vmatprep.subr.mxu0 0.0
    %2731 = vmatpush1.msra.mxu0 0.0
    %2732 = vmatprep.subr.mxu0 0.0
    %2733 = vmatpush1.msra.mxu0 0.0
    %2734 = vmatprep.subr.mxu0 0.0
    %2735 = vmatpush1.msra.mxu0 0.0
    %2736 = vmatprep.subr.mxu0 0.0
    %2737 = vmatpush1.msra.mxu0 0.0
    %2738 = vmatprep.subr.mxu0 0.0
    %2739 = vmatpush1.msra.mxu0 0.0
    %2740 = vmatprep.subr.mxu0 0.0
    %2741 = vmatpush1.msra.mxu0 0.0
    %2742 = vmatprep.subr.mxu0 0.0
    %2743 = vmatpush1.msra.mxu0 0.0
    %2744 = vmatprep.subr.mxu0 0.0
    %2745 = vmatpush1.msra.mxu0 0.0
    %2746 = vmatprep.subr.mxu0 0.0
    %2747 = vmatpush1.msra.mxu0 0.0
    %2748 = vmatprep.subr.mxu0 0.0
    %2749 = vmatpush1.msra.mxu0 0.0
    %2750 = vmatprep.subr.mxu0 0.0
    %2751 = vmatpush1.msra.mxu0 0.0
    %2752 = vmatprep.subr.mxu0 0.0
    %2753 = vmatpush1.msra.mxu0 0.0
    %2754 = vmatprep.subr.mxu0 0.0
    %2755 = vmatpush1.msra.mxu0 0.0
    %2756 = vmatprep.subr.mxu0 0.0
    %2757 = vmatpush1.msra.mxu0 0.0
    %2758 = vmatprep.subr.mxu0 0.0
    %2759 = vmatpush1.msra.mxu0 0.0
    %2760 = vmatprep.mubr.f32.mxu0 0.0
    %2761 = vmatmul.mubr.f32.gmra.mrb[0].mxu0 %v2691
    %v2762 = vpop.f32.mrb[0].mxu0
    %v2763 = vadd.f32 %v2689, %v2762
    %v2764 = vpop.f32.mrb[0].mxu0
    %2765 = vmatprep.mubr.f32.mxu0 0.0
    %2766 = vmatmul.mubr.f32.gmra.mrb[0].mxu0 %v2694
    %v2767 = vpop.f32.mrb[0].mxu0
    %v2768 = vadd.f32 %v2689, %v2767
    %v2769 = vpop.f32.mrb[0].mxu0
    %2770 = vdwg.mxu0
    %v2771 = vadd.f32 %v2579, %v2763
    %v2772 = vadd.f32 %v2580, %v2768
    %v2773 = vsel %vm405, %v2771, 0.0
    %2774 = vadd.xlane.f32.xlu0 %v2773
    %v2775 = vpop.xlane.xlu0 %2774
    %v2776 = vsel %vm405, %v2772, 0.0
    %2777 = vadd.xlane.f32.xlu0 %v2776
    %v2778 = vpop.xlane.xlu0 %2777
    %v2779 = vmul.f32 %v2775, %v412
    %v2780 = vmul.f32 %v2778, %v412
    %v2781 = vsub.f32 %v2771, %v2779
    %v2782 = vsub.f32 %v2772, %v2780
    %v2783 = vmul.f32 %v2781, %v2781
    %v2784 = vmul.f32 %v2782, %v2782
    %v2785 = vsel %vm405, %v2783, 0.0
    %2786 = vadd.xlane.f32.xlu0 %v2785
    %v2787 = vpop.xlane.xlu0 %2786
    %v2788 = vsel %vm405, %v2784, 0.0
    %2789 = vadd.xlane.f32.xlu0 %v2788
    %v2790 = vpop.xlane.xlu0 %2789
    %v2791 = vmul.f32 %v2787, %v412
    %v2792 = vmul.f32 %v2790, %v412
    %v2793 = vadd.f32 %v2791, 1e-12
    %v2794 = vadd.f32 %v2792, 1e-12
    %v2795 = vrsqrt.pop %v2793
    %v2796 = vrsqrt.pop %v2794
    %v2797 = vmul.f32 %v2781, %v2795
    %v2798 = vmul.f32 %v2782, %v2796
    %v2799 = vlaneseq
    %v2800 = vshrl.u32 %v2799, 7
    %v2801 = vsub.s32 4, %v2800
    %v2802 = vrot.slane %v1694, %v2801
    %v2803 = vmul.f32 %v2797, %v2802
    %v2804 = vmul.f32 %v2798, %v2802
    %v2805 = vlaneseq
    %v2806 = vshrl.u32 %v2805, 7
    %v2807 = vsub.s32 5, %v2806
    %v2808 = vrot.slane %v1694, %v2807
    %v2809 = vadd.f32 %v2803, %v2808
    %v2810 = vadd.f32 %v2804, %v2808
    %v2812 = vrot.slane %v2809, 4
    %2813 = vrot.lane.b32.xlu0 %v2812, 32
    %v2814 = vpop.permute.xlu0 %2813
    %2817 = vrot.lane.b32.xlu0 %v2810, 64
    %v2818 = vpop.permute.xlu0 %2817
    %v2820 = vrot.slane %v2810, 4
    %2821 = vrot.lane.b32.xlu0 %v2820, 96
    %v2822 = vpop.permute.xlu0 %2821
    %v2824 = vsel %vm405, %v2809, %v2814
    %v2825 = vsel %vm459, %v2824, %v2818
    %v2826 = vsel %vm461, %v2825, %v2822
    %s2827 = scalar_lea.vmem [#allocation28], 8
    %2828 = vst [vmem:[%s2827] sm:$0xf] %v2826
    %v2829 = vrot.slane %v2810, 7
    %vm2831 = vcmask 1040384
    %v2832 = vsel %vm2831, %v2809, %v2829
    %v2833 = vld [vmem:[#allocation25] sm:$0xff]
    %v2834 = vld [vmem:[#allocation25 + $0x8] sm:$0xff]
    %v2835 = vld [vmem:[#allocation25 + $0x10] sm:$0xff]
    %v2836 = vld [vmem:[#allocation25 + $0x18] sm:$0xff]
    %v2837 = vld [vmem:[#allocation25 + $0x20] sm:$0x1]
    %v2838 = vld [vmem:[#allocation26] sm:$0xff]
    %v2839 = vld [vmem:[#allocation26 + $0x8] sm:$0xff]
    %v2840 = vld [vmem:[#allocation26 + $0x10] sm:$0xff]
    %v2841 = vld [vmem:[#allocation26 + $0x18] sm:$0xff]
    %v2842 = vld [vmem:[#allocation26 + $0x20] sm:$0x1]
    %v2843 = vlaneseq
    %v2844 = vshrl.u32 %v2843, 7
    %v2845 = vsub.s32 0, %v2844
    %v2846 = vrot.slane %v2837, %v2845
    %v2848 = vsel %vm405, %v2832, 0
    %2850 = vmatprep.subr.mxu0 0.0
    %2851 = vmatpush1.msra.mxu0 %v2833
    %2852 = vmatprep.subr.mxu0 0.0
    %2853 = vmatpush1.msra.mxu0 %v2834
    %2854 = vmatprep.subr.mxu0 0.0
    %2855 = vmatpush1.msra.mxu0 %v2835
    %2856 = vmatprep.subr.mxu0 0.0
    %2857 = vmatpush1.msra.mxu0 %v2836
    %2858 = vmatprep.subr.mxu0 0.0
    %2859 = vmatpush1.msra.mxu0 0.0
    %2860 = vmatprep.subr.mxu0 0.0
    %2861 = vmatpush1.msra.mxu0 0.0
    %2862 = vmatprep.subr.mxu0 0.0
    %2863 = vmatpush1.msra.mxu0 0.0
    %2864 = vmatprep.subr.mxu0 0.0
    %2865 = vmatpush1.msra.mxu0 0.0
    %2866 = vmatprep.subr.mxu0 0.0
    %2867 = vmatpush1.msra.mxu0 0.0
    %2868 = vmatprep.subr.mxu0 0.0
    %2869 = vmatpush1.msra.mxu0 0.0
    %2870 = vmatprep.subr.mxu0 0.0
    %2871 = vmatpush1.msra.mxu0 0.0
    %2872 = vmatprep.subr.mxu0 0.0
    %2873 = vmatpush1.msra.mxu0 0.0
    %2874 = vmatprep.subr.mxu0 0.0
    %2875 = vmatpush1.msra.mxu0 0.0
    %2876 = vmatprep.subr.mxu0 0.0
    %2877 = vmatpush1.msra.mxu0 0.0
    %2878 = vmatprep.subr.mxu0 0.0
    %2879 = vmatpush1.msra.mxu0 0.0
    %2880 = vmatprep.subr.mxu0 0.0
    %2881 = vmatpush1.msra.mxu0 0.0
    %2882 = vmatprep.subr.mxu0 0.0
    %2883 = vmatpush1.msra.mxu0 0.0
    %2884 = vmatprep.subr.mxu0 0.0
    %2885 = vmatpush1.msra.mxu0 0.0
    %2886 = vmatprep.subr.mxu0 0.0
    %2887 = vmatpush1.msra.mxu0 0.0
    %2888 = vmatprep.subr.mxu0 0.0
    %2889 = vmatpush1.msra.mxu0 0.0
    %2890 = vmatprep.subr.mxu0 0.0
    %2891 = vmatpush1.msra.mxu0 0.0
    %2892 = vmatprep.subr.mxu0 0.0
    %2893 = vmatpush1.msra.mxu0 0.0
    %2894 = vmatprep.subr.mxu0 0.0
    %2895 = vmatpush1.msra.mxu0 0.0
    %2896 = vmatprep.subr.mxu0 0.0
    %2897 = vmatpush1.msra.mxu0 0.0
    %2898 = vmatprep.subr.mxu0 0.0
    %2899 = vmatpush1.msra.mxu0 0.0
    %2900 = vmatprep.subr.mxu0 0.0
    %2901 = vmatpush1.msra.mxu0 0.0
    %2902 = vmatprep.subr.mxu0 0.0
    %2903 = vmatpush1.msra.mxu0 0.0
    %2904 = vmatprep.subr.mxu0 0.0
    %2905 = vmatpush1.msra.mxu0 0.0
    %2906 = vmatprep.subr.mxu0 0.0
    %2907 = vmatpush1.msra.mxu0 0.0
    %2908 = vmatprep.subr.mxu0 0.0
    %2909 = vmatpush1.msra.mxu0 0.0
    %2910 = vmatprep.subr.mxu0 0.0
    %2911 = vmatpush1.msra.mxu0 0.0
    %2912 = vmatprep.subr.mxu0 0.0
    %2913 = vmatpush1.msra.mxu0 0.0
    %2914 = vmatprep.mubr.f32.mxu0 0.0
    %2915 = vmatmul.mubr.f32.gmra.mrb[0].mxu0 %v2848
    %v2916 = vpop.f32.mrb[0].mxu0
    %v2917 = vadd.f32 %v2846, %v2916
    %v2918 = vpop.f32.mrb[0].mxu0
    %2919 = vdwg.mxu0
    %v2920 = vtanh.pop %v2917
    %v2921 = vlaneseq
    %v2922 = vshrl.u32 %v2921, 7
    %v2923 = vsub.s32 0, %v2922
    %v2924 = vrot.slane %v2842, %v2923
    %v2926 = vsel %vm405, %v2920, 0
    %2928 = vmatprep.subr.mxu0 0.0
    %2929 = vmatpush1.msra.mxu0 %v2838
    %2930 = vmatprep.subr.mxu0 0.0
    %2931 = vmatpush1.msra.mxu0 %v2839
    %2932 = vmatprep.subr.mxu0 0.0
    %2933 = vmatpush1.msra.mxu0 %v2840
    %2934 = vmatprep.subr.mxu0 0.0
    %2935 = vmatpush1.msra.mxu0 %v2841
    %2936 = vmatprep.subr.mxu0 0.0
    %2937 = vmatpush1.msra.mxu0 0.0
    %2938 = vmatprep.subr.mxu0 0.0
    %2939 = vmatpush1.msra.mxu0 0.0
    %2940 = vmatprep.subr.mxu0 0.0
    %2941 = vmatpush1.msra.mxu0 0.0
    %2942 = vmatprep.subr.mxu0 0.0
    %2943 = vmatpush1.msra.mxu0 0.0
    %2944 = vmatprep.subr.mxu0 0.0
    %2945 = vmatpush1.msra.mxu0 0.0
    %2946 = vmatprep.subr.mxu0 0.0
    %2947 = vmatpush1.msra.mxu0 0.0
    %2948 = vmatprep.subr.mxu0 0.0
    %2949 = vmatpush1.msra.mxu0 0.0
    %2950 = vmatprep.subr.mxu0 0.0
    %2951 = vmatpush1.msra.mxu0 0.0
    %2952 = vmatprep.subr.mxu0 0.0
    %2953 = vmatpush1.msra.mxu0 0.0
    %2954 = vmatprep.subr.mxu0 0.0
    %2955 = vmatpush1.msra.mxu0 0.0
    %2956 = vmatprep.subr.mxu0 0.0
    %2957 = vmatpush1.msra.mxu0 0.0
    %2958 = vmatprep.subr.mxu0 0.0
    %2959 = vmatpush1.msra.mxu0 0.0
    %2960 = vmatprep.subr.mxu0 0.0
    %2961 = vmatpush1.msra.mxu0 0.0
    %2962 = vmatprep.subr.mxu0 0.0
    %2963 = vmatpush1.msra.mxu0 0.0
    %2964 = vmatprep.subr.mxu0 0.0
    %2965 = vmatpush1.msra.mxu0 0.0
    %2966 = vmatprep.subr.mxu0 0.0
    %2967 = vmatpush1.msra.mxu0 0.0
    %2968 = vmatprep.subr.mxu0 0.0
    %2969 = vmatpush1.msra.mxu0 0.0
    %2970 = vmatprep.subr.mxu0 0.0
    %2971 = vmatpush1.msra.mxu0 0.0
    %2972 = vmatprep.subr.mxu0 0.0
    %2973 = vmatpush1.msra.mxu0 0.0
    %2974 = vmatprep.subr.mxu0 0.0
    %2975 = vmatpush1.msra.mxu0 0.0
    %2976 = vmatprep.subr.mxu0 0.0
    %2977 = vmatpush1.msra.mxu0 0.0
    %2978 = vmatprep.subr.mxu0 0.0
    %2979 = vmatpush1.msra.mxu0 0.0
    %2980 = vmatprep.subr.mxu0 0.0
    %2981 = vmatpush1.msra.mxu0 0.0
    %2982 = vmatprep.subr.mxu0 0.0
    %2983 = vmatpush1.msra.mxu0 0.0
    %2984 = vmatprep.subr.mxu0 0.0
    %2985 = vmatpush1.msra.mxu0 0.0
    %2986 = vmatprep.subr.mxu0 0.0
    %2987 = vmatpush1.msra.mxu0 0.0
    %2988 = vmatprep.subr.mxu0 0.0
    %2989 = vmatpush1.msra.mxu0 0.0
    %2990 = vmatprep.subr.mxu0 0.0
    %2991 = vmatpush1.msra.mxu0 0.0
    %2992 = vmatprep.mubr.f32.mxu0 0.0
    %2993 = vmatmul.mubr.f32.gmra.mrb[0].mxu0 %v2926
    %v2994 = vpop.f32.mrb[0].mxu0
    %v2995 = vadd.f32 %v2924, %v2994
    %v2996 = vpop.f32.mrb[0].mxu0
    %2997 = vdwg.mxu0
    %vm2998 = vcmask 17408
    %2999 = vst.msk [vmem:[#allocation29] sm:$0x3] %vm2998, %v2995
    // Predicated region
    $region130: #{tpu_custom_call.1} parent=1 // pred_check
      _
    $region131: #{tpu_custom_call.1} parent=1 // pred_check_branch
      %3001 = sbr.rel (0) target = $region133
    $region132: #{tpu_custom_call.1} parent=1 // pred_region
      %s3003 = ssub.s32 192, 192
      %3004 = vsyncadd [#allocation4], %s3003
      %s3005 = sshll.u32 [#allocation28], 4
      %s3006 = int_to_ptr.vmem [resolvable:$true] %s3005
      %3011 = dma.vmem_to_hbm [thread:$0]  %s3006, 192, %s16, [#allocation4], 64, 64, 4
    $region133: #{tpu_custom_call.1} parent=1 // pred_fallthru
      _
    // Predicated region
    $region134: #{tpu_custom_call.1} parent=1 // pred_check
      _
    $region135: #{tpu_custom_call.1} parent=1 // pred_check_branch
      %3013 = sbr.rel (0) target = $region137
    $region136: #{tpu_custom_call.1} parent=1 // pred_region
      %s3015 = ssub.s32 32, 32
      %3016 = vsyncadd [#allocation30], %s3015
      %s3018 = sshll.u32 [#allocation29], 4
      %s3019 = int_to_ptr.vmem [resolvable:$true] %s3018
      %3021 = dma.vmem_to_hbm [thread:$0]  %s3019, 32, %s17, [#allocation30]
    $region137: #{tpu_custom_call.1} parent=1 // pred_fallthru
      _
    // Predicated region
    $region138: #{tpu_custom_call.1} parent=1 // pred_check
      _
    $region139: #{tpu_custom_call.1} parent=1 // pred_check_branch
      %3023 = sbr.rel (0) target = $region141
    $region140: #{tpu_custom_call.1} parent=1 // pred_region
      %3024 = dma.done [#allocation4], 192
    $region141: #{tpu_custom_call.1} parent=1 // pred_fallthru
      _
    // Predicated region
    $region142: #{tpu_custom_call.1} parent=1 // pred_check
      _
    $region143: #{tpu_custom_call.1} parent=1 // pred_check_branch
      %3026 = sbr.rel (0) target = $region145
    $region144: #{tpu_custom_call.1} parent=1 // pred_region
      %3027 = dma.done [#allocation30], 32
    $region145: #{tpu_custom_call.1} parent=1 // pred_fallthru
      _
    %3028 = vsyncpa [#allocation3], 1
    %3029 = vsyncpa [#allocation6], 1
    %3030 = vsyncpa [#allocation9], 1
    %3031 = vsyncpa [#allocation12], 1
    %3032 = vsyncpa [#allocation15], 1
    %3033 = vsyncpa [#allocation18], 1
    %3034 = vsyncpa [#allocation21], 1
    %3035 = vsyncpa [#allocation24], 1
    %3036 = vsyncpa [#allocation27], 1
    %3037 = vsyncpa [#allocation4], 1
    %3038 = vsyncpa [#allocation30], 1

</llo_original>
